<compile_context>
chip_gen: v6e
topology: v6e:2x2x1
jax: 0.10.0
libtpu: 0.0.40
codegen_flags: <defaults>
</compile_context>

<pallas_src>
import jax
import jax.numpy as jnp
from jax import lax
from jax.experimental import pallas as pl
from jax.experimental.pallas import tpu as pltpu

S, H = 384, 768          # seq length, hidden size (from the module)
HOUT = 768               # Linear out_features
TM = 192                 # sequence tile  -> grid dim 0 = 2 (megacore parallel)
TN = 256                 # output-column tile -> grid dim 1 = 3 (pipelined)
EPS = 1e-12
INV_H = 1.0 / H


def fused_kernel(x23_ref, x25_ref, gamma_ref, beta_ref, w_ref, b_ref,
                 o_ref, xn_ref):
    # Compute the row-tile LayerNorm only when entering a new row tile
    # (the innermost grid axis j walks the output-column tiles).
    @pl.when(pl.program_id(1) == 0)
    def _():
        # x26 = x23 + x25
        x = x23_ref[...] + x25_ref[...]                      # (TM, H) f32
        # x27 = LayerNorm(x26), eps=1e-12, affine. Variance via E[x^2]-mean^2
        # (independent lane reductions), clamped at 0 against cancellation.
        s1 = jnp.sum(x, axis=-1, keepdims=True)              # (TM, 1)
        s2 = jnp.sum(x * x, axis=-1, keepdims=True)          # (TM, 1)
        mean = s1 * INV_H
        var = jnp.maximum(s2 * INV_H - mean * mean, 0.0)
        inv = lax.rsqrt(var + EPS)
        xn = (x - mean) * inv * gamma_ref[...] + beta_ref[...]
        # x28 = Dropout(x27) -> identity (eval semantics).
        xn_ref[...] = xn.astype(jnp.bfloat16)                # matmul-ready bf16

    # x29[:, j-tile] = xn @ W_t[:, j-tile] + b[j-tile]
    # bf16 operands, f32 accumulation on the MXU.
    y = jnp.dot(xn_ref[...], w_ref[...], preferred_element_type=jnp.float32)
    o_ref[...] = y + b_ref[...]


def prepare_linear_weight(weight):
    """One-time (weight-load-time) prep: PyTorch [out, in] f32 -> [in, out] bf16."""
    return jnp.asarray(weight).T.astype(jnp.bfloat16)


def fused_forward(x23, x25, gamma, beta, weight_t_bf16, bias):
    """x23, x25: [1, S, H] f32; weight_t_bf16: [H_in, H_out] bf16 (pre-transposed);
    gamma/beta/bias: [H] f32. Returns [1, S, H_out] f32."""
    x23_2d = x23.reshape(S, H)
    x25_2d = x25.reshape(S, H)
    gamma_2d = gamma.reshape(1, H)
    beta_2d = beta.reshape(1, H)
    bias_2d = bias.reshape(1, HOUT)

    grid = (S // TM, HOUT // TN)
    out = pl.pallas_call(
        fused_kernel,
        out_shape=jax.ShapeDtypeStruct((S, HOUT), jnp.float32),
        grid_spec=pltpu.PrefetchScalarGridSpec(
            num_scalar_prefetch=0,
            grid=grid,
            in_specs=[
                pl.BlockSpec((TM, H), lambda i, j: (i, 0)),    # x23 row tile (constant over j)
                pl.BlockSpec((TM, H), lambda i, j: (i, 0)),    # x25 row tile (constant over j)
                pl.BlockSpec((1, H), lambda i, j: (0, 0)),     # gamma (resident)
                pl.BlockSpec((1, H), lambda i, j: (0, 0)),     # beta  (resident)
                pl.BlockSpec((H, TN), lambda i, j: (0, j)),    # W^T column tile (bf16, streamed)
                pl.BlockSpec((1, TN), lambda i, j: (0, j)),    # bias column tile
            ],
            out_specs=pl.BlockSpec((TM, TN), lambda i, j: (i, j)),
            scratch_shapes=[pltpu.VMEM((TM, H), jnp.bfloat16)],  # LN result, reused over j
        ),
        compiler_params=pltpu.CompilerParams(
            dimension_semantics=("parallel", "arbitrary"),
        ),
    )(x23_2d, x25_2d, gamma_2d, beta_2d, weight_t_bf16, bias_2d)
    return out.reshape(1, S, HOUT)


if __name__ == "__main__":
    key = jax.random.PRNGKey(0)
    k1, k2, k3, k4 = jax.random.split(key, 4)

    # inputs (deterministic, module shapes)
    x23 = jax.random.normal(k1, (1, S, H), dtype=jnp.float32)
    x25 = jax.random.normal(k2, (1, S, H), dtype=jnp.float32)

    # parameters (deterministic, shapes from the module __init__)
    gamma = jnp.ones((H,), dtype=jnp.float32)         # LayerNorm weight
    beta = jnp.zeros((H,), dtype=jnp.float32)         # LayerNorm bias
    bound = 1.0 / jnp.sqrt(jnp.float32(H))
    weight = jax.random.uniform(k3, (HOUT, H), dtype=jnp.float32,
                                minval=-bound, maxval=bound)  # Linear weight [out, in]
    bias = jax.random.uniform(k4, (HOUT,), dtype=jnp.float32,
                              minval=-bound, maxval=bound)    # Linear bias

    # one-time weight prep (would live at weight-load time in production)
    weight_t_bf16 = prepare_linear_weight(weight)

    out = fused_forward(x23, x25, gamma, beta, weight_t_bf16, bias)
    jax.block_until_ready(out)

    # sanity check against pure-JAX f32 reference (tolerance widened for the
    # bf16 MXU path; structural bugs would show O(1) errors).
    x26 = x23 + x25
    mean = jnp.mean(x26, axis=-1, keepdims=True)
    var = jnp.mean((x26 - mean) ** 2, axis=-1, keepdims=True)
    x27 = (x26 - mean) / jnp.sqrt(var + EPS) * gamma + beta
    ref = x27 @ weight.T + bias
    assert jnp.allclose(out, ref, atol=5e-2, rtol=5e-2), "mismatch vs reference"

    print("KERNEL_OK")
</pallas_src>

<mosaic_0001>
module attributes {stable_mosaic.version = 11 : i64} {
  func.func @fused_kernel(%arg0: i32, %arg1: i32, %arg2: memref<192x768xf32, #tpu.memory_space<vmem>>, %arg3: memref<192x768xf32, #tpu.memory_space<vmem>>, %arg4: memref<1x768xf32, #tpu.memory_space<vmem>>, %arg5: memref<1x768xf32, #tpu.memory_space<vmem>>, %arg6: memref<768x256xbf16, #tpu.memory_space<vmem>>, %arg7: memref<1x256xf32, #tpu.memory_space<vmem>>, %arg8: memref<192x256xf32, #tpu.memory_space<vmem>>, %arg9: memref<192x768xbf16, #tpu.memory_space<vmem>>) attributes {dimension_semantics = [#tpu.dimension_semantics<parallel>, #tpu.dimension_semantics<arbitrary>], iteration_bounds = array<i64: 2, 3>, scalar_prefetch = 0 : i64, scratch_operands = 1 : i64, tpu.core_type = #tpu.core_type<tc>, window_params = [{transform_indices = @transform_0, window_bounds = array<i64: 192, 768>}, {transform_indices = @transform_1, window_bounds = array<i64: 192, 768>}, {pipeline_mode = #tpu.pipeline_mode<synchronous>, transform_indices = @transform_2, window_bounds = array<i64: 1, 768>}, {pipeline_mode = #tpu.pipeline_mode<synchronous>, transform_indices = @transform_3, window_bounds = array<i64: 1, 768>}, {transform_indices = @transform_4, window_bounds = array<i64: 768, 256>}, {transform_indices = @transform_5, window_bounds = array<i64: 1, 256>}, {transform_indices = @transform_6, window_bounds = array<i64: 192, 256>}]} {
    %c0_i32 = arith.constant 0 : i32
    %0 = arith.cmpi eq, %arg1, %c0_i32 : i32
    %1 = arith.extui %0 : i1 to i32
    %c0_i32_0 = arith.constant 0 : i32
    %2 = arith.cmpi ne, %1, %c0_i32_0 : i32
    scf.if %2 {
      %c0_8 = arith.constant 0 : index
      %c0_9 = arith.constant 0 : index
      %10 = vector.load %arg2[%c0_8, %c0_9] : memref<192x768xf32, #tpu.memory_space<vmem>>, vector<192x768xf32>
      %c0_10 = arith.constant 0 : index
      %c0_11 = arith.constant 0 : index
      %11 = vector.load %arg3[%c0_10, %c0_11] : memref<192x768xf32, #tpu.memory_space<vmem>>, vector<192x768xf32>
      %12 = arith.addf %10, %11 : vector<192x768xf32>
      %cst_12 = arith.constant dense<0.000000e+00> : vector<192xf32>
      %13 = vector.multi_reduction <add>, %12, %cst_12 [1] : vector<192x768xf32> to vector<192xf32>
      %14 = vector.shape_cast %13 : vector<192xf32> to vector<192x1xf32>
      %15 = arith.mulf %12, %12 : vector<192x768xf32>
      %cst_13 = arith.constant dense<0.000000e+00> : vector<192xf32>
      %16 = vector.multi_reduction <add>, %15, %cst_13 [1] : vector<192x768xf32> to vector<192xf32>
      %17 = vector.shape_cast %16 : vector<192xf32> to vector<192x1xf32>
      %cst_14 = arith.constant 0.00130208337 : f32
      %18 = vector.broadcast %cst_14 : f32 to vector<192x1xf32>
      %19 = arith.mulf %14, %18 : vector<192x1xf32>
      %cst_15 = arith.constant 0.00130208337 : f32
      %20 = vector.broadcast %cst_15 : f32 to vector<192x1xf32>
      %21 = arith.mulf %17, %20 : vector<192x1xf32>
      %22 = arith.mulf %19, %19 : vector<192x1xf32>
      %23 = arith.subf %21, %22 : vector<192x1xf32>
      %cst_16 = arith.constant 0.000000e+00 : f32
      %24 = vector.broadcast %cst_16 : f32 to vector<192x1xf32>
      %25 = arith.maximumf %23, %24 : vector<192x1xf32>
      %cst_17 = arith.constant 9.99999996E-13 : f32
      %26 = vector.broadcast %cst_17 : f32 to vector<192x1xf32>
      %27 = arith.addf %25, %26 : vector<192x1xf32>
      %28 = math.rsqrt %27 : vector<192x1xf32>
      %29 = vector.broadcast %19 : vector<192x1xf32> to vector<192x768xf32>
      %30 = arith.subf %12, %29 : vector<192x768xf32>
      %31 = vector.broadcast %28 : vector<192x1xf32> to vector<192x768xf32>
      %32 = arith.mulf %30, %31 : vector<192x768xf32>
      %c0_18 = arith.constant 0 : index
      %c0_19 = arith.constant 0 : index
      %33 = vector.load %arg4[%c0_18, %c0_19] : memref<1x768xf32, #tpu.memory_space<vmem>>, vector<1x768xf32>
      %34 = vector.broadcast %33 : vector<1x768xf32> to vector<192x768xf32>
      %35 = arith.mulf %32, %34 : vector<192x768xf32>
      %c0_20 = arith.constant 0 : index
      %c0_21 = arith.constant 0 : index
      %36 = vector.load %arg5[%c0_20, %c0_21] : memref<1x768xf32, #tpu.memory_space<vmem>>, vector<1x768xf32>
      %37 = vector.broadcast %36 : vector<1x768xf32> to vector<192x768xf32>
      %38 = arith.addf %35, %37 : vector<192x768xf32>
      %39 = arith.truncf %38 : vector<192x768xf32> to vector<192x768xbf16>
      %c0_22 = arith.constant 0 : index
      %c0_23 = arith.constant 0 : index
      %40 = vector.load %arg9[%c0_22, %c0_23] : memref<192x768xbf16, #tpu.memory_space<vmem>>, vector<192x768xbf16>
      tpu.vector_store %arg9[%c0_22, %c0_23], %39 {strides = array<i32>} : memref<192x768xbf16, #tpu.memory_space<vmem>>, vector<192x768xbf16>,
    } else {
    }
    %c0 = arith.constant 0 : index
    %c0_1 = arith.constant 0 : index
    %3 = vector.load %arg9[%c0, %c0_1] : memref<192x768xbf16, #tpu.memory_space<vmem>>, vector<192x768xbf16>
    %c0_2 = arith.constant 0 : index
    %c0_3 = arith.constant 0 : index
    %4 = vector.load %arg6[%c0_2, %c0_3] : memref<768x256xbf16, #tpu.memory_space<vmem>>, vector<768x256xbf16>
    %cst = arith.constant dense<0.000000e+00> : vector<192x256xf32>
    %5 = tpu.matmul %3, %4, %cst {dimension_numbers = #tpu.dot_dimension_numbers<[1], [0], [0], [1], [0, 0, 1, 1], [], []>} : vector<192x768xbf16>, vector<768x256xbf16>, vector<192x256xf32> -> vector<192x256xf32>
    %c0_4 = arith.constant 0 : index
    %c0_5 = arith.constant 0 : index
    %6 = vector.load %arg7[%c0_4, %c0_5] : memref<1x256xf32, #tpu.memory_space<vmem>>, vector<1x256xf32>
    %7 = vector.broadcast %6 : vector<1x256xf32> to vector<192x256xf32>
    %8 = arith.addf %5, %7 : vector<192x256xf32>
    %c0_6 = arith.constant 0 : index
    %c0_7 = arith.constant 0 : index
    %9 = vector.load %arg8[%c0_6, %c0_7] : memref<192x256xf32, #tpu.memory_space<vmem>>, vector<192x256xf32>
    tpu.vector_store %arg8[%c0_6, %c0_7], %8 {strides = array<i32>} : memref<192x256xf32, #tpu.memory_space<vmem>>, vector<192x256xf32>,
    return
  }
  func.func @transform_0(%arg0: i32, %arg1: i32) -> (i32, i32) {
    %c0_i32 = arith.constant 0 : i32
    %c0_i32_0 = arith.constant 0 : i32
    return %arg0, %c0_i32 : i32, i32
  }
  func.func @transform_1(%arg0: i32, %arg1: i32) -> (i32, i32) {
    %c0_i32 = arith.constant 0 : i32
    %c0_i32_0 = arith.constant 0 : i32
    return %arg0, %c0_i32 : i32, i32
  }
  func.func @transform_2(%arg0: i32, %arg1: i32) -> (i32, i32) {
    %c0_i32 = arith.constant 0 : i32
    %c0_i32_0 = arith.constant 0 : i32
    %c0_i32_1 = arith.constant 0 : i32
    return %c0_i32, %c0_i32_0 : i32, i32
  }
  func.func @transform_3(%arg0: i32, %arg1: i32) -> (i32, i32) {
    %c0_i32 = arith.constant 0 : i32
    %c0_i32_0 = arith.constant 0 : i32
    %c0_i32_1 = arith.constant 0 : i32
    return %c0_i32, %c0_i32_0 : i32, i32
  }
  func.func @transform_4(%arg0: i32, %arg1: i32) -> (i32, i32) {
    %c0_i32 = arith.constant 0 : i32
    %c0_i32_0 = arith.constant 0 : i32
    return %c0_i32, %arg1 : i32, i32
  }
  func.func @transform_5(%arg0: i32, %arg1: i32) -> (i32, i32) {
    %c0_i32 = arith.constant 0 : i32
    %c0_i32_0 = arith.constant 0 : i32
    return %c0_i32, %arg1 : i32, i32
  }
  func.func @transform_6(%arg0: i32, %arg1: i32) -> (i32, i32) {
    %c0_i32 = arith.constant 0 : i32
    return %arg0, %arg1 : i32, i32
  }
}

</mosaic_0001>

<llo_original>
// kernel: tpu_custom_call.1
$region0: #{tpu_custom_call.1}
  #allocation0 [shape = 'u32[]', space=smem, size = 0x4, offset = 0x4, fixed_abs, tag = 'smem constant byte address 0x4 - core index']
  #allocation1 [shape = 'u32[144,128]{1,0:T(1,128)}', space=vmem, size = 0x12000, scoped, tag = 'internal scratch']
  #allocation2 [shape = 'bf16[192,768]{1,0:T(8,128)(2,1)}', space=vmem, size = 0x48000, scoped, tag = 'scratch operand']
  %s0 = inlined_call_operand.hbm [shape: f32[384,768], index: 0, kind: input, shape index: {}]
  %s1 = inlined_call_operand.hbm [shape: f32[384,768], index: 1, kind: input, shape index: {}]
  %s2 = inlined_call_operand.hbm [shape: f32[1,768], index: 2, kind: input, shape index: {}]
  %s3 = inlined_call_operand.hbm [shape: f32[1,768], index: 3, kind: input, shape index: {}]
  %s4 = inlined_call_operand.hbm [shape: bf16[768,768], index: 4, kind: input, shape index: {}]
  %s5 = inlined_call_operand.hbm [shape: f32[1,768], index: 5, kind: input, shape index: {}]
  %s6 = inlined_call_operand.hbm [shape: f32[384,768], index: 6, kind: output, shape index: {}]
  %s7 = sld [smem:[#allocation0]]
  $region85: #{tpu_custom_call.1} parent=0
    _
  %s9 = ssub.s32 1, %s7
  %s10 = scalar_select 0, %s9, %s7
  $region1: #{tpu_custom_call.1} parent=0
    #allocation3 [shape = 'u8[1179648]{0}', space=vmem, size = 0x120000, scoped, tag = 'input window, operand 0']
    #allocation4 [shape = 's32[2]{0}', space=sflag, size = 0x8, scoped, tag = 'scoped memory for tpu_custom_call.1']
    #allocation5 [shape = 's32[2]{0}', space=sflag, size = 0x8, scoped, tag = 'scoped memory for tpu_custom_call.1']
    #allocation6 [shape = 'u8[1179648]{0}', space=vmem, size = 0x120000, scoped, tag = 'input window, operand 1']
    #allocation7 [shape = 's32[2]{0}', space=sflag, size = 0x8, scoped, tag = 'scoped memory for tpu_custom_call.1']
    #allocation8 [shape = 'u8[3072]{0}', space=vmem, size = 0xc00, scoped, tag = 'input window, operand 2, single buffered']
    #allocation9 [shape = 'u8[3072]{0}', space=vmem, size = 0xc00, scoped, tag = 'input window, operand 3, single buffered']
    #allocation10 [shape = 's32[1]{0}', space=sflag, size = 0x4, scoped, tag = 'scoped memory for tpu_custom_call.1']
    #allocation11 [shape = 'u8[786432]{0}', space=vmem, size = 0xc0000, scoped, tag = 'input window, operand 4']
    #allocation12 [shape = 'u8[2048]{0}', space=vmem, size = 0x800, scoped, tag = 'input window, operand 5']
    #allocation13 [shape = 'u8[393216]{0}', space=vmem, size = 0x60000, scoped, tag = 'output window, operand 0']
    %11 = vsyncpa [#allocation4], 0
    %s12 = scalar_lea.sflag [#allocation4], 1
    %13 = vsyncpa %s12, 0
    %14 = vsyncpa [#allocation7], 0
    %s15 = scalar_lea.sflag [#allocation7], 1
    %16 = vsyncpa %s15, 0
    %17 = vsyncpa [#allocation10], 0
    %18 = vsyncpa [#allocation5], 0
    %s19 = scalar_lea.sflag [#allocation5], 1
    %20 = vsyncpa %s19, 0
    loop: start=0, step=1, limit=8
    $region2: #{tpu_custom_call.1} parent=1 // loop_pre_header
      _
    $region3: #{tpu_custom_call.1} parent=1 // loop_header
      %s22 = sphi 0, %s26
      %p23 = scmp.ge.s32.totalorder %s22, 8
      %s29 = sphi 0, %s41
      %s30 = sphi 0, %s37
      %s31 = sphi 0, %s29
      %s32 = sphi 0, %s30
      %s33 = sphi 0, %s31
      %s34 = sphi 0, %s32
      %s44 = sphi 0, %s46
      %s47 = sphi 0, %s44
      %s48 = sphi 0, %s47
      %s64 = sphi 0, %s48
      %s70 = sphi 0, %s72
      %s73 = sphi 0, %s70
      %s74 = sphi 0, %s73
      %s90 = sphi 0, %s74
      %s94 = sphi 0, %s94
      %s96 = sphi 0, %s94
      %s97 = sphi 0, %s96
      %s111 = sphi 0, %s97
      %s115 = sphi 0, %s115
      %s117 = sphi 0, %s115
      %s118 = sphi 0, %s117
      %s132 = sphi 0, %s118
      %s138 = sphi 0, %s140
      %s141 = sphi 0, %s138
      %s142 = sphi 0, %s141
      %s158 = sphi 0, %s142
      %s164 = sphi 0, %s166
      %s167 = sphi 0, %s164
      %s168 = sphi 0, %s167
      %s184 = sphi 0, %s168
      %s192 = sphi 0, %s194
      %s195 = sphi 0, %s192
      %s196 = sphi 0, %s195
      %s212 = sphi 0, %s196
    $region4: #{tpu_custom_call.1} parent=1 // loop_header_branch
      %25 = sbr.rel (%p23) target = $region8
    $region5: #{tpu_custom_call.1} parent=1 // loop_body
      %s27 = ssub.s32 %s22, 1
      %s28 = ssub.s32 %s22, 2
      %s35 = sadd.s32 1, %s30
      %p36 = scmp.ge.s32.totalorder %s35, 3
      %s37 = scalar_select %p36, 0, %s35
      %s38 = sadd.s32 1, %s29
      %s39 = scalar_select %p36, %s38, %s29
      %p40 = scmp.ge.s32.totalorder %s39, 2
      %s41 = scalar_select %p40, 0, %s39
      %s42 = ssub.s32 %s29, %s41
      %p43 = scmp.eq.s32.totalorder %s42, 0
      %s45 = sadd.s32 %s44, 1
      %s46 = scalar_select %p43, %s44, %s45
      %p49 = pneg %p43
      %p50 = scmp.eq.s32.totalorder %s22, 5
      %p51 = por %p49, %p50
      %p52 = scmp.ne.s32.totalorder %s44, %s47
      %p53 = scmp.eq.s32.totalorder %s22, 0
      %p54 = por %p52, %p53
      %p55 = scmp.ne.s32.totalorder %s44, %s47
      %p56 = scmp.eq.s32.totalorder %s27, 5
      %p57 = por %p55, %p56
      %p58 = scmp.ne.s32.totalorder %s47, %s48
      %p59 = scmp.eq.s32.totalorder %s27, 0
      %p60 = por %p58, %p59
      %p61 = scmp.ne.s32.totalorder %s47, %s48
      %p62 = scmp.eq.s32.totalorder %s28, 5
      %p63 = por %p61, %p62
      %p65 = scmp.ne.s32.totalorder %s48, %s64
      %p66 = scmp.eq.s32.totalorder %s28, 0
      %p67 = por %p65, %p66
      %s68 = ssub.s32 %s29, %s41
      %p69 = scmp.eq.s32.totalorder %s68, 0
      %s71 = sadd.s32 %s70, 1
      %s72 = scalar_select %p69, %s70, %s71
      %p75 = pneg %p69
      %p76 = scmp.eq.s32.totalorder %s22, 5
      %p77 = por %p75, %p76
      %p78 = scmp.ne.s32.totalorder %s70, %s73
      %p79 = scmp.eq.s32.totalorder %s22, 0
      %p80 = por %p78, %p79
      %p81 = scmp.ne.s32.totalorder %s70, %s73
      %p82 = scmp.eq.s32.totalorder %s27, 5
      %p83 = por %p81, %p82
      %p84 = scmp.ne.s32.totalorder %s73, %s74
      %p85 = scmp.eq.s32.totalorder %s27, 0
      %p86 = por %p84, %p85
      %p87 = scmp.ne.s32.totalorder %s73, %s74
      %p88 = scmp.eq.s32.totalorder %s28, 5
      %p89 = por %p87, %p88
      %p91 = scmp.ne.s32.totalorder %s74, %s90
      %p92 = scmp.eq.s32.totalorder %s28, 0
      %p93 = por %p91, %p92
      %s95 = sadd.s32 %s94, 1
      %p98 = scmp.eq.s32.totalorder %s22, 5
      %p99 = scmp.ne.s32.totalorder %s94, %s96
      %p100 = scmp.eq.s32.totalorder %s22, 0
      %p101 = por %p99, %p100
      %p102 = scmp.ne.s32.totalorder %s94, %s96
      %p103 = scmp.eq.s32.totalorder %s27, 5
      %p104 = por %p102, %p103
      %p105 = scmp.ne.s32.totalorder %s96, %s97
      %p106 = scmp.eq.s32.totalorder %s27, 0
      %p107 = por %p105, %p106
      %p108 = scmp.ne.s32.totalorder %s96, %s97
      %p109 = scmp.eq.s32.totalorder %s28, 5
      %p110 = por %p108, %p109
      %p112 = scmp.ne.s32.totalorder %s97, %s111
      %p113 = scmp.eq.s32.totalorder %s28, 0
      %p114 = por %p112, %p113
      %s116 = sadd.s32 %s115, 1
      %p119 = scmp.eq.s32.totalorder %s22, 5
      %p120 = scmp.ne.s32.totalorder %s115, %s117
      %p121 = scmp.eq.s32.totalorder %s22, 0
      %p122 = por %p120, %p121
      %p123 = scmp.ne.s32.totalorder %s115, %s117
      %p124 = scmp.eq.s32.totalorder %s27, 5
      %p125 = por %p123, %p124
      %p126 = scmp.ne.s32.totalorder %s117, %s118
      %p127 = scmp.eq.s32.totalorder %s27, 0
      %p128 = por %p126, %p127
      %p129 = scmp.ne.s32.totalorder %s117, %s118
      %p130 = scmp.eq.s32.totalorder %s28, 5
      %p131 = por %p129, %p130
      %p133 = scmp.ne.s32.totalorder %s118, %s132
      %p134 = scmp.eq.s32.totalorder %s28, 0
      %p135 = por %p133, %p134
      %s136 = ssub.s32 %s30, %s37
      %p137 = scmp.eq.s32.totalorder %s136, 0
      %s139 = sadd.s32 %s138, 1
      %s140 = scalar_select %p137, %s138, %s139
      %p143 = pneg %p137
      %p144 = scmp.eq.s32.totalorder %s22, 5
      %p145 = por %p143, %p144
      %p146 = scmp.ne.s32.totalorder %s138, %s141
      %p147 = scmp.eq.s32.totalorder %s22, 0
      %p148 = por %p146, %p147
      %p149 = scmp.ne.s32.totalorder %s138, %s141
      %p150 = scmp.eq.s32.totalorder %s27, 5
      %p151 = por %p149, %p150
      %p152 = scmp.ne.s32.totalorder %s141, %s142
      %p153 = scmp.eq.s32.totalorder %s27, 0
      %p154 = por %p152, %p153
      %p155 = scmp.ne.s32.totalorder %s141, %s142
      %p156 = scmp.eq.s32.totalorder %s28, 5
      %p157 = por %p155, %p156
      %p159 = scmp.ne.s32.totalorder %s142, %s158
      %p160 = scmp.eq.s32.totalorder %s28, 0
      %p161 = por %p159, %p160
      %s162 = ssub.s32 %s30, %s37
      %p163 = scmp.eq.s32.totalorder %s162, 0
      %s165 = sadd.s32 %s164, 1
      %s166 = scalar_select %p163, %s164, %s165
      %p169 = pneg %p163
      %p170 = scmp.eq.s32.totalorder %s22, 5
      %p171 = por %p169, %p170
      %p172 = scmp.ne.s32.totalorder %s164, %s167
      %p173 = scmp.eq.s32.totalorder %s22, 0
      %p174 = por %p172, %p173
      %p175 = scmp.ne.s32.totalorder %s164, %s167
      %p176 = scmp.eq.s32.totalorder %s27, 5
      %p177 = por %p175, %p176
      %p178 = scmp.ne.s32.totalorder %s167, %s168
      %p179 = scmp.eq.s32.totalorder %s27, 0
      %p180 = por %p178, %p179
      %p181 = scmp.ne.s32.totalorder %s167, %s168
      %p182 = scmp.eq.s32.totalorder %s28, 5
      %p183 = por %p181, %p182
      %p185 = scmp.ne.s32.totalorder %s168, %s184
      %p186 = scmp.eq.s32.totalorder %s28, 0
      %p187 = por %p185, %p186
      %s188 = ssub.s32 %s29, %s41
      %s189 = ssub.s32 %s30, %s37
      %s190 = sor.u32 %s188, %s189
      %p191 = scmp.eq.s32.totalorder %s190, 0
      %s193 = sadd.s32 %s192, 1
      %s194 = scalar_select %p191, %s192, %s193
      %p197 = pneg %p191
      %p198 = scmp.eq.s32.totalorder %s22, 5
      %p199 = por %p197, %p198
      %p200 = scmp.ne.s32.totalorder %s192, %s195
      %p201 = scmp.eq.s32.totalorder %s22, 0
      %p202 = por %p200, %p201
      %p203 = scmp.ne.s32.totalorder %s192, %s195
      %p204 = scmp.eq.s32.totalorder %s27, 5
      %p205 = por %p203, %p204
      %p206 = scmp.ne.s32.totalorder %s195, %s196
      %p207 = scmp.eq.s32.totalorder %s27, 0
      %p208 = por %p206, %p207
      %p209 = scmp.ne.s32.totalorder %s195, %s196
      %p210 = scmp.eq.s32.totalorder %s28, 5
      %p211 = por %p209, %p210
      %p213 = scmp.ne.s32.totalorder %s196, %s212
      %p214 = scmp.eq.s32.totalorder %s28, 0
      %p215 = por %p213, %p214
      %p216 = scmp.le.s32.totalorder 1, %s22
      %p217 = scmp.lt.s32.totalorder %s22, 7
      %p218 = pnand %p216, %p217
      %p219 = pneg %p218
      // Predicated region
      $region9: #{tpu_custom_call.1} parent=5 // pred_check
        _
      $region10: #{tpu_custom_call.1} parent=5 // pred_check_branch
        %221 = sbr.rel (%p218) target = $region12
      $region11: #{tpu_custom_call.1} parent=5 // pred_region
        %s222 = ssub.s32 %s22, 1
        // Predicated region
        $region13: #{tpu_custom_call.1} parent=11 // pred_check
          %p223 = pneg %p107
        $region14: #{tpu_custom_call.1} parent=11 // pred_check_branch
          %225 = sbr.rel (%p223) target = $region16
        $region15: #{tpu_custom_call.1} parent=11 // pred_region
          %s227 = ssub.s32 96, 96
          %228 = vsyncadd [#allocation7], %s227
          %s230 = sshll.u32 [#allocation8], 4
          %s231 = int_to_ptr.vmem [resolvable:$true] %s230
          %233 = dma.hbm_to_vmem [thread:$0]  %s2, 96, %s231, [#allocation7]
        $region16: #{tpu_custom_call.1} parent=11 // pred_fallthru
          _
        // Predicated region
        $region17: #{tpu_custom_call.1} parent=11 // pred_check
          %p234 = pneg %p128
        $region18: #{tpu_custom_call.1} parent=11 // pred_check_branch
          %236 = sbr.rel (%p234) target = $region20
        $region19: #{tpu_custom_call.1} parent=11 // pred_region
          %s238 = ssub.s32 96, 96
          %239 = vsyncadd [#allocation10], %s238
          %s241 = sshll.u32 [#allocation9], 4
          %s242 = int_to_ptr.vmem [resolvable:$true] %s241
          %244 = dma.hbm_to_vmem [thread:$0]  %s3, 96, %s242, [#allocation10]
        $region20: #{tpu_custom_call.1} parent=11 // pred_fallthru
          _
      $region12: #{tpu_custom_call.1} parent=5 // pred_fallthru
        _
      %p245 = scmp.lt.s32.totalorder %s22, 6
      // Predicated region
      $region21: #{tpu_custom_call.1} parent=5 // pred_check
        %p246 = pneg %p245
      $region22: #{tpu_custom_call.1} parent=5 // pred_check_branch
        %248 = sbr.rel (%p246) target = $region24
      $region23: #{tpu_custom_call.1} parent=5 // pred_region
        // Predicated region
        $region25: #{tpu_custom_call.1} parent=23 // pred_check
          %p249 = pneg %p54
        $region26: #{tpu_custom_call.1} parent=23 // pred_check_branch
          %251 = sbr.rel (%p249) target = $region28
        $region27: #{tpu_custom_call.1} parent=23 // pred_region
          %s252 = sand.u32 %s22, 1
          %s253 = scalar_lea.sflag [#allocation4], %s252
          %s254 = sand.u32 %s44, 1
          %s255 = smul.addr %s254, 1152
          %s256 = scalar_lea.vmem [#allocation3], %s255
          %s257 = smul.u32 24, %s29
          %s259 = ssub.s32 18432, 18432
          %260 = vsyncadd %s253, %s259
          %s261 = smul.addr %s257, 6
          %s262 = smul.addr %s261, 128
          %s263 = scalar_lea.hbm %s0, %s262
          %s264 = sshll.u32 %s256, 4
          %s265 = int_to_ptr.vmem [resolvable:$true] %s264
          %270 = dma.hbm_to_vmem [thread:$0]  %s263, 18432, %s265, %s253, 768, 768, 48
        $region28: #{tpu_custom_call.1} parent=23 // pred_fallthru
          _
        // Predicated region
        $region29: #{tpu_custom_call.1} parent=23 // pred_check
          %p271 = pneg %p80
        $region30: #{tpu_custom_call.1} parent=23 // pred_check_branch
          %273 = sbr.rel (%p271) target = $region32
        $region31: #{tpu_custom_call.1} parent=23 // pred_region
          %s274 = sand.u32 %s22, 1
          %s275 = scalar_lea.sflag [#allocation7], %s274
          %s276 = sand.u32 %s70, 1
          %s277 = smul.addr %s276, 1152
          %s278 = scalar_lea.vmem [#allocation6], %s277
          %s279 = smul.u32 24, %s29
          %s281 = ssub.s32 18432, 18432
          %282 = vsyncadd %s275, %s281
          %s283 = smul.addr %s279, 6
          %s284 = smul.addr %s283, 128
          %s285 = scalar_lea.hbm %s1, %s284
          %s286 = sshll.u32 %s278, 4
          %s287 = int_to_ptr.vmem [resolvable:$true] %s286
          %292 = dma.hbm_to_vmem [thread:$0]  %s285, 18432, %s287, %s275, 768, 768, 48
        $region32: #{tpu_custom_call.1} parent=23 // pred_fallthru
          _
        // Predicated region
        $region33: #{tpu_custom_call.1} parent=23 // pred_check
          %p293 = pneg %p148
        $region34: #{tpu_custom_call.1} parent=23 // pred_check_branch
          %295 = sbr.rel (%p293) target = $region36
        $region35: #{tpu_custom_call.1} parent=23 // pred_region
          %s296 = sand.u32 %s22, 1
          %s297 = scalar_lea.sflag [#allocation4], %s296
          %s298 = sand.u32 %s138, 1
          %s299 = smul.addr %s298, 768
          %s300 = scalar_lea.vmem [#allocation11], %s299
          %s301 = smul.u32 2, %s30
          %s303 = ssub.s32 12288, 12288
          %304 = vsyncadd %s297, %s303
          %s305 = smul.addr %s301, 64
          %s306 = scalar_lea.hbm %s4, %s305
          %s307 = sshll.u32 %s300, 4
          %s308 = int_to_ptr.vmem [resolvable:$true] %s307
          %313 = dma.hbm_to_vmem [thread:$0]  %s306, 12288, %s308, %s297, 384, 128, 8
        $region36: #{tpu_custom_call.1} parent=23 // pred_fallthru
          _
        // Predicated region
        $region37: #{tpu_custom_call.1} parent=23 // pred_check
          %p314 = pneg %p174
        $region38: #{tpu_custom_call.1} parent=23 // pred_check_branch
          %316 = sbr.rel (%p314) target = $region40
        $region39: #{tpu_custom_call.1} parent=23 // pred_region
          %s317 = sand.u32 %s22, 1
          %s318 = scalar_lea.sflag [#allocation7], %s317
          %s319 = sand.u32 %s164, 1
          %s320 = smul.addr %s319, 2
          %s321 = scalar_lea.vmem [#allocation12], %s320
          %s322 = smul.u32 2, %s30
          %s324 = ssub.s32 32, 32
          %325 = vsyncadd %s318, %s324
          %s326 = smul.addr %s322, 16
          %s327 = scalar_lea.hbm %s5, %s326
          %s329 = sshll.u32 %s321, 4
          %s330 = int_to_ptr.vmem [resolvable:$true] %s329
          %332 = dma.hbm_to_vmem [thread:$0]  %s327, 32, %s330, %s318
        $region40: #{tpu_custom_call.1} parent=23 // pred_fallthru
          _
      $region24: #{tpu_custom_call.1} parent=5 // pred_fallthru
        _
      %p333 = scmp.le.s32.totalorder 1, %s22
      %p334 = scmp.lt.s32.totalorder %s22, 7
      %p335 = pnand %p333, %p334
      %p336 = pneg %p335
      // Predicated region
      $region41: #{tpu_custom_call.1} parent=5 // pred_check
        _
      $region42: #{tpu_custom_call.1} parent=5 // pred_check_branch
        %338 = sbr.rel (%p335) target = $region44
      $region43: #{tpu_custom_call.1} parent=5 // pred_region
        %s339 = ssub.s32 %s22, 1
        %s340 = sand.u32 %s27, 1
        %s341 = scalar_lea.sflag [#allocation4], %s340
        %s342 = sand.u32 %s47, 1
        %s343 = smul.addr %s342, 1152
        %s344 = scalar_lea.vmem [#allocation3], %s343
        // Predicated region
        $region45: #{tpu_custom_call.1} parent=43 // pred_check
          %p345 = pneg %p60
        $region46: #{tpu_custom_call.1} parent=43 // pred_check_branch
          %347 = sbr.rel (%p345) target = $region48
        $region47: #{tpu_custom_call.1} parent=43 // pred_region
          %348 = dma.done %s341, 18432
        $region48: #{tpu_custom_call.1} parent=43 // pred_fallthru
          _
        %s349 = sand.u32 %s27, 1
        %s350 = scalar_lea.sflag [#allocation7], %s349
        %s351 = sand.u32 %s73, 1
        %s352 = smul.addr %s351, 1152
        %s353 = scalar_lea.vmem [#allocation6], %s352
        // Predicated region
        $region49: #{tpu_custom_call.1} parent=43 // pred_check
          %p354 = pneg %p86
        $region50: #{tpu_custom_call.1} parent=43 // pred_check_branch
          %356 = sbr.rel (%p354) target = $region52
        $region51: #{tpu_custom_call.1} parent=43 // pred_region
          %357 = dma.done %s350, 18432
        $region52: #{tpu_custom_call.1} parent=43 // pred_fallthru
          _
        // Predicated region
        $region53: #{tpu_custom_call.1} parent=43 // pred_check
          %p358 = pneg %p107
        $region54: #{tpu_custom_call.1} parent=43 // pred_check_branch
          %360 = sbr.rel (%p358) target = $region56
        $region55: #{tpu_custom_call.1} parent=43 // pred_region
          %361 = dma.done [#allocation7], 96
        $region56: #{tpu_custom_call.1} parent=43 // pred_fallthru
          _
        // Predicated region
        $region57: #{tpu_custom_call.1} parent=43 // pred_check
          %p362 = pneg %p128
        $region58: #{tpu_custom_call.1} parent=43 // pred_check_branch
          %364 = sbr.rel (%p362) target = $region60
        $region59: #{tpu_custom_call.1} parent=43 // pred_region
          %365 = dma.done [#allocation10], 96
        $region60: #{tpu_custom_call.1} parent=43 // pred_fallthru
          _
        %s366 = sand.u32 %s27, 1
        %s367 = scalar_lea.sflag [#allocation4], %s366
        %s368 = sand.u32 %s141, 1
        %s369 = smul.addr %s368, 768
        %s370 = scalar_lea.vmem [#allocation11], %s369
        // Predicated region
        $region61: #{tpu_custom_call.1} parent=43 // pred_check
          %p371 = pneg %p154
        $region62: #{tpu_custom_call.1} parent=43 // pred_check_branch
          %373 = sbr.rel (%p371) target = $region64
        $region63: #{tpu_custom_call.1} parent=43 // pred_region
          %374 = dma.done %s367, 12288
        $region64: #{tpu_custom_call.1} parent=43 // pred_fallthru
          _
        %s375 = sand.u32 %s27, 1
        %s376 = scalar_lea.sflag [#allocation7], %s375
        %s377 = sand.u32 %s167, 1
        %s378 = smul.addr %s377, 2
        %s379 = scalar_lea.vmem [#allocation12], %s378
        // Predicated region
        $region65: #{tpu_custom_call.1} parent=43 // pred_check
          %p380 = pneg %p180
        $region66: #{tpu_custom_call.1} parent=43 // pred_check_branch
          %382 = sbr.rel (%p380) target = $region68
        $region67: #{tpu_custom_call.1} parent=43 // pred_region
          %383 = dma.done %s376, 32
        $region68: #{tpu_custom_call.1} parent=43 // pred_fallthru
          _
        %s384 = sand.u32 %s27, 1
        %s385 = scalar_lea.sflag [#allocation4], %s384
        %s386 = sand.u32 %s47, 1
        %s387 = smul.addr %s386, 1152
        %s388 = scalar_lea.vmem [#allocation3], %s387
        %p389 = pneg %p60
        %p390 = pneg %p57
        %s391 = sand.u32 %s27, 1
        %s392 = scalar_lea.sflag [#allocation7], %s391
        %s393 = sand.u32 %s73, 1
        %s394 = smul.addr %s393, 1152
        %s395 = scalar_lea.vmem [#allocation6], %s394
        %p396 = pneg %p86
        %p397 = pneg %p83
        %p398 = pneg %p107
        %p399 = pneg %p104
        %p400 = pneg %p128
        %p401 = pneg %p125
        %s402 = sand.u32 %s27, 1
        %s403 = scalar_lea.sflag [#allocation4], %s402
        %s404 = sand.u32 %s141, 1
        %s405 = smul.addr %s404, 768
        %s406 = scalar_lea.vmem [#allocation11], %s405
        %p407 = pneg %p154
        %p408 = pneg %p151
        %s409 = sand.u32 %s27, 1
        %s410 = scalar_lea.sflag [#allocation7], %s409
        %s411 = sand.u32 %s167, 1
        %s412 = smul.addr %s411, 2
        %s413 = scalar_lea.vmem [#allocation12], %s412
        %p414 = pneg %p180
        %p415 = pneg %p177
        %p416 = pneg %p208
        %p417 = pneg %p205
        %s418 = sand.u32 %s195, 1
        %s419 = scalar_lea.sflag [#allocation5], %s418
        %s420 = sand.u32 %s195, 1
        %s421 = smul.addr %s420, 384
        %s422 = scalar_lea.vmem [#allocation13], %s421
        %s423 = smul.u32 24, %s31
        %s424 = smul.u32 24, %s31
        %s425 = smul.u32 2, %s32
        %s426 = smul.u32 2, %s32
        %s427 = smul.u32 24, %s31
        %s428 = smul.u32 2, %s32
        %p429 = scmp.eq.s32.totalorder %s32, 0
        // Predicated region
        $region69: #{tpu_custom_call.1} parent=43 // pred_check
          %p430 = pneg %p429
        $region70: #{tpu_custom_call.1} parent=43 // pred_check_branch
          %432 = sbr.rel (%p430) target = $region72
        $region71: #{tpu_custom_call.1} parent=43 // pred_region
          %v433 = vld [vmem:[%s344] sm:$0xff]
          %v434 = vld [vmem:[%s344 + $0x8] sm:$0xff]
          %v435 = vld [vmem:[%s344 + $0x10] sm:$0xff]
          %v436 = vld [vmem:[%s344 + $0x18] sm:$0xff]
          %v437 = vld [vmem:[%s344 + $0x20] sm:$0xff]
          %v438 = vld [vmem:[%s344 + $0x28] sm:$0xff]
          %v439 = vld [vmem:[%s344 + $0x30] sm:$0xff]
          %v440 = vld [vmem:[%s344 + $0x38] sm:$0xff]
          %v441 = vld [vmem:[%s344 + $0x40] sm:$0xff]
          %v442 = vld [vmem:[%s344 + $0x48] sm:$0xff]
          %v443 = vld [vmem:[%s344 + $0x50] sm:$0xff]
          %v444 = vld [vmem:[%s344 + $0x58] sm:$0xff]
          %v445 = vld [vmem:[%s344 + $0x60] sm:$0xff]
          %v446 = vld [vmem:[%s344 + $0x68] sm:$0xff]
          %v447 = vld [vmem:[%s344 + $0x70] sm:$0xff]
          %v448 = vld [vmem:[%s344 + $0x78] sm:$0xff]
          %v449 = vld [vmem:[%s344 + $0x80] sm:$0xff]
          %v450 = vld [vmem:[%s344 + $0x88] sm:$0xff]
          %v451 = vld [vmem:[%s344 + $0x90] sm:$0xff]
          %v452 = vld [vmem:[%s344 + $0x98] sm:$0xff]
          %v453 = vld [vmem:[%s344 + $0xa0] sm:$0xff]
          %v454 = vld [vmem:[%s344 + $0xa8] sm:$0xff]
          %v455 = vld [vmem:[%s344 + $0xb0] sm:$0xff]
          %v456 = vld [vmem:[%s344 + $0xb8] sm:$0xff]
          %v457 = vld [vmem:[%s344 + $0xc0] sm:$0xff]
          %v458 = vld [vmem:[%s344 + $0xc8] sm:$0xff]
          %v459 = vld [vmem:[%s344 + $0xd0] sm:$0xff]
          %v460 = vld [vmem:[%s344 + $0xd8] sm:$0xff]
          %v461 = vld [vmem:[%s344 + $0xe0] sm:$0xff]
          %v462 = vld [vmem:[%s344 + $0xe8] sm:$0xff]
          %v463 = vld [vmem:[%s344 + $0xf0] sm:$0xff]
          %v464 = vld [vmem:[%s344 + $0xf8] sm:$0xff]
          %v465 = vld [vmem:[%s344 + $0x100] sm:$0xff]
          %v466 = vld [vmem:[%s344 + $0x108] sm:$0xff]
          %v467 = vld [vmem:[%s344 + $0x110] sm:$0xff]
          %v468 = vld [vmem:[%s344 + $0x118] sm:$0xff]
          %v469 = vld [vmem:[%s344 + $0x120] sm:$0xff]
          %v470 = vld [vmem:[%s344 + $0x128] sm:$0xff]
          %v471 = vld [vmem:[%s344 + $0x130] sm:$0xff]
          %v472 = vld [vmem:[%s344 + $0x138] sm:$0xff]
          %v473 = vld [vmem:[%s344 + $0x140] sm:$0xff]
          %v474 = vld [vmem:[%s344 + $0x148] sm:$0xff]
          %v475 = vld [vmem:[%s344 + $0x150] sm:$0xff]
          %v476 = vld [vmem:[%s344 + $0x158] sm:$0xff]
          %v477 = vld [vmem:[%s344 + $0x160] sm:$0xff]
          %v478 = vld [vmem:[%s344 + $0x168] sm:$0xff]
          %v479 = vld [vmem:[%s344 + $0x170] sm:$0xff]
          %v480 = vld [vmem:[%s344 + $0x178] sm:$0xff]
          %v481 = vld [vmem:[%s344 + $0x180] sm:$0xff]
          %v482 = vld [vmem:[%s344 + $0x188] sm:$0xff]
          %v483 = vld [vmem:[%s344 + $0x190] sm:$0xff]
          %v484 = vld [vmem:[%s344 + $0x198] sm:$0xff]
          %v485 = vld [vmem:[%s344 + $0x1a0] sm:$0xff]
          %v486 = vld [vmem:[%s344 + $0x1a8] sm:$0xff]
          %v487 = vld [vmem:[%s344 + $0x1b0] sm:$0xff]
          %v488 = vld [vmem:[%s344 + $0x1b8] sm:$0xff]
          %v489 = vld [vmem:[%s344 + $0x1c0] sm:$0xff]
          %v490 = vld [vmem:[%s344 + $0x1c8] sm:$0xff]
          %v491 = vld [vmem:[%s344 + $0x1d0] sm:$0xff]
          %v492 = vld [vmem:[%s344 + $0x1d8] sm:$0xff]
          %v493 = vld [vmem:[%s344 + $0x1e0] sm:$0xff]
          %v494 = vld [vmem:[%s344 + $0x1e8] sm:$0xff]
          %v495 = vld [vmem:[%s344 + $0x1f0] sm:$0xff]
          %v496 = vld [vmem:[%s344 + $0x1f8] sm:$0xff]
          %v497 = vld [vmem:[%s344 + $0x200] sm:$0xff]
          %v498 = vld [vmem:[%s344 + $0x208] sm:$0xff]
          %v499 = vld [vmem:[%s344 + $0x210] sm:$0xff]
          %v500 = vld [vmem:[%s344 + $0x218] sm:$0xff]
          %v501 = vld [vmem:[%s344 + $0x220] sm:$0xff]
          %v502 = vld [vmem:[%s344 + $0x228] sm:$0xff]
          %v503 = vld [vmem:[%s344 + $0x230] sm:$0xff]
          %v504 = vld [vmem:[%s344 + $0x238] sm:$0xff]
          %v505 = vld [vmem:[%s344 + $0x240] sm:$0xff]
          %v506 = vld [vmem:[%s344 + $0x248] sm:$0xff]
          %v507 = vld [vmem:[%s344 + $0x250] sm:$0xff]
          %v508 = vld [vmem:[%s344 + $0x258] sm:$0xff]
          %v509 = vld [vmem:[%s344 + $0x260] sm:$0xff]
          %v510 = vld [vmem:[%s344 + $0x268] sm:$0xff]
          %v511 = vld [vmem:[%s344 + $0x270] sm:$0xff]
          %v512 = vld [vmem:[%s344 + $0x278] sm:$0xff]
          %v513 = vld [vmem:[%s344 + $0x280] sm:$0xff]
          %v514 = vld [vmem:[%s344 + $0x288] sm:$0xff]
          %v515 = vld [vmem:[%s344 + $0x290] sm:$0xff]
          %v516 = vld [vmem:[%s344 + $0x298] sm:$0xff]
          %v517 = vld [vmem:[%s344 + $0x2a0] sm:$0xff]
          %v518 = vld [vmem:[%s344 + $0x2a8] sm:$0xff]
          %v519 = vld [vmem:[%s344 + $0x2b0] sm:$0xff]
          %v520 = vld [vmem:[%s344 + $0x2b8] sm:$0xff]
          %v521 = vld [vmem:[%s344 + $0x2c0] sm:$0xff]
          %v522 = vld [vmem:[%s344 + $0x2c8] sm:$0xff]
          %v523 = vld [vmem:[%s344 + $0x2d0] sm:$0xff]
          %v524 = vld [vmem:[%s344 + $0x2d8] sm:$0xff]
          %v525 = vld [vmem:[%s344 + $0x2e0] sm:$0xff]
          %v526 = vld [vmem:[%s344 + $0x2e8] sm:$0xff]
          %v527 = vld [vmem:[%s344 + $0x2f0] sm:$0xff]
          %v528 = vld [vmem:[%s344 + $0x2f8] sm:$0xff]
          %v529 = vld [vmem:[%s344 + $0x300] sm:$0xff]
          %v530 = vld [vmem:[%s344 + $0x308] sm:$0xff]
          %v531 = vld [vmem:[%s344 + $0x310] sm:$0xff]
          %v532 = vld [vmem:[%s344 + $0x318] sm:$0xff]
          %v533 = vld [vmem:[%s344 + $0x320] sm:$0xff]
          %v534 = vld [vmem:[%s344 + $0x328] sm:$0xff]
          %v535 = vld [vmem:[%s344 + $0x330] sm:$0xff]
          %v536 = vld [vmem:[%s344 + $0x338] sm:$0xff]
          %v537 = vld [vmem:[%s344 + $0x340] sm:$0xff]
          %v538 = vld [vmem:[%s344 + $0x348] sm:$0xff]
          %v539 = vld [vmem:[%s344 + $0x350] sm:$0xff]
          %v540 = vld [vmem:[%s344 + $0x358] sm:$0xff]
          %v541 = vld [vmem:[%s344 + $0x360] sm:$0xff]
          %v542 = vld [vmem:[%s344 + $0x368] sm:$0xff]
          %v543 = vld [vmem:[%s344 + $0x370] sm:$0xff]
          %v544 = vld [vmem:[%s344 + $0x378] sm:$0xff]
          %v545 = vld [vmem:[%s344 + $0x380] sm:$0xff]
          %v546 = vld [vmem:[%s344 + $0x388] sm:$0xff]
          %v547 = vld [vmem:[%s344 + $0x390] sm:$0xff]
          %v548 = vld [vmem:[%s344 + $0x398] sm:$0xff]
          %v549 = vld [vmem:[%s344 + $0x3a0] sm:$0xff]
          %v550 = vld [vmem:[%s344 + $0x3a8] sm:$0xff]
          %v551 = vld [vmem:[%s344 + $0x3b0] sm:$0xff]
          %v552 = vld [vmem:[%s344 + $0x3b8] sm:$0xff]
          %v553 = vld [vmem:[%s344 + $0x3c0] sm:$0xff]
          %v554 = vld [vmem:[%s344 + $0x3c8] sm:$0xff]
          %v555 = vld [vmem:[%s344 + $0x3d0] sm:$0xff]
          %v556 = vld [vmem:[%s344 + $0x3d8] sm:$0xff]
          %v557 = vld [vmem:[%s344 + $0x3e0] sm:$0xff]
          %v558 = vld [vmem:[%s344 + $0x3e8] sm:$0xff]
          %v559 = vld [vmem:[%s344 + $0x3f0] sm:$0xff]
          %v560 = vld [vmem:[%s344 + $0x3f8] sm:$0xff]
          %v561 = vld [vmem:[%s344 + $0x400] sm:$0xff]
          %v562 = vld [vmem:[%s344 + $0x408] sm:$0xff]
          %v563 = vld [vmem:[%s344 + $0x410] sm:$0xff]
          %v564 = vld [vmem:[%s344 + $0x418] sm:$0xff]
          %v565 = vld [vmem:[%s344 + $0x420] sm:$0xff]
          %v566 = vld [vmem:[%s344 + $0x428] sm:$0xff]
          %v567 = vld [vmem:[%s344 + $0x430] sm:$0xff]
          %v568 = vld [vmem:[%s344 + $0x438] sm:$0xff]
          %v569 = vld [vmem:[%s344 + $0x440] sm:$0xff]
          %v570 = vld [vmem:[%s344 + $0x448] sm:$0xff]
          %v571 = vld [vmem:[%s344 + $0x450] sm:$0xff]
          %v572 = vld [vmem:[%s344 + $0x458] sm:$0xff]
          %v573 = vld [vmem:[%s344 + $0x460] sm:$0xff]
          %v574 = vld [vmem:[%s344 + $0x468] sm:$0xff]
          %v575 = vld [vmem:[%s344 + $0x470] sm:$0xff]
          %v576 = vld [vmem:[%s344 + $0x478] sm:$0xff]
          %v577 = vld [vmem:[%s353] sm:$0xff]
          %v578 = vld [vmem:[%s353 + $0x8] sm:$0xff]
          %v579 = vld [vmem:[%s353 + $0x10] sm:$0xff]
          %v580 = vld [vmem:[%s353 + $0x18] sm:$0xff]
          %v581 = vld [vmem:[%s353 + $0x20] sm:$0xff]
          %v582 = vld [vmem:[%s353 + $0x28] sm:$0xff]
          %v583 = vld [vmem:[%s353 + $0x30] sm:$0xff]
          %v584 = vld [vmem:[%s353 + $0x38] sm:$0xff]
          %v585 = vld [vmem:[%s353 + $0x40] sm:$0xff]
          %v586 = vld [vmem:[%s353 + $0x48] sm:$0xff]
          %v587 = vld [vmem:[%s353 + $0x50] sm:$0xff]
          %v588 = vld [vmem:[%s353 + $0x58] sm:$0xff]
          %v589 = vld [vmem:[%s353 + $0x60] sm:$0xff]
          %v590 = vld [vmem:[%s353 + $0x68] sm:$0xff]
          %v591 = vld [vmem:[%s353 + $0x70] sm:$0xff]
          %v592 = vld [vmem:[%s353 + $0x78] sm:$0xff]
          %v593 = vld [vmem:[%s353 + $0x80] sm:$0xff]
          %v594 = vld [vmem:[%s353 + $0x88] sm:$0xff]
          %v595 = vld [vmem:[%s353 + $0x90] sm:$0xff]
          %v596 = vld [vmem:[%s353 + $0x98] sm:$0xff]
          %v597 = vld [vmem:[%s353 + $0xa0] sm:$0xff]
          %v598 = vld [vmem:[%s353 + $0xa8] sm:$0xff]
          %v599 = vld [vmem:[%s353 + $0xb0] sm:$0xff]
          %v600 = vld [vmem:[%s353 + $0xb8] sm:$0xff]
          %v601 = vld [vmem:[%s353 + $0xc0] sm:$0xff]
          %v602 = vld [vmem:[%s353 + $0xc8] sm:$0xff]
          %v603 = vld [vmem:[%s353 + $0xd0] sm:$0xff]
          %v604 = vld [vmem:[%s353 + $0xd8] sm:$0xff]
          %v605 = vld [vmem:[%s353 + $0xe0] sm:$0xff]
          %v606 = vld [vmem:[%s353 + $0xe8] sm:$0xff]
          %v607 = vld [vmem:[%s353 + $0xf0] sm:$0xff]
          %v608 = vld [vmem:[%s353 + $0xf8] sm:$0xff]
          %v609 = vld [vmem:[%s353 + $0x100] sm:$0xff]
          %v610 = vld [vmem:[%s353 + $0x108] sm:$0xff]
          %v611 = vld [vmem:[%s353 + $0x110] sm:$0xff]
          %v612 = vld [vmem:[%s353 + $0x118] sm:$0xff]
          %v613 = vld [vmem:[%s353 + $0x120] sm:$0xff]
          %v614 = vld [vmem:[%s353 + $0x128] sm:$0xff]
          %v615 = vld [vmem:[%s353 + $0x130] sm:$0xff]
          %v616 = vld [vmem:[%s353 + $0x138] sm:$0xff]
          %v617 = vld [vmem:[%s353 + $0x140] sm:$0xff]
          %v618 = vld [vmem:[%s353 + $0x148] sm:$0xff]
          %v619 = vld [vmem:[%s353 + $0x150] sm:$0xff]
          %v620 = vld [vmem:[%s353 + $0x158] sm:$0xff]
          %v621 = vld [vmem:[%s353 + $0x160] sm:$0xff]
          %v622 = vld [vmem:[%s353 + $0x168] sm:$0xff]
          %v623 = vld [vmem:[%s353 + $0x170] sm:$0xff]
          %v624 = vld [vmem:[%s353 + $0x178] sm:$0xff]
          %v625 = vld [vmem:[%s353 + $0x180] sm:$0xff]
          %v626 = vld [vmem:[%s353 + $0x188] sm:$0xff]
          %v627 = vld [vmem:[%s353 + $0x190] sm:$0xff]
          %v628 = vld [vmem:[%s353 + $0x198] sm:$0xff]
          %v629 = vld [vmem:[%s353 + $0x1a0] sm:$0xff]
          %v630 = vld [vmem:[%s353 + $0x1a8] sm:$0xff]
          %v631 = vld [vmem:[%s353 + $0x1b0] sm:$0xff]
          %v632 = vld [vmem:[%s353 + $0x1b8] sm:$0xff]
          %v633 = vld [vmem:[%s353 + $0x1c0] sm:$0xff]
          %v634 = vld [vmem:[%s353 + $0x1c8] sm:$0xff]
          %v635 = vld [vmem:[%s353 + $0x1d0] sm:$0xff]
          %v636 = vld [vmem:[%s353 + $0x1d8] sm:$0xff]
          %v637 = vld [vmem:[%s353 + $0x1e0] sm:$0xff]
          %v638 = vld [vmem:[%s353 + $0x1e8] sm:$0xff]
          %v639 = vld [vmem:[%s353 + $0x1f0] sm:$0xff]
          %v640 = vld [vmem:[%s353 + $0x1f8] sm:$0xff]
          %v641 = vld [vmem:[%s353 + $0x200] sm:$0xff]
          %v642 = vld [vmem:[%s353 + $0x208] sm:$0xff]
          %v643 = vld [vmem:[%s353 + $0x210] sm:$0xff]
          %v644 = vld [vmem:[%s353 + $0x218] sm:$0xff]
          %v645 = vld [vmem:[%s353 + $0x220] sm:$0xff]
          %v646 = vld [vmem:[%s353 + $0x228] sm:$0xff]
          %v647 = vld [vmem:[%s353 + $0x230] sm:$0xff]
          %v648 = vld [vmem:[%s353 + $0x238] sm:$0xff]
          %v649 = vld [vmem:[%s353 + $0x240] sm:$0xff]
          %v650 = vld [vmem:[%s353 + $0x248] sm:$0xff]
          %v651 = vld [vmem:[%s353 + $0x250] sm:$0xff]
          %v652 = vld [vmem:[%s353 + $0x258] sm:$0xff]
          %v653 = vld [vmem:[%s353 + $0x260] sm:$0xff]
          %v654 = vld [vmem:[%s353 + $0x268] sm:$0xff]
          %v655 = vld [vmem:[%s353 + $0x270] sm:$0xff]
          %v656 = vld [vmem:[%s353 + $0x278] sm:$0xff]
          %v657 = vld [vmem:[%s353 + $0x280] sm:$0xff]
          %v658 = vld [vmem:[%s353 + $0x288] sm:$0xff]
          %v659 = vld [vmem:[%s353 + $0x290] sm:$0xff]
          %v660 = vld [vmem:[%s353 + $0x298] sm:$0xff]
          %v661 = vld [vmem:[%s353 + $0x2a0] sm:$0xff]
          %v662 = vld [vmem:[%s353 + $0x2a8] sm:$0xff]
          %v663 = vld [vmem:[%s353 + $0x2b0] sm:$0xff]
          %v664 = vld [vmem:[%s353 + $0x2b8] sm:$0xff]
          %v665 = vld [vmem:[%s353 + $0x2c0] sm:$0xff]
          %v666 = vld [vmem:[%s353 + $0x2c8] sm:$0xff]
          %v667 = vld [vmem:[%s353 + $0x2d0] sm:$0xff]
          %v668 = vld [vmem:[%s353 + $0x2d8] sm:$0xff]
          %v669 = vld [vmem:[%s353 + $0x2e0] sm:$0xff]
          %v670 = vld [vmem:[%s353 + $0x2e8] sm:$0xff]
          %v671 = vld [vmem:[%s353 + $0x2f0] sm:$0xff]
          %v672 = vld [vmem:[%s353 + $0x2f8] sm:$0xff]
          %v673 = vld [vmem:[%s353 + $0x300] sm:$0xff]
          %v674 = vld [vmem:[%s353 + $0x308] sm:$0xff]
          %v675 = vld [vmem:[%s353 + $0x310] sm:$0xff]
          %v676 = vld [vmem:[%s353 + $0x318] sm:$0xff]
          %v677 = vld [vmem:[%s353 + $0x320] sm:$0xff]
          %v678 = vld [vmem:[%s353 + $0x328] sm:$0xff]
          %v679 = vld [vmem:[%s353 + $0x330] sm:$0xff]
          %v680 = vld [vmem:[%s353 + $0x338] sm:$0xff]
          %v681 = vld [vmem:[%s353 + $0x340] sm:$0xff]
          %v682 = vld [vmem:[%s353 + $0x348] sm:$0xff]
          %v683 = vld [vmem:[%s353 + $0x350] sm:$0xff]
          %v684 = vld [vmem:[%s353 + $0x358] sm:$0xff]
          %v685 = vld [vmem:[%s353 + $0x360] sm:$0xff]
          %v686 = vld [vmem:[%s353 + $0x368] sm:$0xff]
          %v687 = vld [vmem:[%s353 + $0x370] sm:$0xff]
          %v688 = vld [vmem:[%s353 + $0x378] sm:$0xff]
          %v689 = vld [vmem:[%s353 + $0x380] sm:$0xff]
          %v690 = vld [vmem:[%s353 + $0x388] sm:$0xff]
          %v691 = vld [vmem:[%s353 + $0x390] sm:$0xff]
          %v692 = vld [vmem:[%s353 + $0x398] sm:$0xff]
          %v693 = vld [vmem:[%s353 + $0x3a0] sm:$0xff]
          %v694 = vld [vmem:[%s353 + $0x3a8] sm:$0xff]
          %v695 = vld [vmem:[%s353 + $0x3b0] sm:$0xff]
          %v696 = vld [vmem:[%s353 + $0x3b8] sm:$0xff]
          %v697 = vld [vmem:[%s353 + $0x3c0] sm:$0xff]
          %v698 = vld [vmem:[%s353 + $0x3c8] sm:$0xff]
          %v699 = vld [vmem:[%s353 + $0x3d0] sm:$0xff]
          %v700 = vld [vmem:[%s353 + $0x3d8] sm:$0xff]
          %v701 = vld [vmem:[%s353 + $0x3e0] sm:$0xff]
          %v702 = vld [vmem:[%s353 + $0x3e8] sm:$0xff]
          %v703 = vld [vmem:[%s353 + $0x3f0] sm:$0xff]
          %v704 = vld [vmem:[%s353 + $0x3f8] sm:$0xff]
          %v705 = vld [vmem:[%s353 + $0x400] sm:$0xff]
          %v706 = vld [vmem:[%s353 + $0x408] sm:$0xff]
          %v707 = vld [vmem:[%s353 + $0x410] sm:$0xff]
          %v708 = vld [vmem:[%s353 + $0x418] sm:$0xff]
          %v709 = vld [vmem:[%s353 + $0x420] sm:$0xff]
          %v710 = vld [vmem:[%s353 + $0x428] sm:$0xff]
          %v711 = vld [vmem:[%s353 + $0x430] sm:$0xff]
          %v712 = vld [vmem:[%s353 + $0x438] sm:$0xff]
          %v713 = vld [vmem:[%s353 + $0x440] sm:$0xff]
          %v714 = vld [vmem:[%s353 + $0x448] sm:$0xff]
          %v715 = vld [vmem:[%s353 + $0x450] sm:$0xff]
          %v716 = vld [vmem:[%s353 + $0x458] sm:$0xff]
          %v717 = vld [vmem:[%s353 + $0x460] sm:$0xff]
          %v718 = vld [vmem:[%s353 + $0x468] sm:$0xff]
          %v719 = vld [vmem:[%s353 + $0x470] sm:$0xff]
          %v720 = vld [vmem:[%s353 + $0x478] sm:$0xff]
          %v721 = vadd.f32 %v433, %v577
          %v722 = vadd.f32 %v434, %v578
          %v723 = vadd.f32 %v435, %v579
          %v724 = vadd.f32 %v436, %v580
          %v725 = vadd.f32 %v437, %v581
          %v726 = vadd.f32 %v438, %v582
          %v727 = vadd.f32 %v439, %v583
          %v728 = vadd.f32 %v440, %v584
          %v729 = vadd.f32 %v441, %v585
          %v730 = vadd.f32 %v442, %v586
          %v731 = vadd.f32 %v443, %v587
          %v732 = vadd.f32 %v444, %v588
          %v733 = vadd.f32 %v445, %v589
          %v734 = vadd.f32 %v446, %v590
          %v735 = vadd.f32 %v447, %v591
          %v736 = vadd.f32 %v448, %v592
          %v737 = vadd.f32 %v449, %v593
          %v738 = vadd.f32 %v450, %v594
          %v739 = vadd.f32 %v451, %v595
          %v740 = vadd.f32 %v452, %v596
          %v741 = vadd.f32 %v453, %v597
          %v742 = vadd.f32 %v454, %v598
          %v743 = vadd.f32 %v455, %v599
          %v744 = vadd.f32 %v456, %v600
          %v745 = vadd.f32 %v457, %v601
          %v746 = vadd.f32 %v458, %v602
          %v747 = vadd.f32 %v459, %v603
          %v748 = vadd.f32 %v460, %v604
          %v749 = vadd.f32 %v461, %v605
          %v750 = vadd.f32 %v462, %v606
          %v751 = vadd.f32 %v463, %v607
          %v752 = vadd.f32 %v464, %v608
          %v753 = vadd.f32 %v465, %v609
          %v754 = vadd.f32 %v466, %v610
          %v755 = vadd.f32 %v467, %v611
          %v756 = vadd.f32 %v468, %v612
          %v757 = vadd.f32 %v469, %v613
          %v758 = vadd.f32 %v470, %v614
          %v759 = vadd.f32 %v471, %v615
          %v760 = vadd.f32 %v472, %v616
          %v761 = vadd.f32 %v473, %v617
          %v762 = vadd.f32 %v474, %v618
          %v763 = vadd.f32 %v475, %v619
          %v764 = vadd.f32 %v476, %v620
          %v765 = vadd.f32 %v477, %v621
          %v766 = vadd.f32 %v478, %v622
          %v767 = vadd.f32 %v479, %v623
          %v768 = vadd.f32 %v480, %v624
          %v769 = vadd.f32 %v481, %v625
          %v770 = vadd.f32 %v482, %v626
          %v771 = vadd.f32 %v483, %v627
          %v772 = vadd.f32 %v484, %v628
          %v773 = vadd.f32 %v485, %v629
          %v774 = vadd.f32 %v486, %v630
          %v775 = vadd.f32 %v487, %v631
          %v776 = vadd.f32 %v488, %v632
          %v777 = vadd.f32 %v489, %v633
          %v778 = vadd.f32 %v490, %v634
          %v779 = vadd.f32 %v491, %v635
          %v780 = vadd.f32 %v492, %v636
          %v781 = vadd.f32 %v493, %v637
          %v782 = vadd.f32 %v494, %v638
          %v783 = vadd.f32 %v495, %v639
          %v784 = vadd.f32 %v496, %v640
          %v785 = vadd.f32 %v497, %v641
          %v786 = vadd.f32 %v498, %v642
          %v787 = vadd.f32 %v499, %v643
          %v788 = vadd.f32 %v500, %v644
          %v789 = vadd.f32 %v501, %v645
          %v790 = vadd.f32 %v502, %v646
          %v791 = vadd.f32 %v503, %v647
          %v792 = vadd.f32 %v504, %v648
          %v793 = vadd.f32 %v505, %v649
          %v794 = vadd.f32 %v506, %v650
          %v795 = vadd.f32 %v507, %v651
          %v796 = vadd.f32 %v508, %v652
          %v797 = vadd.f32 %v509, %v653
          %v798 = vadd.f32 %v510, %v654
          %v799 = vadd.f32 %v511, %v655
          %v800 = vadd.f32 %v512, %v656
          %v801 = vadd.f32 %v513, %v657
          %v802 = vadd.f32 %v514, %v658
          %v803 = vadd.f32 %v515, %v659
          %v804 = vadd.f32 %v516, %v660
          %v805 = vadd.f32 %v517, %v661
          %v806 = vadd.f32 %v518, %v662
          %v807 = vadd.f32 %v519, %v663
          %v808 = vadd.f32 %v520, %v664
          %v809 = vadd.f32 %v521, %v665
          %v810 = vadd.f32 %v522, %v666
          %v811 = vadd.f32 %v523, %v667
          %v812 = vadd.f32 %v524, %v668
          %v813 = vadd.f32 %v525, %v669
          %v814 = vadd.f32 %v526, %v670
          %v815 = vadd.f32 %v527, %v671
          %v816 = vadd.f32 %v528, %v672
          %v817 = vadd.f32 %v529, %v673
          %v818 = vadd.f32 %v530, %v674
          %v819 = vadd.f32 %v531, %v675
          %v820 = vadd.f32 %v532, %v676
          %v821 = vadd.f32 %v533, %v677
          %v822 = vadd.f32 %v534, %v678
          %v823 = vadd.f32 %v535, %v679
          %v824 = vadd.f32 %v536, %v680
          %v825 = vadd.f32 %v537, %v681
          %v826 = vadd.f32 %v538, %v682
          %v827 = vadd.f32 %v539, %v683
          %v828 = vadd.f32 %v540, %v684
          %v829 = vadd.f32 %v541, %v685
          %v830 = vadd.f32 %v542, %v686
          %v831 = vadd.f32 %v543, %v687
          %v832 = vadd.f32 %v544, %v688
          %v833 = vadd.f32 %v545, %v689
          %v834 = vadd.f32 %v546, %v690
          %v835 = vadd.f32 %v547, %v691
          %v836 = vadd.f32 %v548, %v692
          %v837 = vadd.f32 %v549, %v693
          %v838 = vadd.f32 %v550, %v694
          %v839 = vadd.f32 %v551, %v695
          %v840 = vadd.f32 %v552, %v696
          %v841 = vadd.f32 %v553, %v697
          %v842 = vadd.f32 %v554, %v698
          %v843 = vadd.f32 %v555, %v699
          %v844 = vadd.f32 %v556, %v700
          %v845 = vadd.f32 %v557, %v701
          %v846 = vadd.f32 %v558, %v702
          %v847 = vadd.f32 %v559, %v703
          %v848 = vadd.f32 %v560, %v704
          %v849 = vadd.f32 %v561, %v705
          %v850 = vadd.f32 %v562, %v706
          %v851 = vadd.f32 %v563, %v707
          %v852 = vadd.f32 %v564, %v708
          %v853 = vadd.f32 %v565, %v709
          %v854 = vadd.f32 %v566, %v710
          %v855 = vadd.f32 %v567, %v711
          %v856 = vadd.f32 %v568, %v712
          %v857 = vadd.f32 %v569, %v713
          %v858 = vadd.f32 %v570, %v714
          %v859 = vadd.f32 %v571, %v715
          %v860 = vadd.f32 %v572, %v716
          %v861 = vadd.f32 %v573, %v717
          %v862 = vadd.f32 %v574, %v718
          %v863 = vadd.f32 %v575, %v719
          %v864 = vadd.f32 %v576, %v720
          %v865 = vadd.f32 %v721, %v722
          %v866 = vadd.f32 %v865, %v723
          %v867 = vadd.f32 %v866, %v724
          %v868 = vadd.f32 %v867, %v725
          %v869 = vadd.f32 %v868, %v726
          %870 = vadd.xlane.f32.xlu0 %v869
          %v871 = vpop.xlane.xlu0 %870
          %v872 = vadd.f32 %v727, %v728
          %v873 = vadd.f32 %v872, %v729
          %v874 = vadd.f32 %v873, %v730
          %v875 = vadd.f32 %v874, %v731
          %v876 = vadd.f32 %v875, %v732
          %877 = vadd.xlane.f32.xlu0 %v876
          %v878 = vpop.xlane.xlu0 %877
          %v879 = vadd.f32 %v733, %v734
          %v880 = vadd.f32 %v879, %v735
          %v881 = vadd.f32 %v880, %v736
          %v882 = vadd.f32 %v881, %v737
          %v883 = vadd.f32 %v882, %v738
          %884 = vadd.xlane.f32.xlu0 %v883
          %v885 = vpop.xlane.xlu0 %884
          %v886 = vadd.f32 %v739, %v740
          %v887 = vadd.f32 %v886, %v741
          %v888 = vadd.f32 %v887, %v742
          %v889 = vadd.f32 %v888, %v743
          %v890 = vadd.f32 %v889, %v744
          %891 = vadd.xlane.f32.xlu0 %v890
          %v892 = vpop.xlane.xlu0 %891
          %v893 = vadd.f32 %v745, %v746
          %v894 = vadd.f32 %v893, %v747
          %v895 = vadd.f32 %v894, %v748
          %v896 = vadd.f32 %v895, %v749
          %v897 = vadd.f32 %v896, %v750
          %898 = vadd.xlane.f32.xlu0 %v897
          %v899 = vpop.xlane.xlu0 %898
          %v900 = vadd.f32 %v751, %v752
          %v901 = vadd.f32 %v900, %v753
          %v902 = vadd.f32 %v901, %v754
          %v903 = vadd.f32 %v902, %v755
          %v904 = vadd.f32 %v903, %v756
          %905 = vadd.xlane.f32.xlu0 %v904
          %v906 = vpop.xlane.xlu0 %905
          %v907 = vadd.f32 %v757, %v758
          %v908 = vadd.f32 %v907, %v759
          %v909 = vadd.f32 %v908, %v760
          %v910 = vadd.f32 %v909, %v761
          %v911 = vadd.f32 %v910, %v762
          %912 = vadd.xlane.f32.xlu0 %v911
          %v913 = vpop.xlane.xlu0 %912
          %v914 = vadd.f32 %v763, %v764
          %v915 = vadd.f32 %v914, %v765
          %v916 = vadd.f32 %v915, %v766
          %v917 = vadd.f32 %v916, %v767
          %v918 = vadd.f32 %v917, %v768
          %919 = vadd.xlane.f32.xlu0 %v918
          %v920 = vpop.xlane.xlu0 %919
          %v921 = vadd.f32 %v769, %v770
          %v922 = vadd.f32 %v921, %v771
          %v923 = vadd.f32 %v922, %v772
          %v924 = vadd.f32 %v923, %v773
          %v925 = vadd.f32 %v924, %v774
          %926 = vadd.xlane.f32.xlu0 %v925
          %v927 = vpop.xlane.xlu0 %926
          %v928 = vadd.f32 %v775, %v776
          %v929 = vadd.f32 %v928, %v777
          %v930 = vadd.f32 %v929, %v778
          %v931 = vadd.f32 %v930, %v779
          %v932 = vadd.f32 %v931, %v780
          %933 = vadd.xlane.f32.xlu0 %v932
          %v934 = vpop.xlane.xlu0 %933
          %v935 = vadd.f32 %v781, %v782
          %v936 = vadd.f32 %v935, %v783
          %v937 = vadd.f32 %v936, %v784
          %v938 = vadd.f32 %v937, %v785
          %v939 = vadd.f32 %v938, %v786
          %940 = vadd.xlane.f32.xlu0 %v939
          %v941 = vpop.xlane.xlu0 %940
          %v942 = vadd.f32 %v787, %v788
          %v943 = vadd.f32 %v942, %v789
          %v944 = vadd.f32 %v943, %v790
          %v945 = vadd.f32 %v944, %v791
          %v946 = vadd.f32 %v945, %v792
          %947 = vadd.xlane.f32.xlu0 %v946
          %v948 = vpop.xlane.xlu0 %947
          %v949 = vadd.f32 %v793, %v794
          %v950 = vadd.f32 %v949, %v795
          %v951 = vadd.f32 %v950, %v796
          %v952 = vadd.f32 %v951, %v797
          %v953 = vadd.f32 %v952, %v798
          %954 = vadd.xlane.f32.xlu0 %v953
          %v955 = vpop.xlane.xlu0 %954
          %v956 = vadd.f32 %v799, %v800
          %v957 = vadd.f32 %v956, %v801
          %v958 = vadd.f32 %v957, %v802
          %v959 = vadd.f32 %v958, %v803
          %v960 = vadd.f32 %v959, %v804
          %961 = vadd.xlane.f32.xlu0 %v960
          %v962 = vpop.xlane.xlu0 %961
          %v963 = vadd.f32 %v805, %v806
          %v964 = vadd.f32 %v963, %v807
          %v965 = vadd.f32 %v964, %v808
          %v966 = vadd.f32 %v965, %v809
          %v967 = vadd.f32 %v966, %v810
          %968 = vadd.xlane.f32.xlu0 %v967
          %v969 = vpop.xlane.xlu0 %968
          %v970 = vadd.f32 %v811, %v812
          %v971 = vadd.f32 %v970, %v813
          %v972 = vadd.f32 %v971, %v814
          %v973 = vadd.f32 %v972, %v815
          %v974 = vadd.f32 %v973, %v816
          %975 = vadd.xlane.f32.xlu0 %v974
          %v976 = vpop.xlane.xlu0 %975
          %v977 = vadd.f32 %v817, %v818
          %v978 = vadd.f32 %v977, %v819
          %v979 = vadd.f32 %v978, %v820
          %v980 = vadd.f32 %v979, %v821
          %v981 = vadd.f32 %v980, %v822
          %982 = vadd.xlane.f32.xlu0 %v981
          %v983 = vpop.xlane.xlu0 %982
          %v984 = vadd.f32 %v823, %v824
          %v985 = vadd.f32 %v984, %v825
          %v986 = vadd.f32 %v985, %v826
          %v987 = vadd.f32 %v986, %v827
          %v988 = vadd.f32 %v987, %v828
          %989 = vadd.xlane.f32.xlu0 %v988
          %v990 = vpop.xlane.xlu0 %989
          %v991 = vadd.f32 %v829, %v830
          %v992 = vadd.f32 %v991, %v831
          %v993 = vadd.f32 %v992, %v832
          %v994 = vadd.f32 %v993, %v833
          %v995 = vadd.f32 %v994, %v834
          %996 = vadd.xlane.f32.xlu0 %v995
          %v997 = vpop.xlane.xlu0 %996
          %v998 = vadd.f32 %v835, %v836
          %v999 = vadd.f32 %v998, %v837
          %v1000 = vadd.f32 %v999, %v838
          %v1001 = vadd.f32 %v1000, %v839
          %v1002 = vadd.f32 %v1001, %v840
          %1003 = vadd.xlane.f32.xlu0 %v1002
          %v1004 = vpop.xlane.xlu0 %1003
          %v1005 = vadd.f32 %v841, %v842
          %v1006 = vadd.f32 %v1005, %v843
          %v1007 = vadd.f32 %v1006, %v844
          %v1008 = vadd.f32 %v1007, %v845
          %v1009 = vadd.f32 %v1008, %v846
          %1010 = vadd.xlane.f32.xlu0 %v1009
          %v1011 = vpop.xlane.xlu0 %1010
          %v1012 = vadd.f32 %v847, %v848
          %v1013 = vadd.f32 %v1012, %v849
          %v1014 = vadd.f32 %v1013, %v850
          %v1015 = vadd.f32 %v1014, %v851
          %v1016 = vadd.f32 %v1015, %v852
          %1017 = vadd.xlane.f32.xlu0 %v1016
          %v1018 = vpop.xlane.xlu0 %1017
          %v1019 = vadd.f32 %v853, %v854
          %v1020 = vadd.f32 %v1019, %v855
          %v1021 = vadd.f32 %v1020, %v856
          %v1022 = vadd.f32 %v1021, %v857
          %v1023 = vadd.f32 %v1022, %v858
          %1024 = vadd.xlane.f32.xlu0 %v1023
          %v1025 = vpop.xlane.xlu0 %1024
          %v1026 = vadd.f32 %v859, %v860
          %v1027 = vadd.f32 %v1026, %v861
          %v1028 = vadd.f32 %v1027, %v862
          %v1029 = vadd.f32 %v1028, %v863
          %v1030 = vadd.f32 %v1029, %v864
          %1031 = vadd.xlane.f32.xlu0 %v1030
          %v1032 = vpop.xlane.xlu0 %1031
          %v1033 = vmul.f32 %v721, %v721
          %v1034 = vmul.f32 %v722, %v722
          %v1035 = vmul.f32 %v723, %v723
          %v1036 = vmul.f32 %v724, %v724
          %v1037 = vmul.f32 %v725, %v725
          %v1038 = vmul.f32 %v726, %v726
          %v1039 = vmul.f32 %v727, %v727
          %v1040 = vmul.f32 %v728, %v728
          %v1041 = vmul.f32 %v729, %v729
          %v1042 = vmul.f32 %v730, %v730
          %v1043 = vmul.f32 %v731, %v731
          %v1044 = vmul.f32 %v732, %v732
          %v1045 = vmul.f32 %v733, %v733
          %v1046 = vmul.f32 %v734, %v734
          %v1047 = vmul.f32 %v735, %v735
          %v1048 = vmul.f32 %v736, %v736
          %v1049 = vmul.f32 %v737, %v737
          %v1050 = vmul.f32 %v738, %v738
          %v1051 = vmul.f32 %v739, %v739
          %v1052 = vmul.f32 %v740, %v740
          %v1053 = vmul.f32 %v741, %v741
          %v1054 = vmul.f32 %v742, %v742
          %v1055 = vmul.f32 %v743, %v743
          %v1056 = vmul.f32 %v744, %v744
          %v1057 = vmul.f32 %v745, %v745
          %v1058 = vmul.f32 %v746, %v746
          %v1059 = vmul.f32 %v747, %v747
          %v1060 = vmul.f32 %v748, %v748
          %v1061 = vmul.f32 %v749, %v749
          %v1062 = vmul.f32 %v750, %v750
          %v1063 = vmul.f32 %v751, %v751
          %v1064 = vmul.f32 %v752, %v752
          %v1065 = vmul.f32 %v753, %v753
          %v1066 = vmul.f32 %v754, %v754
          %v1067 = vmul.f32 %v755, %v755
          %v1068 = vmul.f32 %v756, %v756
          %v1069 = vmul.f32 %v757, %v757
          %v1070 = vmul.f32 %v758, %v758
          %v1071 = vmul.f32 %v759, %v759
          %v1072 = vmul.f32 %v760, %v760
          %v1073 = vmul.f32 %v761, %v761
          %v1074 = vmul.f32 %v762, %v762
          %v1075 = vmul.f32 %v763, %v763
          %v1076 = vmul.f32 %v764, %v764
          %v1077 = vmul.f32 %v765, %v765
          %v1078 = vmul.f32 %v766, %v766
          %v1079 = vmul.f32 %v767, %v767
          %v1080 = vmul.f32 %v768, %v768
          %v1081 = vmul.f32 %v769, %v769
          %v1082 = vmul.f32 %v770, %v770
          %v1083 = vmul.f32 %v771, %v771
          %v1084 = vmul.f32 %v772, %v772
          %v1085 = vmul.f32 %v773, %v773
          %v1086 = vmul.f32 %v774, %v774
          %v1087 = vmul.f32 %v775, %v775
          %v1088 = vmul.f32 %v776, %v776
          %v1089 = vmul.f32 %v777, %v777
          %v1090 = vmul.f32 %v778, %v778
          %v1091 = vmul.f32 %v779, %v779
          %v1092 = vmul.f32 %v780, %v780
          %v1093 = vmul.f32 %v781, %v781
          %v1094 = vmul.f32 %v782, %v782
          %v1095 = vmul.f32 %v783, %v783
          %v1096 = vmul.f32 %v784, %v784
          %v1097 = vmul.f32 %v785, %v785
          %v1098 = vmul.f32 %v786, %v786
          %v1099 = vmul.f32 %v787, %v787
          %v1100 = vmul.f32 %v788, %v788
          %v1101 = vmul.f32 %v789, %v789
          %v1102 = vmul.f32 %v790, %v790
          %v1103 = vmul.f32 %v791, %v791
          %v1104 = vmul.f32 %v792, %v792
          %v1105 = vmul.f32 %v793, %v793
          %v1106 = vmul.f32 %v794, %v794
          %v1107 = vmul.f32 %v795, %v795
          %v1108 = vmul.f32 %v796, %v796
          %v1109 = vmul.f32 %v797, %v797
          %v1110 = vmul.f32 %v798, %v798
          %v1111 = vmul.f32 %v799, %v799
          %v1112 = vmul.f32 %v800, %v800
          %v1113 = vmul.f32 %v801, %v801
          %v1114 = vmul.f32 %v802, %v802
          %v1115 = vmul.f32 %v803, %v803
          %v1116 = vmul.f32 %v804, %v804
          %v1117 = vmul.f32 %v805, %v805
          %v1118 = vmul.f32 %v806, %v806
          %v1119 = vmul.f32 %v807, %v807
          %v1120 = vmul.f32 %v808, %v808
          %v1121 = vmul.f32 %v809, %v809
          %v1122 = vmul.f32 %v810, %v810
          %v1123 = vmul.f32 %v811, %v811
          %v1124 = vmul.f32 %v812, %v812
          %v1125 = vmul.f32 %v813, %v813
          %v1126 = vmul.f32 %v814, %v814
          %v1127 = vmul.f32 %v815, %v815
          %v1128 = vmul.f32 %v816, %v816
          %v1129 = vmul.f32 %v817, %v817
          %v1130 = vmul.f32 %v818, %v818
          %v1131 = vmul.f32 %v819, %v819
          %v1132 = vmul.f32 %v820, %v820
          %v1133 = vmul.f32 %v821, %v821
          %v1134 = vmul.f32 %v822, %v822
          %v1135 = vmul.f32 %v823, %v823
          %v1136 = vmul.f32 %v824, %v824
          %v1137 = vmul.f32 %v825, %v825
          %v1138 = vmul.f32 %v826, %v826
          %v1139 = vmul.f32 %v827, %v827
          %v1140 = vmul.f32 %v828, %v828
          %v1141 = vmul.f32 %v829, %v829
          %v1142 = vmul.f32 %v830, %v830
          %v1143 = vmul.f32 %v831, %v831
          %v1144 = vmul.f32 %v832, %v832
          %v1145 = vmul.f32 %v833, %v833
          %v1146 = vmul.f32 %v834, %v834
          %v1147 = vmul.f32 %v835, %v835
          %v1148 = vmul.f32 %v836, %v836
          %v1149 = vmul.f32 %v837, %v837
          %v1150 = vmul.f32 %v838, %v838
          %v1151 = vmul.f32 %v839, %v839
          %v1152 = vmul.f32 %v840, %v840
          %v1153 = vmul.f32 %v841, %v841
          %v1154 = vmul.f32 %v842, %v842
          %v1155 = vmul.f32 %v843, %v843
          %v1156 = vmul.f32 %v844, %v844
          %v1157 = vmul.f32 %v845, %v845
          %v1158 = vmul.f32 %v846, %v846
          %v1159 = vmul.f32 %v847, %v847
          %v1160 = vmul.f32 %v848, %v848
          %v1161 = vmul.f32 %v849, %v849
          %v1162 = vmul.f32 %v850, %v850
          %v1163 = vmul.f32 %v851, %v851
          %v1164 = vmul.f32 %v852, %v852
          %v1165 = vmul.f32 %v853, %v853
          %v1166 = vmul.f32 %v854, %v854
          %v1167 = vmul.f32 %v855, %v855
          %v1168 = vmul.f32 %v856, %v856
          %v1169 = vmul.f32 %v857, %v857
          %v1170 = vmul.f32 %v858, %v858
          %v1171 = vmul.f32 %v859, %v859
          %v1172 = vmul.f32 %v860, %v860
          %v1173 = vmul.f32 %v861, %v861
          %v1174 = vmul.f32 %v862, %v862
          %v1175 = vmul.f32 %v863, %v863
          %v1176 = vmul.f32 %v864, %v864
          %v1177 = vadd.f32 %v1033, %v1034
          %v1178 = vadd.f32 %v1177, %v1035
          %v1179 = vadd.f32 %v1178, %v1036
          %v1180 = vadd.f32 %v1179, %v1037
          %v1181 = vadd.f32 %v1180, %v1038
          %1182 = vadd.xlane.f32.xlu0 %v1181
          %v1183 = vpop.xlane.xlu0 %1182
          %v1184 = vadd.f32 %v1039, %v1040
          %v1185 = vadd.f32 %v1184, %v1041
          %v1186 = vadd.f32 %v1185, %v1042
          %v1187 = vadd.f32 %v1186, %v1043
          %v1188 = vadd.f32 %v1187, %v1044
          %1189 = vadd.xlane.f32.xlu0 %v1188
          %v1190 = vpop.xlane.xlu0 %1189
          %v1191 = vadd.f32 %v1045, %v1046
          %v1192 = vadd.f32 %v1191, %v1047
          %v1193 = vadd.f32 %v1192, %v1048
          %v1194 = vadd.f32 %v1193, %v1049
          %v1195 = vadd.f32 %v1194, %v1050
          %1196 = vadd.xlane.f32.xlu0 %v1195
          %v1197 = vpop.xlane.xlu0 %1196
          %v1198 = vadd.f32 %v1051, %v1052
          %v1199 = vadd.f32 %v1198, %v1053
          %v1200 = vadd.f32 %v1199, %v1054
          %v1201 = vadd.f32 %v1200, %v1055
          %v1202 = vadd.f32 %v1201, %v1056
          %1203 = vadd.xlane.f32.xlu0 %v1202
          %v1204 = vpop.xlane.xlu0 %1203
          %v1205 = vadd.f32 %v1057, %v1058
          %v1206 = vadd.f32 %v1205, %v1059
          %v1207 = vadd.f32 %v1206, %v1060
          %v1208 = vadd.f32 %v1207, %v1061
          %v1209 = vadd.f32 %v1208, %v1062
          %1210 = vadd.xlane.f32.xlu0 %v1209
          %v1211 = vpop.xlane.xlu0 %1210
          %v1212 = vadd.f32 %v1063, %v1064
          %v1213 = vadd.f32 %v1212, %v1065
          %v1214 = vadd.f32 %v1213, %v1066
          %v1215 = vadd.f32 %v1214, %v1067
          %v1216 = vadd.f32 %v1215, %v1068
          %1217 = vadd.xlane.f32.xlu0 %v1216
          %v1218 = vpop.xlane.xlu0 %1217
          %v1219 = vadd.f32 %v1069, %v1070
          %v1220 = vadd.f32 %v1219, %v1071
          %v1221 = vadd.f32 %v1220, %v1072
          %v1222 = vadd.f32 %v1221, %v1073
          %v1223 = vadd.f32 %v1222, %v1074
          %1224 = vadd.xlane.f32.xlu0 %v1223
          %v1225 = vpop.xlane.xlu0 %1224
          %v1226 = vadd.f32 %v1075, %v1076
          %v1227 = vadd.f32 %v1226, %v1077
          %v1228 = vadd.f32 %v1227, %v1078
          %v1229 = vadd.f32 %v1228, %v1079
          %v1230 = vadd.f32 %v1229, %v1080
          %1231 = vadd.xlane.f32.xlu0 %v1230
          %v1232 = vpop.xlane.xlu0 %1231
          %v1233 = vadd.f32 %v1081, %v1082
          %v1234 = vadd.f32 %v1233, %v1083
          %v1235 = vadd.f32 %v1234, %v1084
          %v1236 = vadd.f32 %v1235, %v1085
          %v1237 = vadd.f32 %v1236, %v1086
          %1238 = vadd.xlane.f32.xlu0 %v1237
          %v1239 = vpop.xlane.xlu0 %1238
          %v1240 = vadd.f32 %v1087, %v1088
          %v1241 = vadd.f32 %v1240, %v1089
          %v1242 = vadd.f32 %v1241, %v1090
          %v1243 = vadd.f32 %v1242, %v1091
          %v1244 = vadd.f32 %v1243, %v1092
          %1245 = vadd.xlane.f32.xlu0 %v1244
          %v1246 = vpop.xlane.xlu0 %1245
          %v1247 = vadd.f32 %v1093, %v1094
          %v1248 = vadd.f32 %v1247, %v1095
          %v1249 = vadd.f32 %v1248, %v1096
          %v1250 = vadd.f32 %v1249, %v1097
          %v1251 = vadd.f32 %v1250, %v1098
          %1252 = vadd.xlane.f32.xlu0 %v1251
          %v1253 = vpop.xlane.xlu0 %1252
          %v1254 = vadd.f32 %v1099, %v1100
          %v1255 = vadd.f32 %v1254, %v1101
          %v1256 = vadd.f32 %v1255, %v1102
          %v1257 = vadd.f32 %v1256, %v1103
          %v1258 = vadd.f32 %v1257, %v1104
          %1259 = vadd.xlane.f32.xlu0 %v1258
          %v1260 = vpop.xlane.xlu0 %1259
          %v1261 = vadd.f32 %v1105, %v1106
          %v1262 = vadd.f32 %v1261, %v1107
          %v1263 = vadd.f32 %v1262, %v1108
          %v1264 = vadd.f32 %v1263, %v1109
          %v1265 = vadd.f32 %v1264, %v1110
          %1266 = vadd.xlane.f32.xlu0 %v1265
          %v1267 = vpop.xlane.xlu0 %1266
          %v1268 = vadd.f32 %v1111, %v1112
          %v1269 = vadd.f32 %v1268, %v1113
          %v1270 = vadd.f32 %v1269, %v1114
          %v1271 = vadd.f32 %v1270, %v1115
          %v1272 = vadd.f32 %v1271, %v1116
          %1273 = vadd.xlane.f32.xlu0 %v1272
          %v1274 = vpop.xlane.xlu0 %1273
          %v1275 = vadd.f32 %v1117, %v1118
          %v1276 = vadd.f32 %v1275, %v1119
          %v1277 = vadd.f32 %v1276, %v1120
          %v1278 = vadd.f32 %v1277, %v1121
          %v1279 = vadd.f32 %v1278, %v1122
          %1280 = vadd.xlane.f32.xlu0 %v1279
          %v1281 = vpop.xlane.xlu0 %1280
          %v1282 = vadd.f32 %v1123, %v1124
          %v1283 = vadd.f32 %v1282, %v1125
          %v1284 = vadd.f32 %v1283, %v1126
          %v1285 = vadd.f32 %v1284, %v1127
          %v1286 = vadd.f32 %v1285, %v1128
          %1287 = vadd.xlane.f32.xlu0 %v1286
          %v1288 = vpop.xlane.xlu0 %1287
          %v1289 = vadd.f32 %v1129, %v1130
          %v1290 = vadd.f32 %v1289, %v1131
          %v1291 = vadd.f32 %v1290, %v1132
          %v1292 = vadd.f32 %v1291, %v1133
          %v1293 = vadd.f32 %v1292, %v1134
          %1294 = vadd.xlane.f32.xlu0 %v1293
          %v1295 = vpop.xlane.xlu0 %1294
          %v1296 = vadd.f32 %v1135, %v1136
          %v1297 = vadd.f32 %v1296, %v1137
          %v1298 = vadd.f32 %v1297, %v1138
          %v1299 = vadd.f32 %v1298, %v1139
          %v1300 = vadd.f32 %v1299, %v1140
          %1301 = vadd.xlane.f32.xlu0 %v1300
          %v1302 = vpop.xlane.xlu0 %1301
          %v1303 = vadd.f32 %v1141, %v1142
          %v1304 = vadd.f32 %v1303, %v1143
          %v1305 = vadd.f32 %v1304, %v1144
          %v1306 = vadd.f32 %v1305, %v1145
          %v1307 = vadd.f32 %v1306, %v1146
          %1308 = vadd.xlane.f32.xlu0 %v1307
          %v1309 = vpop.xlane.xlu0 %1308
          %v1310 = vadd.f32 %v1147, %v1148
          %v1311 = vadd.f32 %v1310, %v1149
          %v1312 = vadd.f32 %v1311, %v1150
          %v1313 = vadd.f32 %v1312, %v1151
          %v1314 = vadd.f32 %v1313, %v1152
          %1315 = vadd.xlane.f32.xlu0 %v1314
          %v1316 = vpop.xlane.xlu0 %1315
          %v1317 = vadd.f32 %v1153, %v1154
          %v1318 = vadd.f32 %v1317, %v1155
          %v1319 = vadd.f32 %v1318, %v1156
          %v1320 = vadd.f32 %v1319, %v1157
          %v1321 = vadd.f32 %v1320, %v1158
          %1322 = vadd.xlane.f32.xlu0 %v1321
          %v1323 = vpop.xlane.xlu0 %1322
          %v1324 = vadd.f32 %v1159, %v1160
          %v1325 = vadd.f32 %v1324, %v1161
          %v1326 = vadd.f32 %v1325, %v1162
          %v1327 = vadd.f32 %v1326, %v1163
          %v1328 = vadd.f32 %v1327, %v1164
          %1329 = vadd.xlane.f32.xlu0 %v1328
          %v1330 = vpop.xlane.xlu0 %1329
          %v1331 = vadd.f32 %v1165, %v1166
          %v1332 = vadd.f32 %v1331, %v1167
          %v1333 = vadd.f32 %v1332, %v1168
          %v1334 = vadd.f32 %v1333, %v1169
          %v1335 = vadd.f32 %v1334, %v1170
          %1336 = vadd.xlane.f32.xlu0 %v1335
          %v1337 = vpop.xlane.xlu0 %1336
          %v1338 = vadd.f32 %v1171, %v1172
          %v1339 = vadd.f32 %v1338, %v1173
          %v1340 = vadd.f32 %v1339, %v1174
          %v1341 = vadd.f32 %v1340, %v1175
          %v1342 = vadd.f32 %v1341, %v1176
          %1343 = vadd.xlane.f32.xlu0 %v1342
          %v1344 = vpop.xlane.xlu0 %1343
          %v1345 = vmul.f32 %v871, 0.0013020834
          %v1346 = vmul.f32 %v878, 0.0013020834
          %v1347 = vmul.f32 %v885, 0.0013020834
          %v1348 = vmul.f32 %v892, 0.0013020834
          %v1349 = vmul.f32 %v899, 0.0013020834
          %v1350 = vmul.f32 %v906, 0.0013020834
          %v1351 = vmul.f32 %v913, 0.0013020834
          %v1352 = vmul.f32 %v920, 0.0013020834
          %v1353 = vmul.f32 %v927, 0.0013020834
          %v1354 = vmul.f32 %v934, 0.0013020834
          %v1355 = vmul.f32 %v941, 0.0013020834
          %v1356 = vmul.f32 %v948, 0.0013020834
          %v1357 = vmul.f32 %v955, 0.0013020834
          %v1358 = vmul.f32 %v962, 0.0013020834
          %v1359 = vmul.f32 %v969, 0.0013020834
          %v1360 = vmul.f32 %v976, 0.0013020834
          %v1361 = vmul.f32 %v983, 0.0013020834
          %v1362 = vmul.f32 %v990, 0.0013020834
          %v1363 = vmul.f32 %v997, 0.0013020834
          %v1364 = vmul.f32 %v1004, 0.0013020834
          %v1365 = vmul.f32 %v1011, 0.0013020834
          %v1366 = vmul.f32 %v1018, 0.0013020834
          %v1367 = vmul.f32 %v1025, 0.0013020834
          %v1368 = vmul.f32 %v1032, 0.0013020834
          %v1369 = vmul.f32 %v1183, 0.0013020834
          %v1370 = vmul.f32 %v1190, 0.0013020834
          %v1371 = vmul.f32 %v1197, 0.0013020834
          %v1372 = vmul.f32 %v1204, 0.0013020834
          %v1373 = vmul.f32 %v1211, 0.0013020834
          %v1374 = vmul.f32 %v1218, 0.0013020834
          %v1375 = vmul.f32 %v1225, 0.0013020834
          %v1376 = vmul.f32 %v1232, 0.0013020834
          %v1377 = vmul.f32 %v1239, 0.0013020834
          %v1378 = vmul.f32 %v1246, 0.0013020834
          %v1379 = vmul.f32 %v1253, 0.0013020834
          %v1380 = vmul.f32 %v1260, 0.0013020834
          %v1381 = vmul.f32 %v1267, 0.0013020834
          %v1382 = vmul.f32 %v1274, 0.0013020834
          %v1383 = vmul.f32 %v1281, 0.0013020834
          %v1384 = vmul.f32 %v1288, 0.0013020834
          %v1385 = vmul.f32 %v1295, 0.0013020834
          %v1386 = vmul.f32 %v1302, 0.0013020834
          %v1387 = vmul.f32 %v1309, 0.0013020834
          %v1388 = vmul.f32 %v1316, 0.0013020834
          %v1389 = vmul.f32 %v1323, 0.0013020834
          %v1390 = vmul.f32 %v1330, 0.0013020834
          %v1391 = vmul.f32 %v1337, 0.0013020834
          %v1392 = vmul.f32 %v1344, 0.0013020834
          %v1393 = vmul.f32 %v1345, %v1345
          %v1394 = vmul.f32 %v1346, %v1346
          %v1395 = vmul.f32 %v1347, %v1347
          %v1396 = vmul.f32 %v1348, %v1348
          %v1397 = vmul.f32 %v1349, %v1349
          %v1398 = vmul.f32 %v1350, %v1350
          %v1399 = vmul.f32 %v1351, %v1351
          %v1400 = vmul.f32 %v1352, %v1352
          %v1401 = vmul.f32 %v1353, %v1353
          %v1402 = vmul.f32 %v1354, %v1354
          %v1403 = vmul.f32 %v1355, %v1355
          %v1404 = vmul.f32 %v1356, %v1356
          %v1405 = vmul.f32 %v1357, %v1357
          %v1406 = vmul.f32 %v1358, %v1358
          %v1407 = vmul.f32 %v1359, %v1359
          %v1408 = vmul.f32 %v1360, %v1360
          %v1409 = vmul.f32 %v1361, %v1361
          %v1410 = vmul.f32 %v1362, %v1362
          %v1411 = vmul.f32 %v1363, %v1363
          %v1412 = vmul.f32 %v1364, %v1364
          %v1413 = vmul.f32 %v1365, %v1365
          %v1414 = vmul.f32 %v1366, %v1366
          %v1415 = vmul.f32 %v1367, %v1367
          %v1416 = vmul.f32 %v1368, %v1368
          %v1417 = vsub.f32 %v1369, %v1393
          %v1418 = vsub.f32 %v1370, %v1394
          %v1419 = vsub.f32 %v1371, %v1395
          %v1420 = vsub.f32 %v1372, %v1396
          %v1421 = vsub.f32 %v1373, %v1397
          %v1422 = vsub.f32 %v1374, %v1398
          %v1423 = vsub.f32 %v1375, %v1399
          %v1424 = vsub.f32 %v1376, %v1400
          %v1425 = vsub.f32 %v1377, %v1401
          %v1426 = vsub.f32 %v1378, %v1402
          %v1427 = vsub.f32 %v1379, %v1403
          %v1428 = vsub.f32 %v1380, %v1404
          %v1429 = vsub.f32 %v1381, %v1405
          %v1430 = vsub.f32 %v1382, %v1406
          %v1431 = vsub.f32 %v1383, %v1407
          %v1432 = vsub.f32 %v1384, %v1408
          %v1433 = vsub.f32 %v1385, %v1409
          %v1434 = vsub.f32 %v1386, %v1410
          %v1435 = vsub.f32 %v1387, %v1411
          %v1436 = vsub.f32 %v1388, %v1412
          %v1437 = vsub.f32 %v1389, %v1413
          %v1438 = vsub.f32 %v1390, %v1414
          %v1439 = vsub.f32 %v1391, %v1415
          %v1440 = vsub.f32 %v1392, %v1416
          %v1441 = vmax.f32 %v1417, 0.0
          %v1442 = vmax.f32 %v1418, 0.0
          %v1443 = vmax.f32 %v1419, 0.0
          %v1444 = vmax.f32 %v1420, 0.0
          %v1445 = vmax.f32 %v1421, 0.0
          %v1446 = vmax.f32 %v1422, 0.0
          %v1447 = vmax.f32 %v1423, 0.0
          %v1448 = vmax.f32 %v1424, 0.0
          %v1449 = vmax.f32 %v1425, 0.0
          %v1450 = vmax.f32 %v1426, 0.0
          %v1451 = vmax.f32 %v1427, 0.0
          %v1452 = vmax.f32 %v1428, 0.0
          %v1453 = vmax.f32 %v1429, 0.0
          %v1454 = vmax.f32 %v1430, 0.0
          %v1455 = vmax.f32 %v1431, 0.0
          %v1456 = vmax.f32 %v1432, 0.0
          %v1457 = vmax.f32 %v1433, 0.0
          %v1458 = vmax.f32 %v1434, 0.0
          %v1459 = vmax.f32 %v1435, 0.0
          %v1460 = vmax.f32 %v1436, 0.0
          %v1461 = vmax.f32 %v1437, 0.0
          %v1462 = vmax.f32 %v1438, 0.0
          %v1463 = vmax.f32 %v1439, 0.0
          %v1464 = vmax.f32 %v1440, 0.0
          %v1465 = vadd.f32 %v1441, 1e-12
          %v1466 = vadd.f32 %v1442, 1e-12
          %v1467 = vadd.f32 %v1443, 1e-12
          %v1468 = vadd.f32 %v1444, 1e-12
          %v1469 = vadd.f32 %v1445, 1e-12
          %v1470 = vadd.f32 %v1446, 1e-12
          %v1471 = vadd.f32 %v1447, 1e-12
          %v1472 = vadd.f32 %v1448, 1e-12
          %v1473 = vadd.f32 %v1449, 1e-12
          %v1474 = vadd.f32 %v1450, 1e-12
          %v1475 = vadd.f32 %v1451, 1e-12
          %v1476 = vadd.f32 %v1452, 1e-12
          %v1477 = vadd.f32 %v1453, 1e-12
          %v1478 = vadd.f32 %v1454, 1e-12
          %v1479 = vadd.f32 %v1455, 1e-12
          %v1480 = vadd.f32 %v1456, 1e-12
          %v1481 = vadd.f32 %v1457, 1e-12
          %v1482 = vadd.f32 %v1458, 1e-12
          %v1483 = vadd.f32 %v1459, 1e-12
          %v1484 = vadd.f32 %v1460, 1e-12
          %v1485 = vadd.f32 %v1461, 1e-12
          %v1486 = vadd.f32 %v1462, 1e-12
          %v1487 = vadd.f32 %v1463, 1e-12
          %v1488 = vadd.f32 %v1464, 1e-12
          %v1489 = vrsqrt.pop %v1465
          %v1490 = vrsqrt.pop %v1466
          %v1491 = vrsqrt.pop %v1467
          %v1492 = vrsqrt.pop %v1468
          %v1493 = vrsqrt.pop %v1469
          %v1494 = vrsqrt.pop %v1470
          %v1495 = vrsqrt.pop %v1471
          %v1496 = vrsqrt.pop %v1472
          %v1497 = vrsqrt.pop %v1473
          %v1498 = vrsqrt.pop %v1474
          %v1499 = vrsqrt.pop %v1475
          %v1500 = vrsqrt.pop %v1476
          %v1501 = vrsqrt.pop %v1477
          %v1502 = vrsqrt.pop %v1478
          %v1503 = vrsqrt.pop %v1479
          %v1504 = vrsqrt.pop %v1480
          %v1505 = vrsqrt.pop %v1481
          %v1506 = vrsqrt.pop %v1482
          %v1507 = vrsqrt.pop %v1483
          %v1508 = vrsqrt.pop %v1484
          %v1509 = vrsqrt.pop %v1485
          %v1510 = vrsqrt.pop %v1486
          %v1511 = vrsqrt.pop %v1487
          %v1512 = vrsqrt.pop %v1488
          %v1513 = vsub.f32 %v721, %v1345
          %v1514 = vsub.f32 %v722, %v1345
          %v1515 = vsub.f32 %v723, %v1345
          %v1516 = vsub.f32 %v724, %v1345
          %v1517 = vsub.f32 %v725, %v1345
          %v1518 = vsub.f32 %v726, %v1345
          %v1519 = vsub.f32 %v727, %v1346
          %v1520 = vsub.f32 %v728, %v1346
          %v1521 = vsub.f32 %v729, %v1346
          %v1522 = vsub.f32 %v730, %v1346
          %v1523 = vsub.f32 %v731, %v1346
          %v1524 = vsub.f32 %v732, %v1346
          %v1525 = vsub.f32 %v733, %v1347
          %v1526 = vsub.f32 %v734, %v1347
          %v1527 = vsub.f32 %v735, %v1347
          %v1528 = vsub.f32 %v736, %v1347
          %v1529 = vsub.f32 %v737, %v1347
          %v1530 = vsub.f32 %v738, %v1347
          %v1531 = vsub.f32 %v739, %v1348
          %v1532 = vsub.f32 %v740, %v1348
          %v1533 = vsub.f32 %v741, %v1348
          %v1534 = vsub.f32 %v742, %v1348
          %v1535 = vsub.f32 %v743, %v1348
          %v1536 = vsub.f32 %v744, %v1348
          %v1537 = vsub.f32 %v745, %v1349
          %v1538 = vsub.f32 %v746, %v1349
          %v1539 = vsub.f32 %v747, %v1349
          %v1540 = vsub.f32 %v748, %v1349
          %v1541 = vsub.f32 %v749, %v1349
          %v1542 = vsub.f32 %v750, %v1349
          %v1543 = vsub.f32 %v751, %v1350
          %v1544 = vsub.f32 %v752, %v1350
          %v1545 = vsub.f32 %v753, %v1350
          %v1546 = vsub.f32 %v754, %v1350
          %v1547 = vsub.f32 %v755, %v1350
          %v1548 = vsub.f32 %v756, %v1350
          %v1549 = vsub.f32 %v757, %v1351
          %v1550 = vsub.f32 %v758, %v1351
          %v1551 = vsub.f32 %v759, %v1351
          %v1552 = vsub.f32 %v760, %v1351
          %v1553 = vsub.f32 %v761, %v1351
          %v1554 = vsub.f32 %v762, %v1351
          %v1555 = vsub.f32 %v763, %v1352
          %v1556 = vsub.f32 %v764, %v1352
          %v1557 = vsub.f32 %v765, %v1352
          %v1558 = vsub.f32 %v766, %v1352
          %v1559 = vsub.f32 %v767, %v1352
          %v1560 = vsub.f32 %v768, %v1352
          %v1561 = vsub.f32 %v769, %v1353
          %v1562 = vsub.f32 %v770, %v1353
          %v1563 = vsub.f32 %v771, %v1353
          %v1564 = vsub.f32 %v772, %v1353
          %v1565 = vsub.f32 %v773, %v1353
          %v1566 = vsub.f32 %v774, %v1353
          %v1567 = vsub.f32 %v775, %v1354
          %v1568 = vsub.f32 %v776, %v1354
          %v1569 = vsub.f32 %v777, %v1354
          %v1570 = vsub.f32 %v778, %v1354
          %v1571 = vsub.f32 %v779, %v1354
          %v1572 = vsub.f32 %v780, %v1354
          %v1573 = vsub.f32 %v781, %v1355
          %v1574 = vsub.f32 %v782, %v1355
          %v1575 = vsub.f32 %v783, %v1355
          %v1576 = vsub.f32 %v784, %v1355
          %v1577 = vsub.f32 %v785, %v1355
          %v1578 = vsub.f32 %v786, %v1355
          %v1579 = vsub.f32 %v787, %v1356
          %v1580 = vsub.f32 %v788, %v1356
          %v1581 = vsub.f32 %v789, %v1356
          %v1582 = vsub.f32 %v790, %v1356
          %v1583 = vsub.f32 %v791, %v1356
          %v1584 = vsub.f32 %v792, %v1356
          %v1585 = vsub.f32 %v793, %v1357
          %v1586 = vsub.f32 %v794, %v1357
          %v1587 = vsub.f32 %v795, %v1357
          %v1588 = vsub.f32 %v796, %v1357
          %v1589 = vsub.f32 %v797, %v1357
          %v1590 = vsub.f32 %v798, %v1357
          %v1591 = vsub.f32 %v799, %v1358
          %v1592 = vsub.f32 %v800, %v1358
          %v1593 = vsub.f32 %v801, %v1358
          %v1594 = vsub.f32 %v802, %v1358
          %v1595 = vsub.f32 %v803, %v1358
          %v1596 = vsub.f32 %v804, %v1358
          %v1597 = vsub.f32 %v805, %v1359
          %v1598 = vsub.f32 %v806, %v1359
          %v1599 = vsub.f32 %v807, %v1359
          %v1600 = vsub.f32 %v808, %v1359
          %v1601 = vsub.f32 %v809, %v1359
          %v1602 = vsub.f32 %v810, %v1359
          %v1603 = vsub.f32 %v811, %v1360
          %v1604 = vsub.f32 %v812, %v1360
          %v1605 = vsub.f32 %v813, %v1360
          %v1606 = vsub.f32 %v814, %v1360
          %v1607 = vsub.f32 %v815, %v1360
          %v1608 = vsub.f32 %v816, %v1360
          %v1609 = vsub.f32 %v817, %v1361
          %v1610 = vsub.f32 %v818, %v1361
          %v1611 = vsub.f32 %v819, %v1361
          %v1612 = vsub.f32 %v820, %v1361
          %v1613 = vsub.f32 %v821, %v1361
          %v1614 = vsub.f32 %v822, %v1361
          %v1615 = vsub.f32 %v823, %v1362
          %v1616 = vsub.f32 %v824, %v1362
          %v1617 = vsub.f32 %v825, %v1362
          %v1618 = vsub.f32 %v826, %v1362
          %v1619 = vsub.f32 %v827, %v1362
          %v1620 = vsub.f32 %v828, %v1362
          %v1621 = vsub.f32 %v829, %v1363
          %v1622 = vsub.f32 %v830, %v1363
          %v1623 = vsub.f32 %v831, %v1363
          %v1624 = vsub.f32 %v832, %v1363
          %v1625 = vsub.f32 %v833, %v1363
          %v1626 = vsub.f32 %v834, %v1363
          %v1627 = vsub.f32 %v835, %v1364
          %v1628 = vsub.f32 %v836, %v1364
          %v1629 = vsub.f32 %v837, %v1364
          %v1630 = vsub.f32 %v838, %v1364
          %v1631 = vsub.f32 %v839, %v1364
          %v1632 = vsub.f32 %v840, %v1364
          %v1633 = vsub.f32 %v841, %v1365
          %v1634 = vsub.f32 %v842, %v1365
          %v1635 = vsub.f32 %v843, %v1365
          %v1636 = vsub.f32 %v844, %v1365
          %v1637 = vsub.f32 %v845, %v1365
          %v1638 = vsub.f32 %v846, %v1365
          %v1639 = vsub.f32 %v847, %v1366
          %v1640 = vsub.f32 %v848, %v1366
          %v1641 = vsub.f32 %v849, %v1366
          %v1642 = vsub.f32 %v850, %v1366
          %v1643 = vsub.f32 %v851, %v1366
          %v1644 = vsub.f32 %v852, %v1366
          %v1645 = vsub.f32 %v853, %v1367
          %v1646 = vsub.f32 %v854, %v1367
          %v1647 = vsub.f32 %v855, %v1367
          %v1648 = vsub.f32 %v856, %v1367
          %v1649 = vsub.f32 %v857, %v1367
          %v1650 = vsub.f32 %v858, %v1367
          %v1651 = vsub.f32 %v859, %v1368
          %v1652 = vsub.f32 %v860, %v1368
          %v1653 = vsub.f32 %v861, %v1368
          %v1654 = vsub.f32 %v862, %v1368
          %v1655 = vsub.f32 %v863, %v1368
          %v1656 = vsub.f32 %v864, %v1368
          %v1657 = vmul.f32 %v1513, %v1489
          %v1658 = vmul.f32 %v1514, %v1489
          %v1659 = vmul.f32 %v1515, %v1489
          %v1660 = vmul.f32 %v1516, %v1489
          %v1661 = vmul.f32 %v1517, %v1489
          %v1662 = vmul.f32 %v1518, %v1489
          %v1663 = vmul.f32 %v1519, %v1490
          %v1664 = vmul.f32 %v1520, %v1490
          %v1665 = vmul.f32 %v1521, %v1490
          %v1666 = vmul.f32 %v1522, %v1490
          %v1667 = vmul.f32 %v1523, %v1490
          %v1668 = vmul.f32 %v1524, %v1490
          %v1669 = vmul.f32 %v1525, %v1491
          %v1670 = vmul.f32 %v1526, %v1491
          %v1671 = vmul.f32 %v1527, %v1491
          %v1672 = vmul.f32 %v1528, %v1491
          %v1673 = vmul.f32 %v1529, %v1491
          %v1674 = vmul.f32 %v1530, %v1491
          %v1675 = vmul.f32 %v1531, %v1492
          %v1676 = vmul.f32 %v1532, %v1492
          %v1677 = vmul.f32 %v1533, %v1492
          %v1678 = vmul.f32 %v1534, %v1492
          %v1679 = vmul.f32 %v1535, %v1492
          %v1680 = vmul.f32 %v1536, %v1492
          %v1681 = vmul.f32 %v1537, %v1493
          %v1682 = vmul.f32 %v1538, %v1493
          %v1683 = vmul.f32 %v1539, %v1493
          %v1684 = vmul.f32 %v1540, %v1493
          %v1685 = vmul.f32 %v1541, %v1493
          %v1686 = vmul.f32 %v1542, %v1493
          %v1687 = vmul.f32 %v1543, %v1494
          %v1688 = vmul.f32 %v1544, %v1494
          %v1689 = vmul.f32 %v1545, %v1494
          %v1690 = vmul.f32 %v1546, %v1494
          %v1691 = vmul.f32 %v1547, %v1494
          %v1692 = vmul.f32 %v1548, %v1494
          %v1693 = vmul.f32 %v1549, %v1495
          %v1694 = vmul.f32 %v1550, %v1495
          %v1695 = vmul.f32 %v1551, %v1495
          %v1696 = vmul.f32 %v1552, %v1495
          %v1697 = vmul.f32 %v1553, %v1495
          %v1698 = vmul.f32 %v1554, %v1495
          %v1699 = vmul.f32 %v1555, %v1496
          %v1700 = vmul.f32 %v1556, %v1496
          %v1701 = vmul.f32 %v1557, %v1496
          %v1702 = vmul.f32 %v1558, %v1496
          %v1703 = vmul.f32 %v1559, %v1496
          %v1704 = vmul.f32 %v1560, %v1496
          %v1705 = vmul.f32 %v1561, %v1497
          %v1706 = vmul.f32 %v1562, %v1497
          %v1707 = vmul.f32 %v1563, %v1497
          %v1708 = vmul.f32 %v1564, %v1497
          %v1709 = vmul.f32 %v1565, %v1497
          %v1710 = vmul.f32 %v1566, %v1497
          %v1711 = vmul.f32 %v1567, %v1498
          %v1712 = vmul.f32 %v1568, %v1498
          %v1713 = vmul.f32 %v1569, %v1498
          %v1714 = vmul.f32 %v1570, %v1498
          %v1715 = vmul.f32 %v1571, %v1498
          %v1716 = vmul.f32 %v1572, %v1498
          %v1717 = vmul.f32 %v1573, %v1499
          %v1718 = vmul.f32 %v1574, %v1499
          %v1719 = vmul.f32 %v1575, %v1499
          %v1720 = vmul.f32 %v1576, %v1499
          %v1721 = vmul.f32 %v1577, %v1499
          %v1722 = vmul.f32 %v1578, %v1499
          %v1723 = vmul.f32 %v1579, %v1500
          %v1724 = vmul.f32 %v1580, %v1500
          %v1725 = vmul.f32 %v1581, %v1500
          %v1726 = vmul.f32 %v1582, %v1500
          %v1727 = vmul.f32 %v1583, %v1500
          %v1728 = vmul.f32 %v1584, %v1500
          %v1729 = vmul.f32 %v1585, %v1501
          %v1730 = vmul.f32 %v1586, %v1501
          %v1731 = vmul.f32 %v1587, %v1501
          %v1732 = vmul.f32 %v1588, %v1501
          %v1733 = vmul.f32 %v1589, %v1501
          %v1734 = vmul.f32 %v1590, %v1501
          %v1735 = vmul.f32 %v1591, %v1502
          %v1736 = vmul.f32 %v1592, %v1502
          %v1737 = vmul.f32 %v1593, %v1502
          %v1738 = vmul.f32 %v1594, %v1502
          %v1739 = vmul.f32 %v1595, %v1502
          %v1740 = vmul.f32 %v1596, %v1502
          %v1741 = vmul.f32 %v1597, %v1503
          %v1742 = vmul.f32 %v1598, %v1503
          %v1743 = vmul.f32 %v1599, %v1503
          %v1744 = vmul.f32 %v1600, %v1503
          %v1745 = vmul.f32 %v1601, %v1503
          %v1746 = vmul.f32 %v1602, %v1503
          %v1747 = vmul.f32 %v1603, %v1504
          %v1748 = vmul.f32 %v1604, %v1504
          %v1749 = vmul.f32 %v1605, %v1504
          %v1750 = vmul.f32 %v1606, %v1504
          %v1751 = vmul.f32 %v1607, %v1504
          %v1752 = vmul.f32 %v1608, %v1504
          %v1753 = vmul.f32 %v1609, %v1505
          %v1754 = vmul.f32 %v1610, %v1505
          %v1755 = vmul.f32 %v1611, %v1505
          %v1756 = vmul.f32 %v1612, %v1505
          %v1757 = vmul.f32 %v1613, %v1505
          %v1758 = vmul.f32 %v1614, %v1505
          %v1759 = vmul.f32 %v1615, %v1506
          %v1760 = vmul.f32 %v1616, %v1506
          %v1761 = vmul.f32 %v1617, %v1506
          %v1762 = vmul.f32 %v1618, %v1506
          %v1763 = vmul.f32 %v1619, %v1506
          %v1764 = vmul.f32 %v1620, %v1506
          %v1765 = vmul.f32 %v1621, %v1507
          %v1766 = vmul.f32 %v1622, %v1507
          %v1767 = vmul.f32 %v1623, %v1507
          %v1768 = vmul.f32 %v1624, %v1507
          %v1769 = vmul.f32 %v1625, %v1507
          %v1770 = vmul.f32 %v1626, %v1507
          %v1771 = vmul.f32 %v1627, %v1508
          %v1772 = vmul.f32 %v1628, %v1508
          %v1773 = vmul.f32 %v1629, %v1508
          %v1774 = vmul.f32 %v1630, %v1508
          %v1775 = vmul.f32 %v1631, %v1508
          %v1776 = vmul.f32 %v1632, %v1508
          %v1777 = vmul.f32 %v1633, %v1509
          %v1778 = vmul.f32 %v1634, %v1509
          %v1779 = vmul.f32 %v1635, %v1509
          %v1780 = vmul.f32 %v1636, %v1509
          %v1781 = vmul.f32 %v1637, %v1509
          %v1782 = vmul.f32 %v1638, %v1509
          %v1783 = vmul.f32 %v1639, %v1510
          %v1784 = vmul.f32 %v1640, %v1510
          %v1785 = vmul.f32 %v1641, %v1510
          %v1786 = vmul.f32 %v1642, %v1510
          %v1787 = vmul.f32 %v1643, %v1510
          %v1788 = vmul.f32 %v1644, %v1510
          %v1789 = vmul.f32 %v1645, %v1511
          %v1790 = vmul.f32 %v1646, %v1511
          %v1791 = vmul.f32 %v1647, %v1511
          %v1792 = vmul.f32 %v1648, %v1511
          %v1793 = vmul.f32 %v1649, %v1511
          %v1794 = vmul.f32 %v1650, %v1511
          %v1795 = vmul.f32 %v1651, %v1512
          %v1796 = vmul.f32 %v1652, %v1512
          %v1797 = vmul.f32 %v1653, %v1512
          %v1798 = vmul.f32 %v1654, %v1512
          %v1799 = vmul.f32 %v1655, %v1512
          %v1800 = vmul.f32 %v1656, %v1512
          %v1801 = vld [vmem:[#allocation8] sm:$0x3f]
          %v1803 = vlaneseq
          %v1804 = vshrl.u32 %v1803, 7
          %v1805 = vsub.s32 0, %v1804
          %v1806 = vrot.slane %v1801, %v1805
          %v1807 = vlaneseq
          %v1808 = vshrl.u32 %v1807, 7
          %v1809 = vsub.s32 1, %v1808
          %v1810 = vrot.slane %v1801, %v1809
          %v1811 = vlaneseq
          %v1812 = vshrl.u32 %v1811, 7
          %v1813 = vsub.s32 2, %v1812
          %v1814 = vrot.slane %v1801, %v1813
          %v1815 = vlaneseq
          %v1816 = vshrl.u32 %v1815, 7
          %v1817 = vsub.s32 3, %v1816
          %v1818 = vrot.slane %v1801, %v1817
          %v1819 = vlaneseq
          %v1820 = vshrl.u32 %v1819, 7
          %v1821 = vsub.s32 4, %v1820
          %v1822 = vrot.slane %v1801, %v1821
          %v1823 = vlaneseq
          %v1824 = vshrl.u32 %v1823, 7
          %v1825 = vsub.s32 5, %v1824
          %v1826 = vrot.slane %v1801, %v1825
          %v1833 = vmul.f32 %v1657, %v1806
          %v1834 = vmul.f32 %v1658, %v1810
          %v1835 = vmul.f32 %v1659, %v1814
          %v1836 = vmul.f32 %v1660, %v1818
          %v1837 = vmul.f32 %v1661, %v1822
          %v1838 = vmul.f32 %v1662, %v1826
          %v1839 = vmul.f32 %v1663, %v1806
          %v1840 = vmul.f32 %v1664, %v1810
          %v1841 = vmul.f32 %v1665, %v1814
          %v1842 = vmul.f32 %v1666, %v1818
          %v1843 = vmul.f32 %v1667, %v1822
          %v1844 = vmul.f32 %v1668, %v1826
          %v1845 = vmul.f32 %v1669, %v1806
          %v1846 = vmul.f32 %v1670, %v1810
          %v1847 = vmul.f32 %v1671, %v1814
          %v1848 = vmul.f32 %v1672, %v1818
          %v1849 = vmul.f32 %v1673, %v1822
          %v1850 = vmul.f32 %v1674, %v1826
          %v1851 = vmul.f32 %v1675, %v1806
          %v1852 = vmul.f32 %v1676, %v1810
          %v1853 = vmul.f32 %v1677, %v1814
          %v1854 = vmul.f32 %v1678, %v1818
          %v1855 = vmul.f32 %v1679, %v1822
          %v1856 = vmul.f32 %v1680, %v1826
          %v1857 = vmul.f32 %v1681, %v1806
          %v1858 = vmul.f32 %v1682, %v1810
          %v1859 = vmul.f32 %v1683, %v1814
          %v1860 = vmul.f32 %v1684, %v1818
          %v1861 = vmul.f32 %v1685, %v1822
          %v1862 = vmul.f32 %v1686, %v1826
          %v1863 = vmul.f32 %v1687, %v1806
          %v1864 = vmul.f32 %v1688, %v1810
          %v1865 = vmul.f32 %v1689, %v1814
          %v1866 = vmul.f32 %v1690, %v1818
          %v1867 = vmul.f32 %v1691, %v1822
          %v1868 = vmul.f32 %v1692, %v1826
          %v1869 = vmul.f32 %v1693, %v1806
          %v1870 = vmul.f32 %v1694, %v1810
          %v1871 = vmul.f32 %v1695, %v1814
          %v1872 = vmul.f32 %v1696, %v1818
          %v1873 = vmul.f32 %v1697, %v1822
          %v1874 = vmul.f32 %v1698, %v1826
          %v1875 = vmul.f32 %v1699, %v1806
          %v1876 = vmul.f32 %v1700, %v1810
          %v1877 = vmul.f32 %v1701, %v1814
          %v1878 = vmul.f32 %v1702, %v1818
          %v1879 = vmul.f32 %v1703, %v1822
          %v1880 = vmul.f32 %v1704, %v1826
          %v1881 = vmul.f32 %v1705, %v1806
          %v1882 = vmul.f32 %v1706, %v1810
          %v1883 = vmul.f32 %v1707, %v1814
          %v1884 = vmul.f32 %v1708, %v1818
          %v1885 = vmul.f32 %v1709, %v1822
          %v1886 = vmul.f32 %v1710, %v1826
          %v1887 = vmul.f32 %v1711, %v1806
          %v1888 = vmul.f32 %v1712, %v1810
          %v1889 = vmul.f32 %v1713, %v1814
          %v1890 = vmul.f32 %v1714, %v1818
          %v1891 = vmul.f32 %v1715, %v1822
          %v1892 = vmul.f32 %v1716, %v1826
          %v1893 = vmul.f32 %v1717, %v1806
          %v1894 = vmul.f32 %v1718, %v1810
          %v1895 = vmul.f32 %v1719, %v1814
          %v1896 = vmul.f32 %v1720, %v1818
          %v1897 = vmul.f32 %v1721, %v1822
          %v1898 = vmul.f32 %v1722, %v1826
          %v1899 = vmul.f32 %v1723, %v1806
          %v1900 = vmul.f32 %v1724, %v1810
          %v1901 = vmul.f32 %v1725, %v1814
          %v1902 = vmul.f32 %v1726, %v1818
          %v1903 = vmul.f32 %v1727, %v1822
          %v1904 = vmul.f32 %v1728, %v1826
          %v1905 = vmul.f32 %v1729, %v1806
          %v1906 = vmul.f32 %v1730, %v1810
          %v1907 = vmul.f32 %v1731, %v1814
          %v1908 = vmul.f32 %v1732, %v1818
          %v1909 = vmul.f32 %v1733, %v1822
          %v1910 = vmul.f32 %v1734, %v1826
          %v1911 = vmul.f32 %v1735, %v1806
          %v1912 = vmul.f32 %v1736, %v1810
          %v1913 = vmul.f32 %v1737, %v1814
          %v1914 = vmul.f32 %v1738, %v1818
          %v1915 = vmul.f32 %v1739, %v1822
          %v1916 = vmul.f32 %v1740, %v1826
          %v1917 = vmul.f32 %v1741, %v1806
          %v1918 = vmul.f32 %v1742, %v1810
          %v1919 = vmul.f32 %v1743, %v1814
          %v1920 = vmul.f32 %v1744, %v1818
          %v1921 = vmul.f32 %v1745, %v1822
          %v1922 = vmul.f32 %v1746, %v1826
          %v1923 = vmul.f32 %v1747, %v1806
          %v1924 = vmul.f32 %v1748, %v1810
          %v1925 = vmul.f32 %v1749, %v1814
          %v1926 = vmul.f32 %v1750, %v1818
          %v1927 = vmul.f32 %v1751, %v1822
          %v1928 = vmul.f32 %v1752, %v1826
          %v1929 = vmul.f32 %v1753, %v1806
          %v1930 = vmul.f32 %v1754, %v1810
          %v1931 = vmul.f32 %v1755, %v1814
          %v1932 = vmul.f32 %v1756, %v1818
          %v1933 = vmul.f32 %v1757, %v1822
          %v1934 = vmul.f32 %v1758, %v1826
          %v1935 = vmul.f32 %v1759, %v1806
          %v1936 = vmul.f32 %v1760, %v1810
          %v1937 = vmul.f32 %v1761, %v1814
          %v1938 = vmul.f32 %v1762, %v1818
          %v1939 = vmul.f32 %v1763, %v1822
          %v1940 = vmul.f32 %v1764, %v1826
          %v1941 = vmul.f32 %v1765, %v1806
          %v1942 = vmul.f32 %v1766, %v1810
          %v1943 = vmul.f32 %v1767, %v1814
          %v1944 = vmul.f32 %v1768, %v1818
          %v1945 = vmul.f32 %v1769, %v1822
          %v1946 = vmul.f32 %v1770, %v1826
          %v1947 = vmul.f32 %v1771, %v1806
          %v1948 = vmul.f32 %v1772, %v1810
          %v1949 = vmul.f32 %v1773, %v1814
          %v1950 = vmul.f32 %v1774, %v1818
          %v1951 = vmul.f32 %v1775, %v1822
          %v1952 = vmul.f32 %v1776, %v1826
          %v1953 = vmul.f32 %v1777, %v1806
          %v1954 = vmul.f32 %v1778, %v1810
          %v1955 = vmul.f32 %v1779, %v1814
          %v1956 = vmul.f32 %v1780, %v1818
          %v1957 = vmul.f32 %v1781, %v1822
          %v1958 = vmul.f32 %v1782, %v1826
          %v1959 = vmul.f32 %v1783, %v1806
          %v1960 = vmul.f32 %v1784, %v1810
          %v1961 = vmul.f32 %v1785, %v1814
          %v1962 = vmul.f32 %v1786, %v1818
          %v1963 = vmul.f32 %v1787, %v1822
          %v1964 = vmul.f32 %v1788, %v1826
          %v1965 = vmul.f32 %v1789, %v1806
          %v1966 = vmul.f32 %v1790, %v1810
          %v1967 = vmul.f32 %v1791, %v1814
          %v1968 = vmul.f32 %v1792, %v1818
          %v1969 = vmul.f32 %v1793, %v1822
          %v1970 = vmul.f32 %v1794, %v1826
          %v1971 = vmul.f32 %v1795, %v1806
          %v1972 = vmul.f32 %v1796, %v1810
          %v1973 = vmul.f32 %v1797, %v1814
          %v1974 = vmul.f32 %v1798, %v1818
          %v1975 = vmul.f32 %v1799, %v1822
          %v1976 = vmul.f32 %v1800, %v1826
          %v1977 = vld [vmem:[#allocation9] sm:$0x3f]
          %v1979 = vlaneseq
          %v1980 = vshrl.u32 %v1979, 7
          %v1981 = vsub.s32 0, %v1980
          %v1982 = vrot.slane %v1977, %v1981
          %v1983 = vlaneseq
          %v1984 = vshrl.u32 %v1983, 7
          %v1985 = vsub.s32 1, %v1984
          %v1986 = vrot.slane %v1977, %v1985
          %v1987 = vlaneseq
          %v1988 = vshrl.u32 %v1987, 7
          %v1989 = vsub.s32 2, %v1988
          %v1990 = vrot.slane %v1977, %v1989
          %v1991 = vlaneseq
          %v1992 = vshrl.u32 %v1991, 7
          %v1993 = vsub.s32 3, %v1992
          %v1994 = vrot.slane %v1977, %v1993
          %v1995 = vlaneseq
          %v1996 = vshrl.u32 %v1995, 7
          %v1997 = vsub.s32 4, %v1996
          %v1998 = vrot.slane %v1977, %v1997
          %v1999 = vlaneseq
          %v2000 = vshrl.u32 %v1999, 7
          %v2001 = vsub.s32 5, %v2000
          %v2002 = vrot.slane %v1977, %v2001
          %v2009 = vadd.f32 %v1833, %v1982
          %v2010 = vadd.f32 %v1834, %v1986
          %v2011 = vadd.f32 %v1835, %v1990
          %v2012 = vadd.f32 %v1836, %v1994
          %v2013 = vadd.f32 %v1837, %v1998
          %v2014 = vadd.f32 %v1838, %v2002
          %v2015 = vadd.f32 %v1839, %v1982
          %v2016 = vadd.f32 %v1840, %v1986
          %v2017 = vadd.f32 %v1841, %v1990
          %v2018 = vadd.f32 %v1842, %v1994
          %v2019 = vadd.f32 %v1843, %v1998
          %v2020 = vadd.f32 %v1844, %v2002
          %v2021 = vadd.f32 %v1845, %v1982
          %v2022 = vadd.f32 %v1846, %v1986
          %v2023 = vadd.f32 %v1847, %v1990
          %v2024 = vadd.f32 %v1848, %v1994
          %v2025 = vadd.f32 %v1849, %v1998
          %v2026 = vadd.f32 %v1850, %v2002
          %v2027 = vadd.f32 %v1851, %v1982
          %v2028 = vadd.f32 %v1852, %v1986
          %v2029 = vadd.f32 %v1853, %v1990
          %v2030 = vadd.f32 %v1854, %v1994
          %v2031 = vadd.f32 %v1855, %v1998
          %v2032 = vadd.f32 %v1856, %v2002
          %v2033 = vadd.f32 %v1857, %v1982
          %v2034 = vadd.f32 %v1858, %v1986
          %v2035 = vadd.f32 %v1859, %v1990
          %v2036 = vadd.f32 %v1860, %v1994
          %v2037 = vadd.f32 %v1861, %v1998
          %v2038 = vadd.f32 %v1862, %v2002
          %v2039 = vadd.f32 %v1863, %v1982
          %v2040 = vadd.f32 %v1864, %v1986
          %v2041 = vadd.f32 %v1865, %v1990
          %v2042 = vadd.f32 %v1866, %v1994
          %v2043 = vadd.f32 %v1867, %v1998
          %v2044 = vadd.f32 %v1868, %v2002
          %v2045 = vadd.f32 %v1869, %v1982
          %v2046 = vadd.f32 %v1870, %v1986
          %v2047 = vadd.f32 %v1871, %v1990
          %v2048 = vadd.f32 %v1872, %v1994
          %v2049 = vadd.f32 %v1873, %v1998
          %v2050 = vadd.f32 %v1874, %v2002
          %v2051 = vadd.f32 %v1875, %v1982
          %v2052 = vadd.f32 %v1876, %v1986
          %v2053 = vadd.f32 %v1877, %v1990
          %v2054 = vadd.f32 %v1878, %v1994
          %v2055 = vadd.f32 %v1879, %v1998
          %v2056 = vadd.f32 %v1880, %v2002
          %v2057 = vadd.f32 %v1881, %v1982
          %v2058 = vadd.f32 %v1882, %v1986
          %v2059 = vadd.f32 %v1883, %v1990
          %v2060 = vadd.f32 %v1884, %v1994
          %v2061 = vadd.f32 %v1885, %v1998
          %v2062 = vadd.f32 %v1886, %v2002
          %v2063 = vadd.f32 %v1887, %v1982
          %v2064 = vadd.f32 %v1888, %v1986
          %v2065 = vadd.f32 %v1889, %v1990
          %v2066 = vadd.f32 %v1890, %v1994
          %v2067 = vadd.f32 %v1891, %v1998
          %v2068 = vadd.f32 %v1892, %v2002
          %v2069 = vadd.f32 %v1893, %v1982
          %v2070 = vadd.f32 %v1894, %v1986
          %v2071 = vadd.f32 %v1895, %v1990
          %v2072 = vadd.f32 %v1896, %v1994
          %v2073 = vadd.f32 %v1897, %v1998
          %v2074 = vadd.f32 %v1898, %v2002
          %v2075 = vadd.f32 %v1899, %v1982
          %v2076 = vadd.f32 %v1900, %v1986
          %v2077 = vadd.f32 %v1901, %v1990
          %v2078 = vadd.f32 %v1902, %v1994
          %v2079 = vadd.f32 %v1903, %v1998
          %v2080 = vadd.f32 %v1904, %v2002
          %v2081 = vadd.f32 %v1905, %v1982
          %v2082 = vadd.f32 %v1906, %v1986
          %v2083 = vadd.f32 %v1907, %v1990
          %v2084 = vadd.f32 %v1908, %v1994
          %v2085 = vadd.f32 %v1909, %v1998
          %v2086 = vadd.f32 %v1910, %v2002
          %v2087 = vadd.f32 %v1911, %v1982
          %v2088 = vadd.f32 %v1912, %v1986
          %v2089 = vadd.f32 %v1913, %v1990
          %v2090 = vadd.f32 %v1914, %v1994
          %v2091 = vadd.f32 %v1915, %v1998
          %v2092 = vadd.f32 %v1916, %v2002
          %v2093 = vadd.f32 %v1917, %v1982
          %v2094 = vadd.f32 %v1918, %v1986
          %v2095 = vadd.f32 %v1919, %v1990
          %v2096 = vadd.f32 %v1920, %v1994
          %v2097 = vadd.f32 %v1921, %v1998
          %v2098 = vadd.f32 %v1922, %v2002
          %v2099 = vadd.f32 %v1923, %v1982
          %v2100 = vadd.f32 %v1924, %v1986
          %v2101 = vadd.f32 %v1925, %v1990
          %v2102 = vadd.f32 %v1926, %v1994
          %v2103 = vadd.f32 %v1927, %v1998
          %v2104 = vadd.f32 %v1928, %v2002
          %v2105 = vadd.f32 %v1929, %v1982
          %v2106 = vadd.f32 %v1930, %v1986
          %v2107 = vadd.f32 %v1931, %v1990
          %v2108 = vadd.f32 %v1932, %v1994
          %v2109 = vadd.f32 %v1933, %v1998
          %v2110 = vadd.f32 %v1934, %v2002
          %v2111 = vadd.f32 %v1935, %v1982
          %v2112 = vadd.f32 %v1936, %v1986
          %v2113 = vadd.f32 %v1937, %v1990
          %v2114 = vadd.f32 %v1938, %v1994
          %v2115 = vadd.f32 %v1939, %v1998
          %v2116 = vadd.f32 %v1940, %v2002
          %v2117 = vadd.f32 %v1941, %v1982
          %v2118 = vadd.f32 %v1942, %v1986
          %v2119 = vadd.f32 %v1943, %v1990
          %v2120 = vadd.f32 %v1944, %v1994
          %v2121 = vadd.f32 %v1945, %v1998
          %v2122 = vadd.f32 %v1946, %v2002
          %v2123 = vadd.f32 %v1947, %v1982
          %v2124 = vadd.f32 %v1948, %v1986
          %v2125 = vadd.f32 %v1949, %v1990
          %v2126 = vadd.f32 %v1950, %v1994
          %v2127 = vadd.f32 %v1951, %v1998
          %v2128 = vadd.f32 %v1952, %v2002
          %v2129 = vadd.f32 %v1953, %v1982
          %v2130 = vadd.f32 %v1954, %v1986
          %v2131 = vadd.f32 %v1955, %v1990
          %v2132 = vadd.f32 %v1956, %v1994
          %v2133 = vadd.f32 %v1957, %v1998
          %v2134 = vadd.f32 %v1958, %v2002
          %v2135 = vadd.f32 %v1959, %v1982
          %v2136 = vadd.f32 %v1960, %v1986
          %v2137 = vadd.f32 %v1961, %v1990
          %v2138 = vadd.f32 %v1962, %v1994
          %v2139 = vadd.f32 %v1963, %v1998
          %v2140 = vadd.f32 %v1964, %v2002
          %v2141 = vadd.f32 %v1965, %v1982
          %v2142 = vadd.f32 %v1966, %v1986
          %v2143 = vadd.f32 %v1967, %v1990
          %v2144 = vadd.f32 %v1968, %v1994
          %v2145 = vadd.f32 %v1969, %v1998
          %v2146 = vadd.f32 %v1970, %v2002
          %v2147 = vadd.f32 %v1971, %v1982
          %v2148 = vadd.f32 %v1972, %v1986
          %v2149 = vadd.f32 %v1973, %v1990
          %v2150 = vadd.f32 %v1974, %v1994
          %v2151 = vadd.f32 %v1975, %v1998
          %v2152 = vadd.f32 %v1976, %v2002
          %v2153 = vpack.c.bf16 %v2015, %v2009
          %v2154 = vpack.c.bf16 %v2016, %v2010
          %v2155 = vpack.c.bf16 %v2017, %v2011
          %v2156 = vpack.c.bf16 %v2018, %v2012
          %v2157 = vpack.c.bf16 %v2019, %v2013
          %v2158 = vpack.c.bf16 %v2020, %v2014
          %v2159 = vpack.c.bf16 %v2027, %v2021
          %v2160 = vpack.c.bf16 %v2028, %v2022
          %v2161 = vpack.c.bf16 %v2029, %v2023
          %v2162 = vpack.c.bf16 %v2030, %v2024
          %v2163 = vpack.c.bf16 %v2031, %v2025
          %v2164 = vpack.c.bf16 %v2032, %v2026
          %v2165 = vpack.c.bf16 %v2039, %v2033
          %v2166 = vpack.c.bf16 %v2040, %v2034
          %v2167 = vpack.c.bf16 %v2041, %v2035
          %v2168 = vpack.c.bf16 %v2042, %v2036
          %v2169 = vpack.c.bf16 %v2043, %v2037
          %v2170 = vpack.c.bf16 %v2044, %v2038
          %v2171 = vpack.c.bf16 %v2051, %v2045
          %v2172 = vpack.c.bf16 %v2052, %v2046
          %v2173 = vpack.c.bf16 %v2053, %v2047
          %v2174 = vpack.c.bf16 %v2054, %v2048
          %v2175 = vpack.c.bf16 %v2055, %v2049
          %v2176 = vpack.c.bf16 %v2056, %v2050
          %v2177 = vpack.c.bf16 %v2063, %v2057
          %v2178 = vpack.c.bf16 %v2064, %v2058
          %v2179 = vpack.c.bf16 %v2065, %v2059
          %v2180 = vpack.c.bf16 %v2066, %v2060
          %v2181 = vpack.c.bf16 %v2067, %v2061
          %v2182 = vpack.c.bf16 %v2068, %v2062
          %v2183 = vpack.c.bf16 %v2075, %v2069
          %v2184 = vpack.c.bf16 %v2076, %v2070
          %v2185 = vpack.c.bf16 %v2077, %v2071
          %v2186 = vpack.c.bf16 %v2078, %v2072
          %v2187 = vpack.c.bf16 %v2079, %v2073
          %v2188 = vpack.c.bf16 %v2080, %v2074
          %v2189 = vpack.c.bf16 %v2087, %v2081
          %v2190 = vpack.c.bf16 %v2088, %v2082
          %v2191 = vpack.c.bf16 %v2089, %v2083
          %v2192 = vpack.c.bf16 %v2090, %v2084
          %v2193 = vpack.c.bf16 %v2091, %v2085
          %v2194 = vpack.c.bf16 %v2092, %v2086
          %v2195 = vpack.c.bf16 %v2099, %v2093
          %v2196 = vpack.c.bf16 %v2100, %v2094
          %v2197 = vpack.c.bf16 %v2101, %v2095
          %v2198 = vpack.c.bf16 %v2102, %v2096
          %v2199 = vpack.c.bf16 %v2103, %v2097
          %v2200 = vpack.c.bf16 %v2104, %v2098
          %v2201 = vpack.c.bf16 %v2111, %v2105
          %v2202 = vpack.c.bf16 %v2112, %v2106
          %v2203 = vpack.c.bf16 %v2113, %v2107
          %v2204 = vpack.c.bf16 %v2114, %v2108
          %v2205 = vpack.c.bf16 %v2115, %v2109
          %v2206 = vpack.c.bf16 %v2116, %v2110
          %v2207 = vpack.c.bf16 %v2123, %v2117
          %v2208 = vpack.c.bf16 %v2124, %v2118
          %v2209 = vpack.c.bf16 %v2125, %v2119
          %v2210 = vpack.c.bf16 %v2126, %v2120
          %v2211 = vpack.c.bf16 %v2127, %v2121
          %v2212 = vpack.c.bf16 %v2128, %v2122
          %v2213 = vpack.c.bf16 %v2135, %v2129
          %v2214 = vpack.c.bf16 %v2136, %v2130
          %v2215 = vpack.c.bf16 %v2137, %v2131
          %v2216 = vpack.c.bf16 %v2138, %v2132
          %v2217 = vpack.c.bf16 %v2139, %v2133
          %v2218 = vpack.c.bf16 %v2140, %v2134
          %v2219 = vpack.c.bf16 %v2147, %v2141
          %v2220 = vpack.c.bf16 %v2148, %v2142
          %v2221 = vpack.c.bf16 %v2149, %v2143
          %v2222 = vpack.c.bf16 %v2150, %v2144
          %v2223 = vpack.c.bf16 %v2151, %v2145
          %v2224 = vpack.c.bf16 %v2152, %v2146
          %v2297 = vunpack.c.l.b16 %v2153
          %v2298 = vunpack.c.l.b16 %v2154
          %v2299 = vunpack.c.l.b16 %v2155
          %v2300 = vunpack.c.l.b16 %v2156
          %v2301 = vunpack.c.l.b16 %v2157
          %v2302 = vunpack.c.l.b16 %v2158
          %v2303 = vunpack.c.h.b16 %v2153
          %v2304 = vunpack.c.h.b16 %v2154
          %v2305 = vunpack.c.h.b16 %v2155
          %v2306 = vunpack.c.h.b16 %v2156
          %v2307 = vunpack.c.h.b16 %v2157
          %v2308 = vunpack.c.h.b16 %v2158
          %v2309 = vunpack.c.l.b16 %v2159
          %v2310 = vunpack.c.l.b16 %v2160
          %v2311 = vunpack.c.l.b16 %v2161
          %v2312 = vunpack.c.l.b16 %v2162
          %v2313 = vunpack.c.l.b16 %v2163
          %v2314 = vunpack.c.l.b16 %v2164
          %v2315 = vunpack.c.h.b16 %v2159
          %v2316 = vunpack.c.h.b16 %v2160
          %v2317 = vunpack.c.h.b16 %v2161
          %v2318 = vunpack.c.h.b16 %v2162
          %v2319 = vunpack.c.h.b16 %v2163
          %v2320 = vunpack.c.h.b16 %v2164
          %v2321 = vunpack.c.l.b16 %v2165
          %v2322 = vunpack.c.l.b16 %v2166
          %v2323 = vunpack.c.l.b16 %v2167
          %v2324 = vunpack.c.l.b16 %v2168
          %v2325 = vunpack.c.l.b16 %v2169
          %v2326 = vunpack.c.l.b16 %v2170
          %v2327 = vunpack.c.h.b16 %v2165
          %v2328 = vunpack.c.h.b16 %v2166
          %v2329 = vunpack.c.h.b16 %v2167
          %v2330 = vunpack.c.h.b16 %v2168
          %v2331 = vunpack.c.h.b16 %v2169
          %v2332 = vunpack.c.h.b16 %v2170
          %v2333 = vunpack.c.l.b16 %v2171
          %v2334 = vunpack.c.l.b16 %v2172
          %v2335 = vunpack.c.l.b16 %v2173
          %v2336 = vunpack.c.l.b16 %v2174
          %v2337 = vunpack.c.l.b16 %v2175
          %v2338 = vunpack.c.l.b16 %v2176
          %v2339 = vunpack.c.h.b16 %v2171
          %v2340 = vunpack.c.h.b16 %v2172
          %v2341 = vunpack.c.h.b16 %v2173
          %v2342 = vunpack.c.h.b16 %v2174
          %v2343 = vunpack.c.h.b16 %v2175
          %v2344 = vunpack.c.h.b16 %v2176
          %v2345 = vunpack.c.l.b16 %v2177
          %v2346 = vunpack.c.l.b16 %v2178
          %v2347 = vunpack.c.l.b16 %v2179
          %v2348 = vunpack.c.l.b16 %v2180
          %v2349 = vunpack.c.l.b16 %v2181
          %v2350 = vunpack.c.l.b16 %v2182
          %v2351 = vunpack.c.h.b16 %v2177
          %v2352 = vunpack.c.h.b16 %v2178
          %v2353 = vunpack.c.h.b16 %v2179
          %v2354 = vunpack.c.h.b16 %v2180
          %v2355 = vunpack.c.h.b16 %v2181
          %v2356 = vunpack.c.h.b16 %v2182
          %v2357 = vunpack.c.l.b16 %v2183
          %v2358 = vunpack.c.l.b16 %v2184
          %v2359 = vunpack.c.l.b16 %v2185
          %v2360 = vunpack.c.l.b16 %v2186
          %v2361 = vunpack.c.l.b16 %v2187
          %v2362 = vunpack.c.l.b16 %v2188
          %v2363 = vunpack.c.h.b16 %v2183
          %v2364 = vunpack.c.h.b16 %v2184
          %v2365 = vunpack.c.h.b16 %v2185
          %v2366 = vunpack.c.h.b16 %v2186
          %v2367 = vunpack.c.h.b16 %v2187
          %v2368 = vunpack.c.h.b16 %v2188
          %v2369 = vunpack.c.l.b16 %v2189
          %v2370 = vunpack.c.l.b16 %v2190
          %v2371 = vunpack.c.l.b16 %v2191
          %v2372 = vunpack.c.l.b16 %v2192
          %v2373 = vunpack.c.l.b16 %v2193
          %v2374 = vunpack.c.l.b16 %v2194
          %v2375 = vunpack.c.h.b16 %v2189
          %v2376 = vunpack.c.h.b16 %v2190
          %v2377 = vunpack.c.h.b16 %v2191
          %v2378 = vunpack.c.h.b16 %v2192
          %v2379 = vunpack.c.h.b16 %v2193
          %v2380 = vunpack.c.h.b16 %v2194
          %v2381 = vunpack.c.l.b16 %v2195
          %v2382 = vunpack.c.l.b16 %v2196
          %v2383 = vunpack.c.l.b16 %v2197
          %v2384 = vunpack.c.l.b16 %v2198
          %v2385 = vunpack.c.l.b16 %v2199
          %v2386 = vunpack.c.l.b16 %v2200
          %v2387 = vunpack.c.h.b16 %v2195
          %v2388 = vunpack.c.h.b16 %v2196
          %v2389 = vunpack.c.h.b16 %v2197
          %v2390 = vunpack.c.h.b16 %v2198
          %v2391 = vunpack.c.h.b16 %v2199
          %v2392 = vunpack.c.h.b16 %v2200
          %v2393 = vunpack.c.l.b16 %v2201
          %v2394 = vunpack.c.l.b16 %v2202
          %v2395 = vunpack.c.l.b16 %v2203
          %v2396 = vunpack.c.l.b16 %v2204
          %v2397 = vunpack.c.l.b16 %v2205
          %v2398 = vunpack.c.l.b16 %v2206
          %v2399 = vunpack.c.h.b16 %v2201
          %v2400 = vunpack.c.h.b16 %v2202
          %v2401 = vunpack.c.h.b16 %v2203
          %v2402 = vunpack.c.h.b16 %v2204
          %v2403 = vunpack.c.h.b16 %v2205
          %v2404 = vunpack.c.h.b16 %v2206
          %v2405 = vunpack.c.l.b16 %v2207
          %v2406 = vunpack.c.l.b16 %v2208
          %v2407 = vunpack.c.l.b16 %v2209
          %v2408 = vunpack.c.l.b16 %v2210
          %v2409 = vunpack.c.l.b16 %v2211
          %v2410 = vunpack.c.l.b16 %v2212
          %v2411 = vunpack.c.h.b16 %v2207
          %v2412 = vunpack.c.h.b16 %v2208
          %v2413 = vunpack.c.h.b16 %v2209
          %v2414 = vunpack.c.h.b16 %v2210
          %v2415 = vunpack.c.h.b16 %v2211
          %v2416 = vunpack.c.h.b16 %v2212
          %v2417 = vunpack.c.l.b16 %v2213
          %v2418 = vunpack.c.l.b16 %v2214
          %v2419 = vunpack.c.l.b16 %v2215
          %v2420 = vunpack.c.l.b16 %v2216
          %v2421 = vunpack.c.l.b16 %v2217
          %v2422 = vunpack.c.l.b16 %v2218
          %v2423 = vunpack.c.h.b16 %v2213
          %v2424 = vunpack.c.h.b16 %v2214
          %v2425 = vunpack.c.h.b16 %v2215
          %v2426 = vunpack.c.h.b16 %v2216
          %v2427 = vunpack.c.h.b16 %v2217
          %v2428 = vunpack.c.h.b16 %v2218
          %v2429 = vunpack.c.l.b16 %v2219
          %v2430 = vunpack.c.l.b16 %v2220
          %v2431 = vunpack.c.l.b16 %v2221
          %v2432 = vunpack.c.l.b16 %v2222
          %v2433 = vunpack.c.l.b16 %v2223
          %v2434 = vunpack.c.l.b16 %v2224
          %v2435 = vunpack.c.h.b16 %v2219
          %v2436 = vunpack.c.h.b16 %v2220
          %v2437 = vunpack.c.h.b16 %v2221
          %v2438 = vunpack.c.h.b16 %v2222
          %v2439 = vunpack.c.h.b16 %v2223
          %v2440 = vunpack.c.h.b16 %v2224
          %v2441 = vpack.c.b16 %v2298, %v2297
          %v2442 = vpack.c.b16 %v2300, %v2299
          %v2443 = vpack.c.b16 %v2302, %v2301
          %v2444 = vpack.c.b16 %v2304, %v2303
          %v2445 = vpack.c.b16 %v2306, %v2305
          %v2446 = vpack.c.b16 %v2308, %v2307
          %v2447 = vpack.c.b16 %v2310, %v2309
          %v2448 = vpack.c.b16 %v2312, %v2311
          %v2449 = vpack.c.b16 %v2314, %v2313
          %v2450 = vpack.c.b16 %v2316, %v2315
          %v2451 = vpack.c.b16 %v2318, %v2317
          %v2452 = vpack.c.b16 %v2320, %v2319
          %v2453 = vpack.c.b16 %v2322, %v2321
          %v2454 = vpack.c.b16 %v2324, %v2323
          %v2455 = vpack.c.b16 %v2326, %v2325
          %v2456 = vpack.c.b16 %v2328, %v2327
          %v2457 = vpack.c.b16 %v2330, %v2329
          %v2458 = vpack.c.b16 %v2332, %v2331
          %v2459 = vpack.c.b16 %v2334, %v2333
          %v2460 = vpack.c.b16 %v2336, %v2335
          %v2461 = vpack.c.b16 %v2338, %v2337
          %v2462 = vpack.c.b16 %v2340, %v2339
          %v2463 = vpack.c.b16 %v2342, %v2341
          %v2464 = vpack.c.b16 %v2344, %v2343
          %v2465 = vpack.c.b16 %v2346, %v2345
          %v2466 = vpack.c.b16 %v2348, %v2347
          %v2467 = vpack.c.b16 %v2350, %v2349
          %v2468 = vpack.c.b16 %v2352, %v2351
          %v2469 = vpack.c.b16 %v2354, %v2353
          %v2470 = vpack.c.b16 %v2356, %v2355
          %v2471 = vpack.c.b16 %v2358, %v2357
          %v2472 = vpack.c.b16 %v2360, %v2359
          %v2473 = vpack.c.b16 %v2362, %v2361
          %v2474 = vpack.c.b16 %v2364, %v2363
          %v2475 = vpack.c.b16 %v2366, %v2365
          %v2476 = vpack.c.b16 %v2368, %v2367
          %v2477 = vpack.c.b16 %v2370, %v2369
          %v2478 = vpack.c.b16 %v2372, %v2371
          %v2479 = vpack.c.b16 %v2374, %v2373
          %v2480 = vpack.c.b16 %v2376, %v2375
          %v2481 = vpack.c.b16 %v2378, %v2377
          %v2482 = vpack.c.b16 %v2380, %v2379
          %v2483 = vpack.c.b16 %v2382, %v2381
          %v2484 = vpack.c.b16 %v2384, %v2383
          %v2485 = vpack.c.b16 %v2386, %v2385
          %v2486 = vpack.c.b16 %v2388, %v2387
          %v2487 = vpack.c.b16 %v2390, %v2389
          %v2488 = vpack.c.b16 %v2392, %v2391
          %v2489 = vpack.c.b16 %v2394, %v2393
          %v2490 = vpack.c.b16 %v2396, %v2395
          %v2491 = vpack.c.b16 %v2398, %v2397
          %v2492 = vpack.c.b16 %v2400, %v2399
          %v2493 = vpack.c.b16 %v2402, %v2401
          %v2494 = vpack.c.b16 %v2404, %v2403
          %v2495 = vpack.c.b16 %v2406, %v2405
          %v2496 = vpack.c.b16 %v2408, %v2407
          %v2497 = vpack.c.b16 %v2410, %v2409
          %v2498 = vpack.c.b16 %v2412, %v2411
          %v2499 = vpack.c.b16 %v2414, %v2413
          %v2500 = vpack.c.b16 %v2416, %v2415
          %v2501 = vpack.c.b16 %v2418, %v2417
          %v2502 = vpack.c.b16 %v2420, %v2419
          %v2503 = vpack.c.b16 %v2422, %v2421
          %v2504 = vpack.c.b16 %v2424, %v2423
          %v2505 = vpack.c.b16 %v2426, %v2425
          %v2506 = vpack.c.b16 %v2428, %v2427
          %v2507 = vpack.c.b16 %v2430, %v2429
          %v2508 = vpack.c.b16 %v2432, %v2431
          %v2509 = vpack.c.b16 %v2434, %v2433
          %v2510 = vpack.c.b16 %v2436, %v2435
          %v2511 = vpack.c.b16 %v2438, %v2437
          %v2512 = vpack.c.b16 %v2440, %v2439
          %2585 = vst [vmem:[#allocation2] sm:$0xff] %v2441
          %2586 = vst [vmem:[#allocation2 + $0x8] sm:$0xff] %v2442
          %2587 = vst [vmem:[#allocation2 + $0x10] sm:$0xff] %v2443
          %2588 = vst [vmem:[#allocation2 + $0x18] sm:$0xff] %v2444
          %2589 = vst [vmem:[#allocation2 + $0x20] sm:$0xff] %v2445
          %2590 = vst [vmem:[#allocation2 + $0x28] sm:$0xff] %v2446
          %2591 = vst [vmem:[#allocation2 + $0x30] sm:$0xff] %v2447
          %2592 = vst [vmem:[#allocation2 + $0x38] sm:$0xff] %v2448
          %2593 = vst [vmem:[#allocation2 + $0x40] sm:$0xff] %v2449
          %2594 = vst [vmem:[#allocation2 + $0x48] sm:$0xff] %v2450
          %2595 = vst [vmem:[#allocation2 + $0x50] sm:$0xff] %v2451
          %2596 = vst [vmem:[#allocation2 + $0x58] sm:$0xff] %v2452
          %2597 = vst [vmem:[#allocation2 + $0x60] sm:$0xff] %v2453
          %2598 = vst [vmem:[#allocation2 + $0x68] sm:$0xff] %v2454
          %2599 = vst [vmem:[#allocation2 + $0x70] sm:$0xff] %v2455
          %2600 = vst [vmem:[#allocation2 + $0x78] sm:$0xff] %v2456
          %2601 = vst [vmem:[#allocation2 + $0x80] sm:$0xff] %v2457
          %2602 = vst [vmem:[#allocation2 + $0x88] sm:$0xff] %v2458
          %2603 = vst [vmem:[#allocation2 + $0x90] sm:$0xff] %v2459
          %2604 = vst [vmem:[#allocation2 + $0x98] sm:$0xff] %v2460
          %2605 = vst [vmem:[#allocation2 + $0xa0] sm:$0xff] %v2461
          %2606 = vst [vmem:[#allocation2 + $0xa8] sm:$0xff] %v2462
          %2607 = vst [vmem:[#allocation2 + $0xb0] sm:$0xff] %v2463
          %2608 = vst [vmem:[#allocation2 + $0xb8] sm:$0xff] %v2464
          %2609 = vst [vmem:[#allocation2 + $0xc0] sm:$0xff] %v2465
          %2610 = vst [vmem:[#allocation2 + $0xc8] sm:$0xff] %v2466
          %2611 = vst [vmem:[#allocation2 + $0xd0] sm:$0xff] %v2467
          %2612 = vst [vmem:[#allocation2 + $0xd8] sm:$0xff] %v2468
          %2613 = vst [vmem:[#allocation2 + $0xe0] sm:$0xff] %v2469
          %2614 = vst [vmem:[#allocation2 + $0xe8] sm:$0xff] %v2470
          %2615 = vst [vmem:[#allocation2 + $0xf0] sm:$0xff] %v2471
          %2616 = vst [vmem:[#allocation2 + $0xf8] sm:$0xff] %v2472
          %2617 = vst [vmem:[#allocation2 + $0x100] sm:$0xff] %v2473
          %2618 = vst [vmem:[#allocation2 + $0x108] sm:$0xff] %v2474
          %2619 = vst [vmem:[#allocation2 + $0x110] sm:$0xff] %v2475
          %2620 = vst [vmem:[#allocation2 + $0x118] sm:$0xff] %v2476
          %2621 = vst [vmem:[#allocation2 + $0x120] sm:$0xff] %v2477
          %2622 = vst [vmem:[#allocation2 + $0x128] sm:$0xff] %v2478
          %2623 = vst [vmem:[#allocation2 + $0x130] sm:$0xff] %v2479
          %2624 = vst [vmem:[#allocation2 + $0x138] sm:$0xff] %v2480
          %2625 = vst [vmem:[#allocation2 + $0x140] sm:$0xff] %v2481
          %2626 = vst [vmem:[#allocation2 + $0x148] sm:$0xff] %v2482
          %2627 = vst [vmem:[#allocation2 + $0x150] sm:$0xff] %v2483
          %2628 = vst [vmem:[#allocation2 + $0x158] sm:$0xff] %v2484
          %2629 = vst [vmem:[#allocation2 + $0x160] sm:$0xff] %v2485
          %2630 = vst [vmem:[#allocation2 + $0x168] sm:$0xff] %v2486
          %2631 = vst [vmem:[#allocation2 + $0x170] sm:$0xff] %v2487
          %2632 = vst [vmem:[#allocation2 + $0x178] sm:$0xff] %v2488
          %2633 = vst [vmem:[#allocation2 + $0x180] sm:$0xff] %v2489
          %2634 = vst [vmem:[#allocation2 + $0x188] sm:$0xff] %v2490
          %2635 = vst [vmem:[#allocation2 + $0x190] sm:$0xff] %v2491
          %2636 = vst [vmem:[#allocation2 + $0x198] sm:$0xff] %v2492
          %2637 = vst [vmem:[#allocation2 + $0x1a0] sm:$0xff] %v2493
          %2638 = vst [vmem:[#allocation2 + $0x1a8] sm:$0xff] %v2494
          %2639 = vst [vmem:[#allocation2 + $0x1b0] sm:$0xff] %v2495
          %2640 = vst [vmem:[#allocation2 + $0x1b8] sm:$0xff] %v2496
          %2641 = vst [vmem:[#allocation2 + $0x1c0] sm:$0xff] %v2497
          %2642 = vst [vmem:[#allocation2 + $0x1c8] sm:$0xff] %v2498
          %2643 = vst [vmem:[#allocation2 + $0x1d0] sm:$0xff] %v2499
          %2644 = vst [vmem:[#allocation2 + $0x1d8] sm:$0xff] %v2500
          %2645 = vst [vmem:[#allocation2 + $0x1e0] sm:$0xff] %v2501
          %2646 = vst [vmem:[#allocation2 + $0x1e8] sm:$0xff] %v2502
          %2647 = vst [vmem:[#allocation2 + $0x1f0] sm:$0xff] %v2503
          %2648 = vst [vmem:[#allocation2 + $0x1f8] sm:$0xff] %v2504
          %2649 = vst [vmem:[#allocation2 + $0x200] sm:$0xff] %v2505
          %2650 = vst [vmem:[#allocation2 + $0x208] sm:$0xff] %v2506
          %2651 = vst [vmem:[#allocation2 + $0x210] sm:$0xff] %v2507
          %2652 = vst [vmem:[#allocation2 + $0x218] sm:$0xff] %v2508
          %2653 = vst [vmem:[#allocation2 + $0x220] sm:$0xff] %v2509
          %2654 = vst [vmem:[#allocation2 + $0x228] sm:$0xff] %v2510
          %2655 = vst [vmem:[#allocation2 + $0x230] sm:$0xff] %v2511
          %2656 = vst [vmem:[#allocation2 + $0x238] sm:$0xff] %v2512
        $region72: #{tpu_custom_call.1} parent=43 // pred_fallthru
          _
        %v2657 = vld [vmem:[#allocation2] sm:$0xff]
        %v2658 = vld [vmem:[#allocation2 + $0x8] sm:$0xff]
        %v2659 = vld [vmem:[#allocation2 + $0x10] sm:$0xff]
        %v2660 = vld [vmem:[#allocation2 + $0x18] sm:$0xff]
        %v2661 = vld [vmem:[#allocation2 + $0x20] sm:$0xff]
        %v2662 = vld [vmem:[#allocation2 + $0x28] sm:$0xff]
        %v2663 = vld [vmem:[#allocation2 + $0x30] sm:$0xff]
        %v2664 = vld [vmem:[#allocation2 + $0x38] sm:$0xff]
        %v2665 = vld [vmem:[#allocation2 + $0x40] sm:$0xff]
        %v2666 = vld [vmem:[#allocation2 + $0x48] sm:$0xff]
        %v2667 = vld [vmem:[#allocation2 + $0x50] sm:$0xff]
        %v2668 = vld [vmem:[#allocation2 + $0x58] sm:$0xff]
        %v2669 = vld [vmem:[#allocation2 + $0x60] sm:$0xff]
        %v2670 = vld [vmem:[#allocation2 + $0x68] sm:$0xff]
        %v2671 = vld [vmem:[#allocation2 + $0x70] sm:$0xff]
        %v2672 = vld [vmem:[#allocation2 + $0x78] sm:$0xff]
        %v2673 = vld [vmem:[#allocation2 + $0x80] sm:$0xff]
        %v2674 = vld [vmem:[#allocation2 + $0x88] sm:$0xff]
        %v2675 = vld [vmem:[#allocation2 + $0x90] sm:$0xff]
        %v2676 = vld [vmem:[#allocation2 + $0x98] sm:$0xff]
        %v2677 = vld [vmem:[#allocation2 + $0xa0] sm:$0xff]
        %v2678 = vld [vmem:[#allocation2 + $0xa8] sm:$0xff]
        %v2679 = vld [vmem:[#allocation2 + $0xb0] sm:$0xff]
        %v2680 = vld [vmem:[#allocation2 + $0xb8] sm:$0xff]
        %v2681 = vld [vmem:[#allocation2 + $0xc0] sm:$0xff]
        %v2682 = vld [vmem:[#allocation2 + $0xc8] sm:$0xff]
        %v2683 = vld [vmem:[#allocation2 + $0xd0] sm:$0xff]
        %v2684 = vld [vmem:[#allocation2 + $0xd8] sm:$0xff]
        %v2685 = vld [vmem:[#allocation2 + $0xe0] sm:$0xff]
        %v2686 = vld [vmem:[#allocation2 + $0xe8] sm:$0xff]
        %v2687 = vld [vmem:[#allocation2 + $0xf0] sm:$0xff]
        %v2688 = vld [vmem:[#allocation2 + $0xf8] sm:$0xff]
        %v2689 = vld [vmem:[#allocation2 + $0x100] sm:$0xff]
        %v2690 = vld [vmem:[#allocation2 + $0x108] sm:$0xff]
        %v2691 = vld [vmem:[#allocation2 + $0x110] sm:$0xff]
        %v2692 = vld [vmem:[#allocation2 + $0x118] sm:$0xff]
        %v2693 = vld [vmem:[#allocation2 + $0x120] sm:$0xff]
        %v2694 = vld [vmem:[#allocation2 + $0x128] sm:$0xff]
        %v2695 = vld [vmem:[#allocation2 + $0x130] sm:$0xff]
        %v2696 = vld [vmem:[#allocation2 + $0x138] sm:$0xff]
        %v2697 = vld [vmem:[#allocation2 + $0x140] sm:$0xff]
        %v2698 = vld [vmem:[#allocation2 + $0x148] sm:$0xff]
        %v2699 = vld [vmem:[#allocation2 + $0x150] sm:$0xff]
        %v2700 = vld [vmem:[#allocation2 + $0x158] sm:$0xff]
        %v2701 = vld [vmem:[#allocation2 + $0x160] sm:$0xff]
        %v2702 = vld [vmem:[#allocation2 + $0x168] sm:$0xff]
        %v2703 = vld [vmem:[#allocation2 + $0x170] sm:$0xff]
        %v2704 = vld [vmem:[#allocation2 + $0x178] sm:$0xff]
        %v2705 = vld [vmem:[#allocation2 + $0x180] sm:$0xff]
        %v2706 = vld [vmem:[#allocation2 + $0x188] sm:$0xff]
        %v2707 = vld [vmem:[#allocation2 + $0x190] sm:$0xff]
        %v2708 = vld [vmem:[#allocation2 + $0x198] sm:$0xff]
        %v2709 = vld [vmem:[#allocation2 + $0x1a0] sm:$0xff]
        %v2710 = vld [vmem:[#allocation2 + $0x1a8] sm:$0xff]
        %v2711 = vld [vmem:[#allocation2 + $0x1b0] sm:$0xff]
        %v2712 = vld [vmem:[#allocation2 + $0x1b8] sm:$0xff]
        %v2713 = vld [vmem:[#allocation2 + $0x1c0] sm:$0xff]
        %v2714 = vld [vmem:[#allocation2 + $0x1c8] sm:$0xff]
        %v2715 = vld [vmem:[#allocation2 + $0x1d0] sm:$0xff]
        %v2716 = vld [vmem:[#allocation2 + $0x1d8] sm:$0xff]
        %v2717 = vld [vmem:[#allocation2 + $0x1e0] sm:$0xff]
        %v2718 = vld [vmem:[#allocation2 + $0x1e8] sm:$0xff]
        %v2719 = vld [vmem:[#allocation2 + $0x1f0] sm:$0xff]
        %v2720 = vld [vmem:[#allocation2 + $0x1f8] sm:$0xff]
        %v2721 = vld [vmem:[#allocation2 + $0x200] sm:$0xff]
        %v2722 = vld [vmem:[#allocation2 + $0x208] sm:$0xff]
        %v2723 = vld [vmem:[#allocation2 + $0x210] sm:$0xff]
        %v2724 = vld [vmem:[#allocation2 + $0x218] sm:$0xff]
        %v2725 = vld [vmem:[#allocation2 + $0x220] sm:$0xff]
        %v2726 = vld [vmem:[#allocation2 + $0x228] sm:$0xff]
        %v2727 = vld [vmem:[#allocation2 + $0x230] sm:$0xff]
        %v2728 = vld [vmem:[#allocation2 + $0x238] sm:$0xff]
        %v2729 = vld [vmem:[%s370] sm:$0xff]
        %v2730 = vld [vmem:[%s370 + $0x8] sm:$0xff]
        %v2731 = vld [vmem:[%s370 + $0x10] sm:$0xff]
        %v2732 = vld [vmem:[%s370 + $0x18] sm:$0xff]
        %v2733 = vld [vmem:[%s370 + $0x20] sm:$0xff]
        %v2734 = vld [vmem:[%s370 + $0x28] sm:$0xff]
        %v2735 = vld [vmem:[%s370 + $0x30] sm:$0xff]
        %v2736 = vld [vmem:[%s370 + $0x38] sm:$0xff]
        %v2737 = vld [vmem:[%s370 + $0x40] sm:$0xff]
        %v2738 = vld [vmem:[%s370 + $0x48] sm:$0xff]
        %v2739 = vld [vmem:[%s370 + $0x50] sm:$0xff]
        %v2740 = vld [vmem:[%s370 + $0x58] sm:$0xff]
        %v2741 = vld [vmem:[%s370 + $0x60] sm:$0xff]
        %v2742 = vld [vmem:[%s370 + $0x68] sm:$0xff]
        %v2743 = vld [vmem:[%s370 + $0x70] sm:$0xff]
        %v2744 = vld [vmem:[%s370 + $0x78] sm:$0xff]
        %v2745 = vld [vmem:[%s370 + $0x80] sm:$0xff]
        %v2746 = vld [vmem:[%s370 + $0x88] sm:$0xff]
        %v2747 = vld [vmem:[%s370 + $0x90] sm:$0xff]
        %v2748 = vld [vmem:[%s370 + $0x98] sm:$0xff]
        %v2749 = vld [vmem:[%s370 + $0xa0] sm:$0xff]
        %v2750 = vld [vmem:[%s370 + $0xa8] sm:$0xff]
        %v2751 = vld [vmem:[%s370 + $0xb0] sm:$0xff]
        %v2752 = vld [vmem:[%s370 + $0xb8] sm:$0xff]
        %v2753 = vld [vmem:[%s370 + $0xc0] sm:$0xff]
        %v2754 = vld [vmem:[%s370 + $0xc8] sm:$0xff]
        %v2755 = vld [vmem:[%s370 + $0xd0] sm:$0xff]
        %v2756 = vld [vmem:[%s370 + $0xd8] sm:$0xff]
        %v2757 = vld [vmem:[%s370 + $0xe0] sm:$0xff]
        %v2758 = vld [vmem:[%s370 + $0xe8] sm:$0xff]
        %v2759 = vld [vmem:[%s370 + $0xf0] sm:$0xff]
        %v2760 = vld [vmem:[%s370 + $0xf8] sm:$0xff]
        %v2761 = vld [vmem:[%s370 + $0x100] sm:$0xff]
        %v2762 = vld [vmem:[%s370 + $0x108] sm:$0xff]
        %v2763 = vld [vmem:[%s370 + $0x110] sm:$0xff]
        %v2764 = vld [vmem:[%s370 + $0x118] sm:$0xff]
        %v2765 = vld [vmem:[%s370 + $0x120] sm:$0xff]
        %v2766 = vld [vmem:[%s370 + $0x128] sm:$0xff]
        %v2767 = vld [vmem:[%s370 + $0x130] sm:$0xff]
        %v2768 = vld [vmem:[%s370 + $0x138] sm:$0xff]
        %v2769 = vld [vmem:[%s370 + $0x140] sm:$0xff]
        %v2770 = vld [vmem:[%s370 + $0x148] sm:$0xff]
        %v2771 = vld [vmem:[%s370 + $0x150] sm:$0xff]
        %v2772 = vld [vmem:[%s370 + $0x158] sm:$0xff]
        %v2773 = vld [vmem:[%s370 + $0x160] sm:$0xff]
        %v2774 = vld [vmem:[%s370 + $0x168] sm:$0xff]
        %v2775 = vld [vmem:[%s370 + $0x170] sm:$0xff]
        %v2776 = vld [vmem:[%s370 + $0x178] sm:$0xff]
        %v2777 = vld [vmem:[%s370 + $0x180] sm:$0xff]
        %v2778 = vld [vmem:[%s370 + $0x188] sm:$0xff]
        %v2779 = vld [vmem:[%s370 + $0x190] sm:$0xff]
        %v2780 = vld [vmem:[%s370 + $0x198] sm:$0xff]
        %v2781 = vld [vmem:[%s370 + $0x1a0] sm:$0xff]
        %v2782 = vld [vmem:[%s370 + $0x1a8] sm:$0xff]
        %v2783 = vld [vmem:[%s370 + $0x1b0] sm:$0xff]
        %v2784 = vld [vmem:[%s370 + $0x1b8] sm:$0xff]
        %v2785 = vld [vmem:[%s370 + $0x1c0] sm:$0xff]
        %v2786 = vld [vmem:[%s370 + $0x1c8] sm:$0xff]
        %v2787 = vld [vmem:[%s370 + $0x1d0] sm:$0xff]
        %v2788 = vld [vmem:[%s370 + $0x1d8] sm:$0xff]
        %v2789 = vld [vmem:[%s370 + $0x1e0] sm:$0xff]
        %v2790 = vld [vmem:[%s370 + $0x1e8] sm:$0xff]
        %v2791 = vld [vmem:[%s370 + $0x1f0] sm:$0xff]
        %v2792 = vld [vmem:[%s370 + $0x1f8] sm:$0xff]
        %v2793 = vld [vmem:[%s370 + $0x200] sm:$0xff]
        %v2794 = vld [vmem:[%s370 + $0x208] sm:$0xff]
        %v2795 = vld [vmem:[%s370 + $0x210] sm:$0xff]
        %v2796 = vld [vmem:[%s370 + $0x218] sm:$0xff]
        %v2797 = vld [vmem:[%s370 + $0x220] sm:$0xff]
        %v2798 = vld [vmem:[%s370 + $0x228] sm:$0xff]
        %v2799 = vld [vmem:[%s370 + $0x230] sm:$0xff]
        %v2800 = vld [vmem:[%s370 + $0x238] sm:$0xff]
        %v2801 = vld [vmem:[%s370 + $0x240] sm:$0xff]
        %v2802 = vld [vmem:[%s370 + $0x248] sm:$0xff]
        %v2803 = vld [vmem:[%s370 + $0x250] sm:$0xff]
        %v2804 = vld [vmem:[%s370 + $0x258] sm:$0xff]
        %v2805 = vld [vmem:[%s370 + $0x260] sm:$0xff]
        %v2806 = vld [vmem:[%s370 + $0x268] sm:$0xff]
        %v2807 = vld [vmem:[%s370 + $0x270] sm:$0xff]
        %v2808 = vld [vmem:[%s370 + $0x278] sm:$0xff]
        %v2809 = vld [vmem:[%s370 + $0x280] sm:$0xff]
        %v2810 = vld [vmem:[%s370 + $0x288] sm:$0xff]
        %v2811 = vld [vmem:[%s370 + $0x290] sm:$0xff]
        %v2812 = vld [vmem:[%s370 + $0x298] sm:$0xff]
        %v2813 = vld [vmem:[%s370 + $0x2a0] sm:$0xff]
        %v2814 = vld [vmem:[%s370 + $0x2a8] sm:$0xff]
        %v2815 = vld [vmem:[%s370 + $0x2b0] sm:$0xff]
        %v2816 = vld [vmem:[%s370 + $0x2b8] sm:$0xff]
        %v2817 = vld [vmem:[%s370 + $0x2c0] sm:$0xff]
        %v2818 = vld [vmem:[%s370 + $0x2c8] sm:$0xff]
        %v2819 = vld [vmem:[%s370 + $0x2d0] sm:$0xff]
        %v2820 = vld [vmem:[%s370 + $0x2d8] sm:$0xff]
        %v2821 = vld [vmem:[%s370 + $0x2e0] sm:$0xff]
        %v2822 = vld [vmem:[%s370 + $0x2e8] sm:$0xff]
        %v2823 = vld [vmem:[%s370 + $0x2f0] sm:$0xff]
        %v2824 = vld [vmem:[%s370 + $0x2f8] sm:$0xff]
        %v2825 = vld [vmem:[%s379] sm:$0x3]
        %v2827 = vlaneseq
        %v2828 = vshrl.u32 %v2827, 7
        %v2829 = vsub.s32 0, %v2828
        %v2830 = vrot.slane %v2825, %v2829
        %v2831 = vlaneseq
        %v2832 = vshrl.u32 %v2831, 7
        %v2833 = vsub.s32 1, %v2832
        %v2834 = vrot.slane %v2825, %v2833
        %v2909 = vunpack.c.l.b16 %v2657
        %v2910 = vunpack.c.h.b16 %v2657
        %v2911 = vunpack.c.l.b16 %v2658
        %v2912 = vunpack.c.h.b16 %v2658
        %v2913 = vunpack.c.l.b16 %v2659
        %v2914 = vunpack.c.h.b16 %v2659
        %v2915 = vunpack.c.l.b16 %v2660
        %v2916 = vunpack.c.h.b16 %v2660
        %v2917 = vunpack.c.l.b16 %v2661
        %v2918 = vunpack.c.h.b16 %v2661
        %v2919 = vunpack.c.l.b16 %v2662
        %v2920 = vunpack.c.h.b16 %v2662
        %v2921 = vunpack.c.l.b16 %v2663
        %v2922 = vunpack.c.h.b16 %v2663
        %v2923 = vunpack.c.l.b16 %v2664
        %v2924 = vunpack.c.h.b16 %v2664
        %v2925 = vunpack.c.l.b16 %v2665
        %v2926 = vunpack.c.h.b16 %v2665
        %v2927 = vunpack.c.l.b16 %v2666
        %v2928 = vunpack.c.h.b16 %v2666
        %v2929 = vunpack.c.l.b16 %v2667
        %v2930 = vunpack.c.h.b16 %v2667
        %v2931 = vunpack.c.l.b16 %v2668
        %v2932 = vunpack.c.h.b16 %v2668
        %v2933 = vunpack.c.l.b16 %v2669
        %v2934 = vunpack.c.h.b16 %v2669
        %v2935 = vunpack.c.l.b16 %v2670
        %v2936 = vunpack.c.h.b16 %v2670
        %v2937 = vunpack.c.l.b16 %v2671
        %v2938 = vunpack.c.h.b16 %v2671
        %v2939 = vunpack.c.l.b16 %v2672
        %v2940 = vunpack.c.h.b16 %v2672
        %v2941 = vunpack.c.l.b16 %v2673
        %v2942 = vunpack.c.h.b16 %v2673
        %v2943 = vunpack.c.l.b16 %v2674
        %v2944 = vunpack.c.h.b16 %v2674
        %v2945 = vunpack.c.l.b16 %v2675
        %v2946 = vunpack.c.h.b16 %v2675
        %v2947 = vunpack.c.l.b16 %v2676
        %v2948 = vunpack.c.h.b16 %v2676
        %v2949 = vunpack.c.l.b16 %v2677
        %v2950 = vunpack.c.h.b16 %v2677
        %v2951 = vunpack.c.l.b16 %v2678
        %v2952 = vunpack.c.h.b16 %v2678
        %v2953 = vunpack.c.l.b16 %v2679
        %v2954 = vunpack.c.h.b16 %v2679
        %v2955 = vunpack.c.l.b16 %v2680
        %v2956 = vunpack.c.h.b16 %v2680
        %v2957 = vunpack.c.l.b16 %v2681
        %v2958 = vunpack.c.h.b16 %v2681
        %v2959 = vunpack.c.l.b16 %v2682
        %v2960 = vunpack.c.h.b16 %v2682
        %v2961 = vunpack.c.l.b16 %v2683
        %v2962 = vunpack.c.h.b16 %v2683
        %v2963 = vunpack.c.l.b16 %v2684
        %v2964 = vunpack.c.h.b16 %v2684
        %v2965 = vunpack.c.l.b16 %v2685
        %v2966 = vunpack.c.h.b16 %v2685
        %v2967 = vunpack.c.l.b16 %v2686
        %v2968 = vunpack.c.h.b16 %v2686
        %v2969 = vunpack.c.l.b16 %v2687
        %v2970 = vunpack.c.h.b16 %v2687
        %v2971 = vunpack.c.l.b16 %v2688
        %v2972 = vunpack.c.h.b16 %v2688
        %v2973 = vunpack.c.l.b16 %v2689
        %v2974 = vunpack.c.h.b16 %v2689
        %v2975 = vunpack.c.l.b16 %v2690
        %v2976 = vunpack.c.h.b16 %v2690
        %v2977 = vunpack.c.l.b16 %v2691
        %v2978 = vunpack.c.h.b16 %v2691
        %v2979 = vunpack.c.l.b16 %v2692
        %v2980 = vunpack.c.h.b16 %v2692
        %v2981 = vunpack.c.l.b16 %v2693
        %v2982 = vunpack.c.h.b16 %v2693
        %v2983 = vunpack.c.l.b16 %v2694
        %v2984 = vunpack.c.h.b16 %v2694
        %v2985 = vunpack.c.l.b16 %v2695
        %v2986 = vunpack.c.h.b16 %v2695
        %v2987 = vunpack.c.l.b16 %v2696
        %v2988 = vunpack.c.h.b16 %v2696
        %v2989 = vunpack.c.l.b16 %v2697
        %v2990 = vunpack.c.h.b16 %v2697
        %v2991 = vunpack.c.l.b16 %v2698
        %v2992 = vunpack.c.h.b16 %v2698
        %v2993 = vunpack.c.l.b16 %v2699
        %v2994 = vunpack.c.h.b16 %v2699
        %v2995 = vunpack.c.l.b16 %v2700
        %v2996 = vunpack.c.h.b16 %v2700
        %v2997 = vunpack.c.l.b16 %v2701
        %v2998 = vunpack.c.h.b16 %v2701
        %v2999 = vunpack.c.l.b16 %v2702
        %v3000 = vunpack.c.h.b16 %v2702
        %v3001 = vunpack.c.l.b16 %v2703
        %v3002 = vunpack.c.h.b16 %v2703
        %v3003 = vunpack.c.l.b16 %v2704
        %v3004 = vunpack.c.h.b16 %v2704
        %v3005 = vunpack.c.l.b16 %v2705
        %v3006 = vunpack.c.h.b16 %v2705
        %v3007 = vunpack.c.l.b16 %v2706
        %v3008 = vunpack.c.h.b16 %v2706
        %v3009 = vunpack.c.l.b16 %v2707
        %v3010 = vunpack.c.h.b16 %v2707
        %v3011 = vunpack.c.l.b16 %v2708
        %v3012 = vunpack.c.h.b16 %v2708
        %v3013 = vunpack.c.l.b16 %v2709
        %v3014 = vunpack.c.h.b16 %v2709
        %v3015 = vunpack.c.l.b16 %v2710
        %v3016 = vunpack.c.h.b16 %v2710
        %v3017 = vunpack.c.l.b16 %v2711
        %v3018 = vunpack.c.h.b16 %v2711
        %v3019 = vunpack.c.l.b16 %v2712
        %v3020 = vunpack.c.h.b16 %v2712
        %v3021 = vunpack.c.l.b16 %v2713
        %v3022 = vunpack.c.h.b16 %v2713
        %v3023 = vunpack.c.l.b16 %v2714
        %v3024 = vunpack.c.h.b16 %v2714
        %v3025 = vunpack.c.l.b16 %v2715
        %v3026 = vunpack.c.h.b16 %v2715
        %v3027 = vunpack.c.l.b16 %v2716
        %v3028 = vunpack.c.h.b16 %v2716
        %v3029 = vunpack.c.l.b16 %v2717
        %v3030 = vunpack.c.h.b16 %v2717
        %v3031 = vunpack.c.l.b16 %v2718
        %v3032 = vunpack.c.h.b16 %v2718
        %v3033 = vunpack.c.l.b16 %v2719
        %v3034 = vunpack.c.h.b16 %v2719
        %v3035 = vunpack.c.l.b16 %v2720
        %v3036 = vunpack.c.h.b16 %v2720
        %v3037 = vunpack.c.l.b16 %v2721
        %v3038 = vunpack.c.h.b16 %v2721
        %v3039 = vunpack.c.l.b16 %v2722
        %v3040 = vunpack.c.h.b16 %v2722
        %v3041 = vunpack.c.l.b16 %v2723
        %v3042 = vunpack.c.h.b16 %v2723
        %v3043 = vunpack.c.l.b16 %v2724
        %v3044 = vunpack.c.h.b16 %v2724
        %v3045 = vunpack.c.l.b16 %v2725
        %v3046 = vunpack.c.h.b16 %v2725
        %v3047 = vunpack.c.l.b16 %v2726
        %v3048 = vunpack.c.h.b16 %v2726
        %v3049 = vunpack.c.l.b16 %v2727
        %v3050 = vunpack.c.h.b16 %v2727
        %v3051 = vunpack.c.l.b16 %v2728
        %v3052 = vunpack.c.h.b16 %v2728
        %v3053 = vpack.c.b16 %v2915, %v2909
        %v3054 = vpack.c.b16 %v2916, %v2910
        %v3055 = vpack.c.b16 %v2917, %v2911
        %v3056 = vpack.c.b16 %v2918, %v2912
        %v3057 = vpack.c.b16 %v2919, %v2913
        %v3058 = vpack.c.b16 %v2920, %v2914
        %v3059 = vpack.c.b16 %v2927, %v2921
        %v3060 = vpack.c.b16 %v2928, %v2922
        %v3061 = vpack.c.b16 %v2929, %v2923
        %v3062 = vpack.c.b16 %v2930, %v2924
        %v3063 = vpack.c.b16 %v2931, %v2925
        %v3064 = vpack.c.b16 %v2932, %v2926
        %v3065 = vpack.c.b16 %v2939, %v2933
        %v3066 = vpack.c.b16 %v2940, %v2934
        %v3067 = vpack.c.b16 %v2941, %v2935
        %v3068 = vpack.c.b16 %v2942, %v2936
        %v3069 = vpack.c.b16 %v2943, %v2937
        %v3070 = vpack.c.b16 %v2944, %v2938
        %v3071 = vpack.c.b16 %v2951, %v2945
        %v3072 = vpack.c.b16 %v2952, %v2946
        %v3073 = vpack.c.b16 %v2953, %v2947
        %v3074 = vpack.c.b16 %v2954, %v2948
        %v3075 = vpack.c.b16 %v2955, %v2949
        %v3076 = vpack.c.b16 %v2956, %v2950
        %v3077 = vpack.c.b16 %v2963, %v2957
        %v3078 = vpack.c.b16 %v2964, %v2958
        %v3079 = vpack.c.b16 %v2965, %v2959
        %v3080 = vpack.c.b16 %v2966, %v2960
        %v3081 = vpack.c.b16 %v2967, %v2961
        %v3082 = vpack.c.b16 %v2968, %v2962
        %v3083 = vpack.c.b16 %v2975, %v2969
        %v3084 = vpack.c.b16 %v2976, %v2970
        %v3085 = vpack.c.b16 %v2977, %v2971
        %v3086 = vpack.c.b16 %v2978, %v2972
        %v3087 = vpack.c.b16 %v2979, %v2973
        %v3088 = vpack.c.b16 %v2980, %v2974
        %v3089 = vpack.c.b16 %v2987, %v2981
        %v3090 = vpack.c.b16 %v2988, %v2982
        %v3091 = vpack.c.b16 %v2989, %v2983
        %v3092 = vpack.c.b16 %v2990, %v2984
        %v3093 = vpack.c.b16 %v2991, %v2985
        %v3094 = vpack.c.b16 %v2992, %v2986
        %v3095 = vpack.c.b16 %v2999, %v2993
        %v3096 = vpack.c.b16 %v3000, %v2994
        %v3097 = vpack.c.b16 %v3001, %v2995
        %v3098 = vpack.c.b16 %v3002, %v2996
        %v3099 = vpack.c.b16 %v3003, %v2997
        %v3100 = vpack.c.b16 %v3004, %v2998
        %v3101 = vpack.c.b16 %v3011, %v3005
        %v3102 = vpack.c.b16 %v3012, %v3006
        %v3103 = vpack.c.b16 %v3013, %v3007
        %v3104 = vpack.c.b16 %v3014, %v3008
        %v3105 = vpack.c.b16 %v3015, %v3009
        %v3106 = vpack.c.b16 %v3016, %v3010
        %v3107 = vpack.c.b16 %v3023, %v3017
        %v3108 = vpack.c.b16 %v3024, %v3018
        %v3109 = vpack.c.b16 %v3025, %v3019
        %v3110 = vpack.c.b16 %v3026, %v3020
        %v3111 = vpack.c.b16 %v3027, %v3021
        %v3112 = vpack.c.b16 %v3028, %v3022
        %v3113 = vpack.c.b16 %v3035, %v3029
        %v3114 = vpack.c.b16 %v3036, %v3030
        %v3115 = vpack.c.b16 %v3037, %v3031
        %v3116 = vpack.c.b16 %v3038, %v3032
        %v3117 = vpack.c.b16 %v3039, %v3033
        %v3118 = vpack.c.b16 %v3040, %v3034
        %v3119 = vpack.c.b16 %v3047, %v3041
        %v3120 = vpack.c.b16 %v3048, %v3042
        %v3121 = vpack.c.b16 %v3049, %v3043
        %v3122 = vpack.c.b16 %v3050, %v3044
        %v3123 = vpack.c.b16 %v3051, %v3045
        %v3124 = vpack.c.b16 %v3052, %v3046
        %v3293 = vunpack.c.l.b16 %v2729
        %v3294 = vunpack.c.h.b16 %v2729
        %v3295 = vunpack.c.l.b16 %v2730
        %v3296 = vunpack.c.h.b16 %v2730
        %v3297 = vunpack.c.l.b16 %v2731
        %v3298 = vunpack.c.h.b16 %v2731
        %v3299 = vunpack.c.l.b16 %v2732
        %v3300 = vunpack.c.h.b16 %v2732
        %v3301 = vunpack.c.l.b16 %v2733
        %v3302 = vunpack.c.h.b16 %v2733
        %v3303 = vunpack.c.l.b16 %v2734
        %v3304 = vunpack.c.h.b16 %v2734
        %v3305 = vunpack.c.l.b16 %v2735
        %v3306 = vunpack.c.h.b16 %v2735
        %v3307 = vunpack.c.l.b16 %v2736
        %v3308 = vunpack.c.h.b16 %v2736
        %v3309 = vunpack.c.l.b16 %v2737
        %v3310 = vunpack.c.h.b16 %v2737
        %v3311 = vunpack.c.l.b16 %v2738
        %v3312 = vunpack.c.h.b16 %v2738
        %v3313 = vunpack.c.l.b16 %v2739
        %v3314 = vunpack.c.h.b16 %v2739
        %v3315 = vunpack.c.l.b16 %v2740
        %v3316 = vunpack.c.h.b16 %v2740
        %v3317 = vunpack.c.l.b16 %v2741
        %v3318 = vunpack.c.h.b16 %v2741
        %v3319 = vunpack.c.l.b16 %v2742
        %v3320 = vunpack.c.h.b16 %v2742
        %v3321 = vunpack.c.l.b16 %v2743
        %v3322 = vunpack.c.h.b16 %v2743
        %v3323 = vunpack.c.l.b16 %v2744
        %v3324 = vunpack.c.h.b16 %v2744
        %v3325 = vunpack.c.l.b16 %v2745
        %v3326 = vunpack.c.h.b16 %v2745
        %v3327 = vunpack.c.l.b16 %v2746
        %v3328 = vunpack.c.h.b16 %v2746
        %v3329 = vunpack.c.l.b16 %v2747
        %v3330 = vunpack.c.h.b16 %v2747
        %v3331 = vunpack.c.l.b16 %v2748
        %v3332 = vunpack.c.h.b16 %v2748
        %v3333 = vunpack.c.l.b16 %v2749
        %v3334 = vunpack.c.h.b16 %v2749
        %v3335 = vunpack.c.l.b16 %v2750
        %v3336 = vunpack.c.h.b16 %v2750
        %v3337 = vunpack.c.l.b16 %v2751
        %v3338 = vunpack.c.h.b16 %v2751
        %v3339 = vunpack.c.l.b16 %v2752
        %v3340 = vunpack.c.h.b16 %v2752
        %v3341 = vunpack.c.l.b16 %v2753
        %v3342 = vunpack.c.h.b16 %v2753
        %v3343 = vunpack.c.l.b16 %v2754
        %v3344 = vunpack.c.h.b16 %v2754
        %v3345 = vunpack.c.l.b16 %v2755
        %v3346 = vunpack.c.h.b16 %v2755
        %v3347 = vunpack.c.l.b16 %v2756
        %v3348 = vunpack.c.h.b16 %v2756
        %v3349 = vunpack.c.l.b16 %v2757
        %v3350 = vunpack.c.h.b16 %v2757
        %v3351 = vunpack.c.l.b16 %v2758
        %v3352 = vunpack.c.h.b16 %v2758
        %v3353 = vunpack.c.l.b16 %v2759
        %v3354 = vunpack.c.h.b16 %v2759
        %v3355 = vunpack.c.l.b16 %v2760
        %v3356 = vunpack.c.h.b16 %v2760
        %v3357 = vunpack.c.l.b16 %v2761
        %v3358 = vunpack.c.h.b16 %v2761
        %v3359 = vunpack.c.l.b16 %v2762
        %v3360 = vunpack.c.h.b16 %v2762
        %v3361 = vunpack.c.l.b16 %v2763
        %v3362 = vunpack.c.h.b16 %v2763
        %v3363 = vunpack.c.l.b16 %v2764
        %v3364 = vunpack.c.h.b16 %v2764
        %v3365 = vunpack.c.l.b16 %v2765
        %v3366 = vunpack.c.h.b16 %v2765
        %v3367 = vunpack.c.l.b16 %v2766
        %v3368 = vunpack.c.h.b16 %v2766
        %v3369 = vunpack.c.l.b16 %v2767
        %v3370 = vunpack.c.h.b16 %v2767
        %v3371 = vunpack.c.l.b16 %v2768
        %v3372 = vunpack.c.h.b16 %v2768
        %v3373 = vunpack.c.l.b16 %v2769
        %v3374 = vunpack.c.h.b16 %v2769
        %v3375 = vunpack.c.l.b16 %v2770
        %v3376 = vunpack.c.h.b16 %v2770
        %v3377 = vunpack.c.l.b16 %v2771
        %v3378 = vunpack.c.h.b16 %v2771
        %v3379 = vunpack.c.l.b16 %v2772
        %v3380 = vunpack.c.h.b16 %v2772
        %v3381 = vunpack.c.l.b16 %v2773
        %v3382 = vunpack.c.h.b16 %v2773
        %v3383 = vunpack.c.l.b16 %v2774
        %v3384 = vunpack.c.h.b16 %v2774
        %v3385 = vunpack.c.l.b16 %v2775
        %v3386 = vunpack.c.h.b16 %v2775
        %v3387 = vunpack.c.l.b16 %v2776
        %v3388 = vunpack.c.h.b16 %v2776
        %v3389 = vunpack.c.l.b16 %v2777
        %v3390 = vunpack.c.h.b16 %v2777
        %v3391 = vunpack.c.l.b16 %v2778
        %v3392 = vunpack.c.h.b16 %v2778
        %v3393 = vunpack.c.l.b16 %v2779
        %v3394 = vunpack.c.h.b16 %v2779
        %v3395 = vunpack.c.l.b16 %v2780
        %v3396 = vunpack.c.h.b16 %v2780
        %v3397 = vunpack.c.l.b16 %v2781
        %v3398 = vunpack.c.h.b16 %v2781
        %v3399 = vunpack.c.l.b16 %v2782
        %v3400 = vunpack.c.h.b16 %v2782
        %v3401 = vunpack.c.l.b16 %v2783
        %v3402 = vunpack.c.h.b16 %v2783
        %v3403 = vunpack.c.l.b16 %v2784
        %v3404 = vunpack.c.h.b16 %v2784
        %v3405 = vunpack.c.l.b16 %v2785
        %v3406 = vunpack.c.h.b16 %v2785
        %v3407 = vunpack.c.l.b16 %v2786
        %v3408 = vunpack.c.h.b16 %v2786
        %v3409 = vunpack.c.l.b16 %v2787
        %v3410 = vunpack.c.h.b16 %v2787
        %v3411 = vunpack.c.l.b16 %v2788
        %v3412 = vunpack.c.h.b16 %v2788
        %v3413 = vunpack.c.l.b16 %v2789
        %v3414 = vunpack.c.h.b16 %v2789
        %v3415 = vunpack.c.l.b16 %v2790
        %v3416 = vunpack.c.h.b16 %v2790
        %v3417 = vunpack.c.l.b16 %v2791
        %v3418 = vunpack.c.h.b16 %v2791
        %v3419 = vunpack.c.l.b16 %v2792
        %v3420 = vunpack.c.h.b16 %v2792
        %v3421 = vunpack.c.l.b16 %v2793
        %v3422 = vunpack.c.h.b16 %v2793
        %v3423 = vunpack.c.l.b16 %v2794
        %v3424 = vunpack.c.h.b16 %v2794
        %v3425 = vunpack.c.l.b16 %v2795
        %v3426 = vunpack.c.h.b16 %v2795
        %v3427 = vunpack.c.l.b16 %v2796
        %v3428 = vunpack.c.h.b16 %v2796
        %v3429 = vunpack.c.l.b16 %v2797
        %v3430 = vunpack.c.h.b16 %v2797
        %v3431 = vunpack.c.l.b16 %v2798
        %v3432 = vunpack.c.h.b16 %v2798
        %v3433 = vunpack.c.l.b16 %v2799
        %v3434 = vunpack.c.h.b16 %v2799
        %v3435 = vunpack.c.l.b16 %v2800
        %v3436 = vunpack.c.h.b16 %v2800
        %v3437 = vunpack.c.l.b16 %v2801
        %v3438 = vunpack.c.h.b16 %v2801
        %v3439 = vunpack.c.l.b16 %v2802
        %v3440 = vunpack.c.h.b16 %v2802
        %v3441 = vunpack.c.l.b16 %v2803
        %v3442 = vunpack.c.h.b16 %v2803
        %v3443 = vunpack.c.l.b16 %v2804
        %v3444 = vunpack.c.h.b16 %v2804
        %v3445 = vunpack.c.l.b16 %v2805
        %v3446 = vunpack.c.h.b16 %v2805
        %v3447 = vunpack.c.l.b16 %v2806
        %v3448 = vunpack.c.h.b16 %v2806
        %v3449 = vunpack.c.l.b16 %v2807
        %v3450 = vunpack.c.h.b16 %v2807
        %v3451 = vunpack.c.l.b16 %v2808
        %v3452 = vunpack.c.h.b16 %v2808
        %v3453 = vunpack.c.l.b16 %v2809
        %v3454 = vunpack.c.h.b16 %v2809
        %v3455 = vunpack.c.l.b16 %v2810
        %v3456 = vunpack.c.h.b16 %v2810
        %v3457 = vunpack.c.l.b16 %v2811
        %v3458 = vunpack.c.h.b16 %v2811
        %v3459 = vunpack.c.l.b16 %v2812
        %v3460 = vunpack.c.h.b16 %v2812
        %v3461 = vunpack.c.l.b16 %v2813
        %v3462 = vunpack.c.h.b16 %v2813
        %v3463 = vunpack.c.l.b16 %v2814
        %v3464 = vunpack.c.h.b16 %v2814
        %v3465 = vunpack.c.l.b16 %v2815
        %v3466 = vunpack.c.h.b16 %v2815
        %v3467 = vunpack.c.l.b16 %v2816
        %v3468 = vunpack.c.h.b16 %v2816
        %v3469 = vunpack.c.l.b16 %v2817
        %v3470 = vunpack.c.h.b16 %v2817
        %v3471 = vunpack.c.l.b16 %v2818
        %v3472 = vunpack.c.h.b16 %v2818
        %v3473 = vunpack.c.l.b16 %v2819
        %v3474 = vunpack.c.h.b16 %v2819
        %v3475 = vunpack.c.l.b16 %v2820
        %v3476 = vunpack.c.h.b16 %v2820
        %v3477 = vunpack.c.l.b16 %v2821
        %v3478 = vunpack.c.h.b16 %v2821
        %v3479 = vunpack.c.l.b16 %v2822
        %v3480 = vunpack.c.h.b16 %v2822
        %v3481 = vunpack.c.l.b16 %v2823
        %v3482 = vunpack.c.h.b16 %v2823
        %v3483 = vunpack.c.l.b16 %v2824
        %v3484 = vunpack.c.h.b16 %v2824
        %v3485 = vpack.c.b16 %v3295, %v3293
        %v3486 = vpack.c.b16 %v3296, %v3294
        %v3487 = vpack.c.b16 %v3299, %v3297
        %v3488 = vpack.c.b16 %v3300, %v3298
        %v3489 = vpack.c.b16 %v3303, %v3301
        %v3490 = vpack.c.b16 %v3304, %v3302
        %v3491 = vpack.c.b16 %v3307, %v3305
        %v3492 = vpack.c.b16 %v3308, %v3306
        %v3493 = vpack.c.b16 %v3311, %v3309
        %v3494 = vpack.c.b16 %v3312, %v3310
        %v3495 = vpack.c.b16 %v3315, %v3313
        %v3496 = vpack.c.b16 %v3316, %v3314
        %v3497 = vpack.c.b16 %v3319, %v3317
        %v3498 = vpack.c.b16 %v3320, %v3318
        %v3499 = vpack.c.b16 %v3323, %v3321
        %v3500 = vpack.c.b16 %v3324, %v3322
        %v3501 = vpack.c.b16 %v3327, %v3325
        %v3502 = vpack.c.b16 %v3328, %v3326
        %v3503 = vpack.c.b16 %v3331, %v3329
        %v3504 = vpack.c.b16 %v3332, %v3330
        %v3505 = vpack.c.b16 %v3335, %v3333
        %v3506 = vpack.c.b16 %v3336, %v3334
        %v3507 = vpack.c.b16 %v3339, %v3337
        %v3508 = vpack.c.b16 %v3340, %v3338
        %v3509 = vpack.c.b16 %v3343, %v3341
        %v3510 = vpack.c.b16 %v3344, %v3342
        %v3511 = vpack.c.b16 %v3347, %v3345
        %v3512 = vpack.c.b16 %v3348, %v3346
        %v3513 = vpack.c.b16 %v3351, %v3349
        %v3514 = vpack.c.b16 %v3352, %v3350
        %v3515 = vpack.c.b16 %v3355, %v3353
        %v3516 = vpack.c.b16 %v3356, %v3354
        %v3517 = vpack.c.b16 %v3359, %v3357
        %v3518 = vpack.c.b16 %v3360, %v3358
        %v3519 = vpack.c.b16 %v3363, %v3361
        %v3520 = vpack.c.b16 %v3364, %v3362
        %v3521 = vpack.c.b16 %v3367, %v3365
        %v3522 = vpack.c.b16 %v3368, %v3366
        %v3523 = vpack.c.b16 %v3371, %v3369
        %v3524 = vpack.c.b16 %v3372, %v3370
        %v3525 = vpack.c.b16 %v3375, %v3373
        %v3526 = vpack.c.b16 %v3376, %v3374
        %v3527 = vpack.c.b16 %v3379, %v3377
        %v3528 = vpack.c.b16 %v3380, %v3378
        %v3529 = vpack.c.b16 %v3383, %v3381
        %v3530 = vpack.c.b16 %v3384, %v3382
        %v3531 = vpack.c.b16 %v3387, %v3385
        %v3532 = vpack.c.b16 %v3388, %v3386
        %v3533 = vpack.c.b16 %v3391, %v3389
        %v3534 = vpack.c.b16 %v3392, %v3390
        %v3535 = vpack.c.b16 %v3395, %v3393
        %v3536 = vpack.c.b16 %v3396, %v3394
        %v3537 = vpack.c.b16 %v3399, %v3397
        %v3538 = vpack.c.b16 %v3400, %v3398
        %v3539 = vpack.c.b16 %v3403, %v3401
        %v3540 = vpack.c.b16 %v3404, %v3402
        %v3541 = vpack.c.b16 %v3407, %v3405
        %v3542 = vpack.c.b16 %v3408, %v3406
        %v3543 = vpack.c.b16 %v3411, %v3409
        %v3544 = vpack.c.b16 %v3412, %v3410
        %v3545 = vpack.c.b16 %v3415, %v3413
        %v3546 = vpack.c.b16 %v3416, %v3414
        %v3547 = vpack.c.b16 %v3419, %v3417
        %v3548 = vpack.c.b16 %v3420, %v3418
        %v3549 = vpack.c.b16 %v3423, %v3421
        %v3550 = vpack.c.b16 %v3424, %v3422
        %v3551 = vpack.c.b16 %v3427, %v3425
        %v3552 = vpack.c.b16 %v3428, %v3426
        %v3553 = vpack.c.b16 %v3431, %v3429
        %v3554 = vpack.c.b16 %v3432, %v3430
        %v3555 = vpack.c.b16 %v3435, %v3433
        %v3556 = vpack.c.b16 %v3436, %v3434
        %v3557 = vpack.c.b16 %v3439, %v3437
        %v3558 = vpack.c.b16 %v3440, %v3438
        %v3559 = vpack.c.b16 %v3443, %v3441
        %v3560 = vpack.c.b16 %v3444, %v3442
        %v3561 = vpack.c.b16 %v3447, %v3445
        %v3562 = vpack.c.b16 %v3448, %v3446
        %v3563 = vpack.c.b16 %v3451, %v3449
        %v3564 = vpack.c.b16 %v3452, %v3450
        %v3565 = vpack.c.b16 %v3455, %v3453
        %v3566 = vpack.c.b16 %v3456, %v3454
        %v3567 = vpack.c.b16 %v3459, %v3457
        %v3568 = vpack.c.b16 %v3460, %v3458
        %v3569 = vpack.c.b16 %v3463, %v3461
        %v3570 = vpack.c.b16 %v3464, %v3462
        %v3571 = vpack.c.b16 %v3467, %v3465
        %v3572 = vpack.c.b16 %v3468, %v3466
        %v3573 = vpack.c.b16 %v3471, %v3469
        %v3574 = vpack.c.b16 %v3472, %v3470
        %v3575 = vpack.c.b16 %v3475, %v3473
        %v3576 = vpack.c.b16 %v3476, %v3474
        %v3577 = vpack.c.b16 %v3479, %v3477
        %v3578 = vpack.c.b16 %v3480, %v3478
        %v3579 = vpack.c.b16 %v3483, %v3481
        %v3580 = vpack.c.b16 %v3484, %v3482
        %3677 = vmatprep.subr.bf16.mxu0 %v3500
        %3678 = vmatpush1.bf16.msra.mxu0 %v3499
        %3679 = vmatprep.subr.bf16.mxu0 %v3498
        %3680 = vmatpush1.bf16.msra.mxu0 %v3497
        %3681 = vmatprep.subr.bf16.mxu0 %v3496
        %3682 = vmatpush1.bf16.msra.mxu0 %v3495
        %3683 = vmatprep.subr.bf16.mxu0 %v3494
        %3684 = vmatpush1.bf16.msra.mxu0 %v3493
        %3685 = vmatprep.subr.bf16.mxu0 %v3492
        %3686 = vmatpush1.bf16.msra.mxu0 %v3491
        %3687 = vmatprep.subr.bf16.mxu0 %v3490
        %3688 = vmatpush1.bf16.msra.mxu0 %v3489
        %3689 = vmatprep.subr.bf16.mxu0 %v3488
        %3690 = vmatpush1.bf16.msra.mxu0 %v3487
        %3691 = vmatprep.subr.bf16.mxu0 %v3486
        %3692 = vmatpush1.bf16.msra.mxu0 %v3485
        %3693 = vmatprep.subr.bf16.mxu0 %v3516
        %3694 = vmatpush2.bf16.msra.mxu0 %v3515
        %3695 = vmatprep.subr.bf16.mxu0 %v3514
        %3696 = vmatpush2.bf16.msra.mxu0 %v3513
        %3697 = vmatprep.subr.bf16.mxu0 %v3512
        %3698 = vmatpush2.bf16.msra.mxu0 %v3511
        %3699 = vmatprep.subr.bf16.mxu0 %v3510
        %3700 = vmatpush2.bf16.msra.mxu0 %v3509
        %3701 = vmatprep.subr.bf16.mxu0 %v3508
        %3702 = vmatpush2.bf16.msra.mxu0 %v3507
        %3703 = vmatprep.subr.bf16.mxu0 %v3506
        %3704 = vmatpush2.bf16.msra.mxu0 %v3505
        %3705 = vmatprep.subr.bf16.mxu0 %v3504
        %3706 = vmatpush2.bf16.msra.mxu0 %v3503
        %3707 = vmatprep.subr.bf16.mxu0 %v3502
        %3708 = vmatpush2.bf16.msra.mxu0 %v3501
        %3709 = vmatprep.mubr.bf16.mxu0 %v3054
        %3710 = vmatmul.mubr.bf16.gmra.mxu0 %v3053
        %v3711 = vpop.f32.mrf.mxu0
        %v3712 = vadd.f32 %v2830, %v3711
        %v3713 = vpop.f32.mrf.mxu0
        %v3714 = vadd.f32 %v2834, %v3713
        %v3715 = vpop.f32.mrf.mxu0
        %v3716 = vadd.f32 %v2830, %v3715
        %v3717 = vpop.f32.mrf.mxu0
        %v3718 = vadd.f32 %v2834, %v3717
        %3719 = vmatprep.mubr.bf16.mxu0 %v3060
        %3720 = vmatmul.mubr.bf16.gmra.mxu0 %v3059
        %v3721 = vpop.f32.mrf.mxu0
        %v3722 = vadd.f32 %v2830, %v3721
        %v3723 = vpop.f32.mrf.mxu0
        %v3724 = vadd.f32 %v2834, %v3723
        %v3725 = vpop.f32.mrf.mxu0
        %v3726 = vadd.f32 %v2830, %v3725
        %v3727 = vpop.f32.mrf.mxu0
        %v3728 = vadd.f32 %v2834, %v3727
        %3729 = vmatprep.mubr.bf16.mxu0 %v3066
        %3730 = vmatmul.mubr.bf16.gmra.mxu0 %v3065
        %v3731 = vpop.f32.mrf.mxu0
        %v3732 = vadd.f32 %v2830, %v3731
        %v3733 = vpop.f32.mrf.mxu0
        %v3734 = vadd.f32 %v2834, %v3733
        %v3735 = vpop.f32.mrf.mxu0
        %v3736 = vadd.f32 %v2830, %v3735
        %v3737 = vpop.f32.mrf.mxu0
        %v3738 = vadd.f32 %v2834, %v3737
        %3739 = vmatprep.mubr.bf16.mxu0 %v3072
        %3740 = vmatmul.mubr.bf16.gmra.mxu0 %v3071
        %v3741 = vpop.f32.mrf.mxu0
        %v3742 = vadd.f32 %v2830, %v3741
        %v3743 = vpop.f32.mrf.mxu0
        %v3744 = vadd.f32 %v2834, %v3743
        %v3745 = vpop.f32.mrf.mxu0
        %v3746 = vadd.f32 %v2830, %v3745
        %v3747 = vpop.f32.mrf.mxu0
        %v3748 = vadd.f32 %v2834, %v3747
        %3749 = vmatprep.mubr.bf16.mxu0 %v3078
        %3750 = vmatmul.mubr.bf16.gmra.mxu0 %v3077
        %v3751 = vpop.f32.mrf.mxu0
        %v3752 = vadd.f32 %v2830, %v3751
        %v3753 = vpop.f32.mrf.mxu0
        %v3754 = vadd.f32 %v2834, %v3753
        %v3755 = vpop.f32.mrf.mxu0
        %v3756 = vadd.f32 %v2830, %v3755
        %v3757 = vpop.f32.mrf.mxu0
        %v3758 = vadd.f32 %v2834, %v3757
        %3759 = vmatprep.mubr.bf16.mxu0 %v3084
        %3760 = vmatmul.mubr.bf16.gmra.mxu0 %v3083
        %v3761 = vpop.f32.mrf.mxu0
        %v3762 = vadd.f32 %v2830, %v3761
        %v3763 = vpop.f32.mrf.mxu0
        %v3764 = vadd.f32 %v2834, %v3763
        %v3765 = vpop.f32.mrf.mxu0
        %v3766 = vadd.f32 %v2830, %v3765
        %v3767 = vpop.f32.mrf.mxu0
        %v3768 = vadd.f32 %v2834, %v3767
        %3769 = vmatprep.mubr.bf16.mxu0 %v3090
        %3770 = vmatmul.mubr.bf16.gmra.mxu0 %v3089
        %v3771 = vpop.f32.mrf.mxu0
        %v3772 = vadd.f32 %v2830, %v3771
        %v3773 = vpop.f32.mrf.mxu0
        %v3774 = vadd.f32 %v2834, %v3773
        %v3775 = vpop.f32.mrf.mxu0
        %v3776 = vadd.f32 %v2830, %v3775
        %v3777 = vpop.f32.mrf.mxu0
        %v3778 = vadd.f32 %v2834, %v3777
        %3779 = vmatprep.mubr.bf16.mxu0 %v3096
        %3780 = vmatmul.mubr.bf16.gmra.mxu0 %v3095
        %v3781 = vpop.f32.mrf.mxu0
        %v3782 = vadd.f32 %v2830, %v3781
        %v3783 = vpop.f32.mrf.mxu0
        %v3784 = vadd.f32 %v2834, %v3783
        %v3785 = vpop.f32.mrf.mxu0
        %v3786 = vadd.f32 %v2830, %v3785
        %v3787 = vpop.f32.mrf.mxu0
        %v3788 = vadd.f32 %v2834, %v3787
        %3789 = vmatprep.mubr.bf16.mxu0 %v3102
        %3790 = vmatmul.mubr.bf16.gmra.mxu0 %v3101
        %v3791 = vpop.f32.mrf.mxu0
        %v3792 = vadd.f32 %v2830, %v3791
        %v3793 = vpop.f32.mrf.mxu0
        %v3794 = vadd.f32 %v2834, %v3793
        %v3795 = vpop.f32.mrf.mxu0
        %v3796 = vadd.f32 %v2830, %v3795
        %v3797 = vpop.f32.mrf.mxu0
        %v3798 = vadd.f32 %v2834, %v3797
        %3799 = vmatprep.mubr.bf16.mxu0 %v3108
        %3800 = vmatmul.mubr.bf16.gmra.mxu0 %v3107
        %v3801 = vpop.f32.mrf.mxu0
        %v3802 = vadd.f32 %v2830, %v3801
        %v3803 = vpop.f32.mrf.mxu0
        %v3804 = vadd.f32 %v2834, %v3803
        %v3805 = vpop.f32.mrf.mxu0
        %v3806 = vadd.f32 %v2830, %v3805
        %v3807 = vpop.f32.mrf.mxu0
        %v3808 = vadd.f32 %v2834, %v3807
        %3809 = vmatprep.mubr.bf16.mxu0 %v3114
        %3810 = vmatmul.mubr.bf16.gmra.mxu0 %v3113
        %v3811 = vpop.f32.mrf.mxu0
        %v3812 = vadd.f32 %v2830, %v3811
        %v3813 = vpop.f32.mrf.mxu0
        %v3814 = vadd.f32 %v2834, %v3813
        %v3815 = vpop.f32.mrf.mxu0
        %v3816 = vadd.f32 %v2830, %v3815
        %v3817 = vpop.f32.mrf.mxu0
        %v3818 = vadd.f32 %v2834, %v3817
        %3819 = vmatprep.mubr.bf16.mxu0 %v3120
        %3820 = vmatmul.mubr.bf16.gmra.mxu0 %v3119
        %v3821 = vpop.f32.mrf.mxu0
        %v3822 = vadd.f32 %v2830, %v3821
        %v3823 = vpop.f32.mrf.mxu0
        %v3824 = vadd.f32 %v2834, %v3823
        %v3825 = vpop.f32.mrf.mxu0
        %v3826 = vadd.f32 %v2830, %v3825
        %v3827 = vpop.f32.mrf.mxu0
        %v3828 = vadd.f32 %v2834, %v3827
        %3829 = vdwg.mxu0
        %3830 = vmatprep.subr.bf16.mxu0 %v3532
        %3831 = vmatpush1.bf16.msra.mxu0 %v3531
        %3832 = vmatprep.subr.bf16.mxu0 %v3530
        %3833 = vmatpush1.bf16.msra.mxu0 %v3529
        %3834 = vmatprep.subr.bf16.mxu0 %v3528
        %3835 = vmatpush1.bf16.msra.mxu0 %v3527
        %3836 = vmatprep.subr.bf16.mxu0 %v3526
        %3837 = vmatpush1.bf16.msra.mxu0 %v3525
        %3838 = vmatprep.subr.bf16.mxu0 %v3524
        %3839 = vmatpush1.bf16.msra.mxu0 %v3523
        %3840 = vmatprep.subr.bf16.mxu0 %v3522
        %3841 = vmatpush1.bf16.msra.mxu0 %v3521
        %3842 = vmatprep.subr.bf16.mxu0 %v3520
        %3843 = vmatpush1.bf16.msra.mxu0 %v3519
        %3844 = vmatprep.subr.bf16.mxu0 %v3518
        %3845 = vmatpush1.bf16.msra.mxu0 %v3517
        %3846 = vmatprep.subr.bf16.mxu0 %v3548
        %3847 = vmatpush2.bf16.msra.mxu0 %v3547
        %3848 = vmatprep.subr.bf16.mxu0 %v3546
        %3849 = vmatpush2.bf16.msra.mxu0 %v3545
        %3850 = vmatprep.subr.bf16.mxu0 %v3544
        %3851 = vmatpush2.bf16.msra.mxu0 %v3543
        %3852 = vmatprep.subr.bf16.mxu0 %v3542
        %3853 = vmatpush2.bf16.msra.mxu0 %v3541
        %3854 = vmatprep.subr.bf16.mxu0 %v3540
        %3855 = vmatpush2.bf16.msra.mxu0 %v3539
        %3856 = vmatprep.subr.bf16.mxu0 %v3538
        %3857 = vmatpush2.bf16.msra.mxu0 %v3537
        %3858 = vmatprep.subr.bf16.mxu0 %v3536
        %3859 = vmatpush2.bf16.msra.mxu0 %v3535
        %3860 = vmatprep.subr.bf16.mxu0 %v3534
        %3861 = vmatpush2.bf16.msra.mxu0 %v3533
        %3862 = vmatprep.mubr.bf16.mxu0 %v3056
        %3863 = vmatmul.mubr.bf16.gmra.mxu0 %v3055
        %v3864 = vpop.f32.mrf.mxu0
        %v3865 = vadd.f32 %v3712, %v3864
        %v3866 = vpop.f32.mrf.mxu0
        %v3867 = vadd.f32 %v3714, %v3866
        %v3868 = vpop.f32.mrf.mxu0
        %v3869 = vadd.f32 %v3716, %v3868
        %v3870 = vpop.f32.mrf.mxu0
        %v3871 = vadd.f32 %v3718, %v3870
        %3872 = vmatprep.mubr.bf16.mxu0 %v3062
        %3873 = vmatmul.mubr.bf16.gmra.mxu0 %v3061
        %v3874 = vpop.f32.mrf.mxu0
        %v3875 = vadd.f32 %v3722, %v3874
        %v3876 = vpop.f32.mrf.mxu0
        %v3877 = vadd.f32 %v3724, %v3876
        %v3878 = vpop.f32.mrf.mxu0
        %v3879 = vadd.f32 %v3726, %v3878
        %v3880 = vpop.f32.mrf.mxu0
        %v3881 = vadd.f32 %v3728, %v3880
        %3882 = vmatprep.mubr.bf16.mxu0 %v3068
        %3883 = vmatmul.mubr.bf16.gmra.mxu0 %v3067
        %v3884 = vpop.f32.mrf.mxu0
        %v3885 = vadd.f32 %v3732, %v3884
        %v3886 = vpop.f32.mrf.mxu0
        %v3887 = vadd.f32 %v3734, %v3886
        %v3888 = vpop.f32.mrf.mxu0
        %v3889 = vadd.f32 %v3736, %v3888
        %v3890 = vpop.f32.mrf.mxu0
        %v3891 = vadd.f32 %v3738, %v3890
        %3892 = vmatprep.mubr.bf16.mxu0 %v3074
        %3893 = vmatmul.mubr.bf16.gmra.mxu0 %v3073
        %v3894 = vpop.f32.mrf.mxu0
        %v3895 = vadd.f32 %v3742, %v3894
        %v3896 = vpop.f32.mrf.mxu0
        %v3897 = vadd.f32 %v3744, %v3896
        %v3898 = vpop.f32.mrf.mxu0
        %v3899 = vadd.f32 %v3746, %v3898
        %v3900 = vpop.f32.mrf.mxu0
        %v3901 = vadd.f32 %v3748, %v3900
        %3902 = vmatprep.mubr.bf16.mxu0 %v3080
        %3903 = vmatmul.mubr.bf16.gmra.mxu0 %v3079
        %v3904 = vpop.f32.mrf.mxu0
        %v3905 = vadd.f32 %v3752, %v3904
        %v3906 = vpop.f32.mrf.mxu0
        %v3907 = vadd.f32 %v3754, %v3906
        %v3908 = vpop.f32.mrf.mxu0
        %v3909 = vadd.f32 %v3756, %v3908
        %v3910 = vpop.f32.mrf.mxu0
        %v3911 = vadd.f32 %v3758, %v3910
        %3912 = vmatprep.mubr.bf16.mxu0 %v3086
        %3913 = vmatmul.mubr.bf16.gmra.mxu0 %v3085
        %v3914 = vpop.f32.mrf.mxu0
        %v3915 = vadd.f32 %v3762, %v3914
        %v3916 = vpop.f32.mrf.mxu0
        %v3917 = vadd.f32 %v3764, %v3916
        %v3918 = vpop.f32.mrf.mxu0
        %v3919 = vadd.f32 %v3766, %v3918
        %v3920 = vpop.f32.mrf.mxu0
        %v3921 = vadd.f32 %v3768, %v3920
        %3922 = vmatprep.mubr.bf16.mxu0 %v3092
        %3923 = vmatmul.mubr.bf16.gmra.mxu0 %v3091
        %v3924 = vpop.f32.mrf.mxu0
        %v3925 = vadd.f32 %v3772, %v3924
        %v3926 = vpop.f32.mrf.mxu0
        %v3927 = vadd.f32 %v3774, %v3926
        %v3928 = vpop.f32.mrf.mxu0
        %v3929 = vadd.f32 %v3776, %v3928
        %v3930 = vpop.f32.mrf.mxu0
        %v3931 = vadd.f32 %v3778, %v3930
        %3932 = vmatprep.mubr.bf16.mxu0 %v3098
        %3933 = vmatmul.mubr.bf16.gmra.mxu0 %v3097
        %v3934 = vpop.f32.mrf.mxu0
        %v3935 = vadd.f32 %v3782, %v3934
        %v3936 = vpop.f32.mrf.mxu0
        %v3937 = vadd.f32 %v3784, %v3936
        %v3938 = vpop.f32.mrf.mxu0
        %v3939 = vadd.f32 %v3786, %v3938
        %v3940 = vpop.f32.mrf.mxu0
        %v3941 = vadd.f32 %v3788, %v3940
        %3942 = vmatprep.mubr.bf16.mxu0 %v3104
        %3943 = vmatmul.mubr.bf16.gmra.mxu0 %v3103
        %v3944 = vpop.f32.mrf.mxu0
        %v3945 = vadd.f32 %v3792, %v3944
        %v3946 = vpop.f32.mrf.mxu0
        %v3947 = vadd.f32 %v3794, %v3946
        %v3948 = vpop.f32.mrf.mxu0
        %v3949 = vadd.f32 %v3796, %v3948
        %v3950 = vpop.f32.mrf.mxu0
        %v3951 = vadd.f32 %v3798, %v3950
        %3952 = vmatprep.mubr.bf16.mxu0 %v3110
        %3953 = vmatmul.mubr.bf16.gmra.mxu0 %v3109
        %v3954 = vpop.f32.mrf.mxu0
        %v3955 = vadd.f32 %v3802, %v3954
        %v3956 = vpop.f32.mrf.mxu0
        %v3957 = vadd.f32 %v3804, %v3956
        %v3958 = vpop.f32.mrf.mxu0
        %v3959 = vadd.f32 %v3806, %v3958
        %v3960 = vpop.f32.mrf.mxu0
        %v3961 = vadd.f32 %v3808, %v3960
        %3962 = vmatprep.mubr.bf16.mxu0 %v3116
        %3963 = vmatmul.mubr.bf16.gmra.mxu0 %v3115
        %v3964 = vpop.f32.mrf.mxu0
        %v3965 = vadd.f32 %v3812, %v3964
        %v3966 = vpop.f32.mrf.mxu0
        %v3967 = vadd.f32 %v3814, %v3966
        %v3968 = vpop.f32.mrf.mxu0
        %v3969 = vadd.f32 %v3816, %v3968
        %v3970 = vpop.f32.mrf.mxu0
        %v3971 = vadd.f32 %v3818, %v3970
        %3972 = vmatprep.mubr.bf16.mxu0 %v3122
        %3973 = vmatmul.mubr.bf16.gmra.mxu0 %v3121
        %v3974 = vpop.f32.mrf.mxu0
        %v3975 = vadd.f32 %v3822, %v3974
        %v3976 = vpop.f32.mrf.mxu0
        %v3977 = vadd.f32 %v3824, %v3976
        %v3978 = vpop.f32.mrf.mxu0
        %v3979 = vadd.f32 %v3826, %v3978
        %v3980 = vpop.f32.mrf.mxu0
        %v3981 = vadd.f32 %v3828, %v3980
        %3982 = vdwg.mxu0
        %3983 = vmatprep.subr.bf16.mxu0 %v3564
        %3984 = vmatpush1.bf16.msra.mxu0 %v3563
        %3985 = vmatprep.subr.bf16.mxu0 %v3562
        %3986 = vmatpush1.bf16.msra.mxu0 %v3561
        %3987 = vmatprep.subr.bf16.mxu0 %v3560
        %3988 = vmatpush1.bf16.msra.mxu0 %v3559
        %3989 = vmatprep.subr.bf16.mxu0 %v3558
        %3990 = vmatpush1.bf16.msra.mxu0 %v3557
        %3991 = vmatprep.subr.bf16.mxu0 %v3556
        %3992 = vmatpush1.bf16.msra.mxu0 %v3555
        %3993 = vmatprep.subr.bf16.mxu0 %v3554
        %3994 = vmatpush1.bf16.msra.mxu0 %v3553
        %3995 = vmatprep.subr.bf16.mxu0 %v3552
        %3996 = vmatpush1.bf16.msra.mxu0 %v3551
        %3997 = vmatprep.subr.bf16.mxu0 %v3550
        %3998 = vmatpush1.bf16.msra.mxu0 %v3549
        %3999 = vmatprep.subr.bf16.mxu0 %v3580
        %4000 = vmatpush2.bf16.msra.mxu0 %v3579
        %4001 = vmatprep.subr.bf16.mxu0 %v3578
        %4002 = vmatpush2.bf16.msra.mxu0 %v3577
        %4003 = vmatprep.subr.bf16.mxu0 %v3576
        %4004 = vmatpush2.bf16.msra.mxu0 %v3575
        %4005 = vmatprep.subr.bf16.mxu0 %v3574
        %4006 = vmatpush2.bf16.msra.mxu0 %v3573
        %4007 = vmatprep.subr.bf16.mxu0 %v3572
        %4008 = vmatpush2.bf16.msra.mxu0 %v3571
        %4009 = vmatprep.subr.bf16.mxu0 %v3570
        %4010 = vmatpush2.bf16.msra.mxu0 %v3569
        %4011 = vmatprep.subr.bf16.mxu0 %v3568
        %4012 = vmatpush2.bf16.msra.mxu0 %v3567
        %4013 = vmatprep.subr.bf16.mxu0 %v3566
        %4014 = vmatpush2.bf16.msra.mxu0 %v3565
        %4015 = vmatprep.mubr.bf16.mxu0 %v3058
        %4016 = vmatmul.mubr.bf16.gmra.mxu0 %v3057
        %v4017 = vpop.f32.mrf.mxu0
        %v4018 = vadd.f32 %v3865, %v4017
        %v4019 = vpop.f32.mrf.mxu0
        %v4020 = vadd.f32 %v3867, %v4019
        %v4021 = vpop.f32.mrf.mxu0
        %v4022 = vadd.f32 %v3869, %v4021
        %v4023 = vpop.f32.mrf.mxu0
        %v4024 = vadd.f32 %v3871, %v4023
        %4025 = vmatprep.mubr.bf16.mxu0 %v3064
        %4026 = vmatmul.mubr.bf16.gmra.mxu0 %v3063
        %v4027 = vpop.f32.mrf.mxu0
        %v4028 = vadd.f32 %v3875, %v4027
        %v4029 = vpop.f32.mrf.mxu0
        %v4030 = vadd.f32 %v3877, %v4029
        %v4031 = vpop.f32.mrf.mxu0
        %v4032 = vadd.f32 %v3879, %v4031
        %v4033 = vpop.f32.mrf.mxu0
        %v4034 = vadd.f32 %v3881, %v4033
        %4035 = vmatprep.mubr.bf16.mxu0 %v3070
        %4036 = vmatmul.mubr.bf16.gmra.mxu0 %v3069
        %v4037 = vpop.f32.mrf.mxu0
        %v4038 = vadd.f32 %v3885, %v4037
        %v4039 = vpop.f32.mrf.mxu0
        %v4040 = vadd.f32 %v3887, %v4039
        %v4041 = vpop.f32.mrf.mxu0
        %v4042 = vadd.f32 %v3889, %v4041
        %v4043 = vpop.f32.mrf.mxu0
        %v4044 = vadd.f32 %v3891, %v4043
        %4045 = vmatprep.mubr.bf16.mxu0 %v3076
        %4046 = vmatmul.mubr.bf16.gmra.mxu0 %v3075
        %v4047 = vpop.f32.mrf.mxu0
        %v4048 = vadd.f32 %v3895, %v4047
        %v4049 = vpop.f32.mrf.mxu0
        %v4050 = vadd.f32 %v3897, %v4049
        %v4051 = vpop.f32.mrf.mxu0
        %v4052 = vadd.f32 %v3899, %v4051
        %v4053 = vpop.f32.mrf.mxu0
        %v4054 = vadd.f32 %v3901, %v4053
        %4055 = vmatprep.mubr.bf16.mxu0 %v3082
        %4056 = vmatmul.mubr.bf16.gmra.mxu0 %v3081
        %v4057 = vpop.f32.mrf.mxu0
        %v4058 = vadd.f32 %v3905, %v4057
        %v4059 = vpop.f32.mrf.mxu0
        %v4060 = vadd.f32 %v3907, %v4059
        %v4061 = vpop.f32.mrf.mxu0
        %v4062 = vadd.f32 %v3909, %v4061
        %v4063 = vpop.f32.mrf.mxu0
        %v4064 = vadd.f32 %v3911, %v4063
        %4065 = vmatprep.mubr.bf16.mxu0 %v3088
        %4066 = vmatmul.mubr.bf16.gmra.mxu0 %v3087
        %v4067 = vpop.f32.mrf.mxu0
        %v4068 = vadd.f32 %v3915, %v4067
        %v4069 = vpop.f32.mrf.mxu0
        %v4070 = vadd.f32 %v3917, %v4069
        %v4071 = vpop.f32.mrf.mxu0
        %v4072 = vadd.f32 %v3919, %v4071
        %v4073 = vpop.f32.mrf.mxu0
        %v4074 = vadd.f32 %v3921, %v4073
        %4075 = vmatprep.mubr.bf16.mxu0 %v3094
        %4076 = vmatmul.mubr.bf16.gmra.mxu0 %v3093
        %v4077 = vpop.f32.mrf.mxu0
        %v4078 = vadd.f32 %v3925, %v4077
        %v4079 = vpop.f32.mrf.mxu0
        %v4080 = vadd.f32 %v3927, %v4079
        %v4081 = vpop.f32.mrf.mxu0
        %v4082 = vadd.f32 %v3929, %v4081
        %v4083 = vpop.f32.mrf.mxu0
        %v4084 = vadd.f32 %v3931, %v4083
        %4085 = vmatprep.mubr.bf16.mxu0 %v3100
        %4086 = vmatmul.mubr.bf16.gmra.mxu0 %v3099
        %v4087 = vpop.f32.mrf.mxu0
        %v4088 = vadd.f32 %v3935, %v4087
        %v4089 = vpop.f32.mrf.mxu0
        %v4090 = vadd.f32 %v3937, %v4089
        %v4091 = vpop.f32.mrf.mxu0
        %v4092 = vadd.f32 %v3939, %v4091
        %v4093 = vpop.f32.mrf.mxu0
        %v4094 = vadd.f32 %v3941, %v4093
        %4095 = vmatprep.mubr.bf16.mxu0 %v3106
        %4096 = vmatmul.mubr.bf16.gmra.mxu0 %v3105
        %v4097 = vpop.f32.mrf.mxu0
        %v4098 = vadd.f32 %v3945, %v4097
        %v4099 = vpop.f32.mrf.mxu0
        %v4100 = vadd.f32 %v3947, %v4099
        %v4101 = vpop.f32.mrf.mxu0
        %v4102 = vadd.f32 %v3949, %v4101
        %v4103 = vpop.f32.mrf.mxu0
        %v4104 = vadd.f32 %v3951, %v4103
        %4105 = vmatprep.mubr.bf16.mxu0 %v3112
        %4106 = vmatmul.mubr.bf16.gmra.mxu0 %v3111
        %v4107 = vpop.f32.mrf.mxu0
        %v4108 = vadd.f32 %v3955, %v4107
        %v4109 = vpop.f32.mrf.mxu0
        %v4110 = vadd.f32 %v3957, %v4109
        %v4111 = vpop.f32.mrf.mxu0
        %v4112 = vadd.f32 %v3959, %v4111
        %v4113 = vpop.f32.mrf.mxu0
        %v4114 = vadd.f32 %v3961, %v4113
        %4115 = vmatprep.mubr.bf16.mxu0 %v3118
        %4116 = vmatmul.mubr.bf16.gmra.mxu0 %v3117
        %v4117 = vpop.f32.mrf.mxu0
        %v4118 = vadd.f32 %v3965, %v4117
        %v4119 = vpop.f32.mrf.mxu0
        %v4120 = vadd.f32 %v3967, %v4119
        %v4121 = vpop.f32.mrf.mxu0
        %v4122 = vadd.f32 %v3969, %v4121
        %v4123 = vpop.f32.mrf.mxu0
        %v4124 = vadd.f32 %v3971, %v4123
        %4125 = vmatprep.mubr.bf16.mxu0 %v3124
        %4126 = vmatmul.mubr.bf16.gmra.mxu0 %v3123
        %v4127 = vpop.f32.mrf.mxu0
        %v4128 = vadd.f32 %v3975, %v4127
        %v4129 = vpop.f32.mrf.mxu0
        %v4130 = vadd.f32 %v3977, %v4129
        %v4131 = vpop.f32.mrf.mxu0
        %v4132 = vadd.f32 %v3979, %v4131
        %v4133 = vpop.f32.mrf.mxu0
        %v4134 = vadd.f32 %v3981, %v4133
        %4135 = vdwg.mxu0
        %4136 = vst [vmem:[%s422] sm:$0xff] %v4018
        %4137 = vst [vmem:[%s422 + $0x8] sm:$0xff] %v4020
        %4138 = vst [vmem:[%s422 + $0x10] sm:$0xff] %v4022
        %4139 = vst [vmem:[%s422 + $0x18] sm:$0xff] %v4024
        %4140 = vst [vmem:[%s422 + $0x20] sm:$0xff] %v4028
        %4141 = vst [vmem:[%s422 + $0x28] sm:$0xff] %v4030
        %4142 = vst [vmem:[%s422 + $0x30] sm:$0xff] %v4032
        %4143 = vst [vmem:[%s422 + $0x38] sm:$0xff] %v4034
        %4144 = vst [vmem:[%s422 + $0x40] sm:$0xff] %v4038
        %4145 = vst [vmem:[%s422 + $0x48] sm:$0xff] %v4040
        %4146 = vst [vmem:[%s422 + $0x50] sm:$0xff] %v4042
        %4147 = vst [vmem:[%s422 + $0x58] sm:$0xff] %v4044
        %4148 = vst [vmem:[%s422 + $0x60] sm:$0xff] %v4048
        %4149 = vst [vmem:[%s422 + $0x68] sm:$0xff] %v4050
        %4150 = vst [vmem:[%s422 + $0x70] sm:$0xff] %v4052
        %4151 = vst [vmem:[%s422 + $0x78] sm:$0xff] %v4054
        %4152 = vst [vmem:[%s422 + $0x80] sm:$0xff] %v4058
        %4153 = vst [vmem:[%s422 + $0x88] sm:$0xff] %v4060
        %4154 = vst [vmem:[%s422 + $0x90] sm:$0xff] %v4062
        %4155 = vst [vmem:[%s422 + $0x98] sm:$0xff] %v4064
        %4156 = vst [vmem:[%s422 + $0xa0] sm:$0xff] %v4068
        %4157 = vst [vmem:[%s422 + $0xa8] sm:$0xff] %v4070
        %4158 = vst [vmem:[%s422 + $0xb0] sm:$0xff] %v4072
        %4159 = vst [vmem:[%s422 + $0xb8] sm:$0xff] %v4074
        %4160 = vst [vmem:[%s422 + $0xc0] sm:$0xff] %v4078
        %4161 = vst [vmem:[%s422 + $0xc8] sm:$0xff] %v4080
        %4162 = vst [vmem:[%s422 + $0xd0] sm:$0xff] %v4082
        %4163 = vst [vmem:[%s422 + $0xd8] sm:$0xff] %v4084
        %4164 = vst [vmem:[%s422 + $0xe0] sm:$0xff] %v4088
        %4165 = vst [vmem:[%s422 + $0xe8] sm:$0xff] %v4090
        %4166 = vst [vmem:[%s422 + $0xf0] sm:$0xff] %v4092
        %4167 = vst [vmem:[%s422 + $0xf8] sm:$0xff] %v4094
        %4168 = vst [vmem:[%s422 + $0x100] sm:$0xff] %v4098
        %4169 = vst [vmem:[%s422 + $0x108] sm:$0xff] %v4100
        %4170 = vst [vmem:[%s422 + $0x110] sm:$0xff] %v4102
        %4171 = vst [vmem:[%s422 + $0x118] sm:$0xff] %v4104
        %4172 = vst [vmem:[%s422 + $0x120] sm:$0xff] %v4108
        %4173 = vst [vmem:[%s422 + $0x128] sm:$0xff] %v4110
        %4174 = vst [vmem:[%s422 + $0x130] sm:$0xff] %v4112
        %4175 = vst [vmem:[%s422 + $0x138] sm:$0xff] %v4114
        %4176 = vst [vmem:[%s422 + $0x140] sm:$0xff] %v4118
        %4177 = vst [vmem:[%s422 + $0x148] sm:$0xff] %v4120
        %4178 = vst [vmem:[%s422 + $0x150] sm:$0xff] %v4122
        %4179 = vst [vmem:[%s422 + $0x158] sm:$0xff] %v4124
        %4180 = vst [vmem:[%s422 + $0x160] sm:$0xff] %v4128
        %4181 = vst [vmem:[%s422 + $0x168] sm:$0xff] %v4130
        %4182 = vst [vmem:[%s422 + $0x170] sm:$0xff] %v4132
        %4183 = vst [vmem:[%s422 + $0x178] sm:$0xff] %v4134
        %s4184 = sand.u32 %s195, 1
        %s4185 = scalar_lea.sflag [#allocation5], %s4184
        %s4186 = sand.u32 %s195, 1
        %s4187 = smul.addr %s4186, 384
        %s4188 = scalar_lea.vmem [#allocation13], %s4187
        // Predicated region
        $region73: #{tpu_custom_call.1} parent=43 // pred_check
          %p4189 = pneg %p205
        $region74: #{tpu_custom_call.1} parent=43 // pred_check_branch
          %4191 = sbr.rel (%p4189) target = $region76
        $region75: #{tpu_custom_call.1} parent=43 // pred_region
          %s4192 = smul.u32 24, %s31
          %s4193 = smul.u32 2, %s32
          %s4195 = ssub.s32 6144, 6144
          %4196 = vsyncadd %s4185, %s4195
          %s4197 = smul.addr %s4192, 6
          %s4198 = sadd.s32 %s4193, %s4197
          %s4199 = smul.addr %s4198, 128
          %s4200 = scalar_lea.hbm %s6, %s4199
          %s4201 = sshll.u32 %s4188, 4
          %s4202 = int_to_ptr.vmem [resolvable:$true] %s4201
          %4207 = dma.vmem_to_hbm [thread:$0]  %s4202, 6144, %s4200, %s4185, 256, 768, 16
        $region76: #{tpu_custom_call.1} parent=43 // pred_fallthru
          _
      $region44: #{tpu_custom_call.1} parent=5 // pred_fallthru
        _
      %p4208 = scmp.le.s32.totalorder 2, %s22
      // Predicated region
      $region77: #{tpu_custom_call.1} parent=5 // pred_check
        %p4209 = pneg %p4208
      $region78: #{tpu_custom_call.1} parent=5 // pred_check_branch
        %4211 = sbr.rel (%p4209) target = $region80
      $region79: #{tpu_custom_call.1} parent=5 // pred_region
        %s4212 = ssub.s32 %s22, 2
        // Predicated region
        $region81: #{tpu_custom_call.1} parent=79 // pred_check
          %p4213 = pneg %p211
        $region82: #{tpu_custom_call.1} parent=79 // pred_check_branch
          %4215 = sbr.rel (%p4213) target = $region84
        $region83: #{tpu_custom_call.1} parent=79 // pred_region
          %s4216 = sand.u32 %s196, 1
          %s4217 = scalar_lea.sflag [#allocation5], %s4216
          %s4218 = sand.u32 %s196, 1
          %s4219 = smul.addr %s4218, 384
          %s4220 = scalar_lea.vmem [#allocation13], %s4219
          %4221 = dma.done %s4217, 6144
        $region84: #{tpu_custom_call.1} parent=79 // pred_fallthru
          _
      $region80: #{tpu_custom_call.1} parent=5 // pred_fallthru
        _
    $region6: #{tpu_custom_call.1} parent=1 // loop_footer
      %s26 = sadd.s32 1, %s22
    $region7: #{tpu_custom_call.1} parent=1 // loop_footer_branch
      %21 = sbr.rel target = $region3
    $region8: #{tpu_custom_call.1} parent=1 // loop_exit
      _
    %4222 = vsyncpa [#allocation4], 1
    %s4223 = scalar_lea.sflag [#allocation4], 1
    %4224 = vsyncpa %s4223, 1
    %4225 = vsyncpa [#allocation7], 1
    %s4226 = scalar_lea.sflag [#allocation7], 1
    %4227 = vsyncpa %s4226, 1
    %4228 = vsyncpa [#allocation10], 1
    %4229 = vsyncpa [#allocation5], 1
    %s4230 = scalar_lea.sflag [#allocation5], 1
    %4231 = vsyncpa %s4230, 1

</llo_original>
